<compile_context>
chip_gen: v6e
topology: v6e:2x2x1
jax: 0.10.0
libtpu: 0.0.40
codegen_flags: <defaults>
</compile_context>

<pallas_src>
import functools

import jax
import jax.numpy as jnp
from jax.experimental import pallas as pl
from jax.experimental.pallas import tpu as pltpu


def _round_up(x, m):
    return ((x + m - 1) // m) * m


def _pick_tiles(M, K, N):
    """Pick MXU/lane-friendly tile sizes and padded problem dims."""
    tm = min(256, _round_up(M, 16))      # sublane dim: multiple of 16 (bf16)
    tk = min(512, _round_up(K, 128))     # lane dim of x / sublane dim of w
    tn = min(256, _round_up(N, 128))     # lane dim of w / out
    Mp = _round_up(M, tm)
    Kp = _round_up(K, tk)
    Np = _round_up(N, tn)
    return tm, tk, tn, Mp, Kp, Np


# ---------------------------------------------------------------------------
# Pallas kernel: tiled GEMM with fused bias + (LeakyReLU | sigmoid) epilogue
# ---------------------------------------------------------------------------
def _gemm_bias_act_kernel(x_ref, w_ref, b_ref, o_ref, acc_ref, *,
                          apply_lrelu, apply_sigmoid, negative_slope):
    # x_ref: (tm, tk) bf16   w_ref: (tk, tn) bf16   b_ref: (1, tn) f32
    # o_ref: (tm, tn)        acc_ref: (tm, tn) f32 scratch (K-resident)
    k = pl.program_id(2)

    @pl.when(k == 0)
    def _init():
        acc_ref[...] = jnp.zeros_like(acc_ref)

    acc_ref[...] += jnp.dot(x_ref[...], w_ref[...],
                            preferred_element_type=jnp.float32)

    @pl.when(k == pl.num_programs(2) - 1)
    def _finalize():
        acc = acc_ref[...] + b_ref[...]
        if apply_lrelu:
            acc = jnp.where(acc >= 0, acc, negative_slope * acc)
        if apply_sigmoid:
            acc = jax.nn.sigmoid(acc)
        o_ref[...] = acc.astype(o_ref.dtype)


def gemm_bias_act(x2d, w2d, b1d, *, apply_lrelu, apply_sigmoid=False,
                  negative_slope=0.2, out_dtype=jnp.float32):
    """(M,K) @ (K,N) + b, fused activation.  Inputs cast to bf16, f32 accum."""
    M, K = x2d.shape
    Kw, N = w2d.shape
    assert K == Kw
    tm, tk, tn, Mp, Kp, Np = _pick_tiles(M, K, N)

    xb = jnp.pad(x2d.astype(jnp.bfloat16), ((0, Mp - M), (0, Kp - K)))
    wb = jnp.pad(w2d.astype(jnp.bfloat16), ((0, Kp - K), (0, Np - N)))
    bb = jnp.pad(b1d.astype(jnp.float32), (0, Np - N)).reshape(1, Np)

    grid = (Mp // tm, Np // tn, Kp // tk)

    out_bytes = Mp * Np * jnp.dtype(out_dtype).itemsize
    cost = pl.CostEstimate(
        flops=2 * Mp * Kp * Np,
        transcendentals=Mp * Np if apply_sigmoid else 0,
        bytes_accessed=2 * Mp * Kp + 2 * Kp * Np + out_bytes,
    )

    kernel = functools.partial(
        _gemm_bias_act_kernel,
        apply_lrelu=apply_lrelu,
        apply_sigmoid=apply_sigmoid,
        negative_slope=negative_slope,
    )

    out = pl.pallas_call(
        kernel,
        out_shape=jax.ShapeDtypeStruct((Mp, Np), out_dtype),
        grid_spec=pltpu.PrefetchScalarGridSpec(
            num_scalar_prefetch=0,
            grid=grid,
            in_specs=[
                pl.BlockSpec((tm, tk), lambda i, j, k: (i, k)),
                pl.BlockSpec((tk, tn), lambda i, j, k: (k, j)),
                pl.BlockSpec((1, tn), lambda i, j, k: (0, j)),
            ],
            out_specs=pl.BlockSpec((tm, tn), lambda i, j, k: (i, j)),
            scratch_shapes=[pltpu.VMEM((tm, tn), jnp.float32)],
        ),
        compiler_params=pltpu.CompilerParams(
            dimension_semantics=("parallel", "parallel", "arbitrary"),
            vmem_limit_bytes=32 * 1024 * 1024,
        ),
        cost_estimate=cost,
    )(xb, wb, bb)

    return out[:M, :N]


# ---------------------------------------------------------------------------
# Conv2d(kernel=4, stride=2, padding=1) via im2col + tiled Pallas GEMM
# ---------------------------------------------------------------------------
def conv4s2p1(x_nhwc, w_oihw, b, *, apply_lrelu, apply_sigmoid=False,
              out_dtype=jnp.bfloat16):
    """x_nhwc: (N, H, W, Cin);  w_oihw: (Cout, Cin, 4, 4) [PyTorch layout]."""
    N, H, W, C = x_nhwc.shape
    assert H % 2 == 0 and W % 2 == 0
    Ho, Wo = H // 2, W // 2
    cout = w_oihw.shape[0]

    # (Cout, Cin, kh, kw) -> (kh, kw, Cin, Cout) to match patch ordering below.
    w_hwio = jnp.transpose(w_oihw, (2, 3, 1, 0))

    xp = jnp.pad(x_nhwc, ((0, 0), (1, 1), (1, 1), (0, 0)))
    # TODO(synk): stream the 16 conv taps as the GEMM K axis (phase-decomposed
    # input + element-offset BlockSpecs) instead of materializing the 16x
    # im2col tensor in HBM; bf16 storage halves that traffic for now.
    patches = [xp[:, kh:kh + 2 * Ho:2, kw:kw + 2 * Wo:2, :]
               for kh in range(4) for kw in range(4)]
    pat = jnp.concatenate(patches, axis=-1)            # (N, Ho, Wo, 16*Cin)
    x2d = pat.reshape(N * Ho * Wo, 16 * C)
    w2d = w_hwio.reshape(16 * C, cout)

    out2d = gemm_bias_act(x2d, w2d, b,
                          apply_lrelu=apply_lrelu,
                          apply_sigmoid=apply_sigmoid,
                          out_dtype=out_dtype)
    return out2d.reshape(N, Ho, Wo, cout)


# ---------------------------------------------------------------------------
# Per-stage forward (jitted so pad/slice/concat glue fuses around the kernels)
# ---------------------------------------------------------------------------
@functools.partial(jax.jit, static_argnames=("use_sigmoid",))
def _stage_forward(stage_params, feat_nchw, use_sigmoid):
    x = jnp.transpose(feat_nchw, (0, 2, 3, 1)).astype(jnp.bfloat16)  # NCHW->NHWC
    (w1, b1), (w2, b2), (w3, b3), (w4, b4), (wc, bc) = stage_params
    x = conv4s2p1(x, w1, b1, apply_lrelu=True)
    x = conv4s2p1(x, w2, b2, apply_lrelu=True)
    x = conv4s2p1(x, w3, b3, apply_lrelu=True)
    x = conv4s2p1(x, w4, b4, apply_lrelu=True)
    x = conv4s2p1(x, wc, bc, apply_lrelu=False, apply_sigmoid=use_sigmoid,
                  out_dtype=jnp.float32)
    return jnp.transpose(x, (0, 3, 1, 2))                            # NHWC->NCHW


# ---------------------------------------------------------------------------
# MultiDCDiscriminator (multi_task=False, is_cpm=False)
# ---------------------------------------------------------------------------
class MultiDCDiscriminator:
    def __init__(self, input_nc, nstage=6, ndf=64, use_sigmoid=False, seed=0):
        self.nstage = nstage
        self.use_sigmoid = use_sigmoid
        key = jax.random.PRNGKey(seed)

        def make_conv(key, cin, cout):
            kw_, kb_ = jax.random.split(key)
            # Stored in PyTorch OIHW layout (Cout, Cin, kh, kw).
            w = jax.random.normal(kw_, (cout, cin, 4, 4), jnp.float32) * 0.05
            b = jax.random.normal(kb_, (cout,), jnp.float32) * 0.01
            return w, b

        chans = [(input_nc, ndf), (ndf, ndf * 2), (ndf * 2, ndf * 4),
                 (ndf * 4, ndf * 8), (ndf * 8, 1)]
        self.params = []   # per stage: tuple of 5 (w, b) tuples
        for _ in range(nstage):
            stage = []
            for cin, cout in chans:
                key, sub = jax.random.split(key)
                stage.append(make_conv(sub, cin, cout))
            self.params.append(tuple(stage))

    def __call__(self, feats, iter_num=0):
        assert len(feats) == self.nstage, \
            'Do not support {} inputs features!'.format(len(feats))
        outputs = []
        for i, feat in enumerate(feats):
            outputs.append(_stage_forward(self.params[i],
                                          feat.astype(jnp.float32),
                                          self.use_sigmoid))
        return jnp.concatenate(outputs, axis=1)   # torch.cat(output, 1)


# ---------------------------------------------------------------------------
if __name__ == "__main__":
    # Small, forward-consistent shapes: batch=2, input_nc=4, spatial=32
    # (32 is halved 5 times -> 1x1 classifier output), ndf=8, nstage=2.
    batch, input_nc, H, W = 2, 4, 32, 32
    nstage, ndf = 2, 8

    model = MultiDCDiscriminator(input_nc, nstage=nstage, ndf=ndf,
                                 use_sigmoid=False, seed=0)

    key = jax.random.PRNGKey(0)
    feats = []
    for _ in range(nstage):
        key, sub = jax.random.split(key)
        feats.append(jax.random.normal(sub, (batch, input_nc, H, W),
                                       jnp.float32))

    out = model(feats, iter_num=0)
    out = jax.block_until_ready(out)

    assert out.shape == (batch, nstage, H // 32, W // 32), out.shape
    assert out.dtype == jnp.float32
    print("KERNEL_OK")
</pallas_src>

<mosaic_0001>
module attributes {stable_mosaic.version = 11 : i64} {
  func.func @_gemm_bias_act_kernel(%arg0: i32, %arg1: i32, %arg2: i32, %arg3: memref<256x128xbf16, #tpu.memory_space<vmem>>, %arg4: memref<128x128xbf16, #tpu.memory_space<vmem>>, %arg5: memref<1x128xf32, #tpu.memory_space<vmem>>, %arg6: memref<256x128xbf16, #tpu.memory_space<vmem>>, %arg7: memref<256x128xf32, #tpu.memory_space<vmem>>) attributes {dimension_semantics = [#tpu.dimension_semantics<parallel>, #tpu.dimension_semantics<parallel>, #tpu.dimension_semantics<arbitrary>], iteration_bounds = array<i64: 2, 1, 1>, scalar_prefetch = 0 : i64, scratch_operands = 1 : i64, tpu.core_type = #tpu.core_type<tc>, window_params = [{transform_indices = @transform_0, window_bounds = array<i64: 256, 128>}, {transform_indices = @transform_1, window_bounds = array<i64: 128, 128>}, {transform_indices = @transform_2, window_bounds = array<i64: 1, 128>}, {transform_indices = @transform_3, window_bounds = array<i64: 256, 128>}]} {
    %c0_i32 = arith.constant 0 : i32
    %0 = arith.cmpi eq, %arg2, %c0_i32 : i32
    %1 = arith.extui %0 : i1 to i32
    %c0_i32_0 = arith.constant 0 : i32
    %2 = arith.cmpi ne, %1, %c0_i32_0 : i32
    scf.if %2 {
      %cst_10 = arith.constant 0.000000e+00 : f32
      %12 = vector.broadcast %cst_10 : f32 to vector<256x128xf32>
      %c0_11 = arith.constant 0 : index
      %c0_12 = arith.constant 0 : index
      %13 = vector.load %arg7[%c0_11, %c0_12] : memref<256x128xf32, #tpu.memory_space<vmem>>, vector<256x128xf32>
      tpu.vector_store %arg7[%c0_11, %c0_12], %12 {strides = array<i32>} : memref<256x128xf32, #tpu.memory_space<vmem>>, vector<256x128xf32>,
    } else {
    }
    %c0 = arith.constant 0 : index
    %c0_1 = arith.constant 0 : index
    %3 = vector.load %arg7[%c0, %c0_1] : memref<256x128xf32, #tpu.memory_space<vmem>>, vector<256x128xf32>
    %c0_2 = arith.constant 0 : index
    %c0_3 = arith.constant 0 : index
    %4 = vector.load %arg3[%c0_2, %c0_3] : memref<256x128xbf16, #tpu.memory_space<vmem>>, vector<256x128xbf16>
    %c0_4 = arith.constant 0 : index
    %c0_5 = arith.constant 0 : index
    %5 = vector.load %arg4[%c0_4, %c0_5] : memref<128x128xbf16, #tpu.memory_space<vmem>>, vector<128x128xbf16>
    %cst = arith.constant dense<0.000000e+00> : vector<256x128xf32>
    %6 = tpu.matmul %4, %5, %cst {dimension_numbers = #tpu.dot_dimension_numbers<[1], [0], [0], [1], [0, 0, 1, 1], [], []>} : vector<256x128xbf16>, vector<128x128xbf16>, vector<256x128xf32> -> vector<256x128xf32>
    %7 = arith.addf %3, %6 : vector<256x128xf32>
    %c0_6 = arith.constant 0 : index
    %c0_7 = arith.constant 0 : index
    %8 = vector.load %arg7[%c0_6, %c0_7] : memref<256x128xf32, #tpu.memory_space<vmem>>, vector<256x128xf32>
    tpu.vector_store %arg7[%c0_6, %c0_7], %7 {strides = array<i32>} : memref<256x128xf32, #tpu.memory_space<vmem>>, vector<256x128xf32>,
    %c0_i32_8 = arith.constant 0 : i32
    %9 = arith.cmpi eq, %arg2, %c0_i32_8 : i32
    %10 = arith.extui %9 : i1 to i32
    %c0_i32_9 = arith.constant 0 : i32
    %11 = arith.cmpi ne, %10, %c0_i32_9 : i32
    scf.if %11 {
      %c0_10 = arith.constant 0 : index
      %c0_11 = arith.constant 0 : index
      %12 = vector.load %arg7[%c0_10, %c0_11] : memref<256x128xf32, #tpu.memory_space<vmem>>, vector<256x128xf32>
      %c0_12 = arith.constant 0 : index
      %c0_13 = arith.constant 0 : index
      %13 = vector.load %arg5[%c0_12, %c0_13] : memref<1x128xf32, #tpu.memory_space<vmem>>, vector<1x128xf32>
      %14 = vector.broadcast %13 : vector<1x128xf32> to vector<256x128xf32>
      %15 = arith.addf %12, %14 : vector<256x128xf32>
      %cst_14 = arith.constant 0.000000e+00 : f32
      %16 = vector.broadcast %cst_14 : f32 to vector<256x128xf32>
      %17 = arith.cmpf oge, %15, %16 : vector<256x128xf32>
      %cst_15 = arith.constant 2.000000e-01 : f32
      %18 = vector.broadcast %cst_15 : f32 to vector<256x128xf32>
      %19 = arith.mulf %18, %15 : vector<256x128xf32>
      %20 = arith.select %17, %15, %19 : vector<256x128xi1>, vector<256x128xf32>
      %21 = arith.truncf %20 : vector<256x128xf32> to vector<256x128xbf16>
      %c0_16 = arith.constant 0 : index
      %c0_17 = arith.constant 0 : index
      %22 = vector.load %arg6[%c0_16, %c0_17] : memref<256x128xbf16, #tpu.memory_space<vmem>>, vector<256x128xbf16>
      tpu.vector_store %arg6[%c0_16, %c0_17], %21 {strides = array<i32>} : memref<256x128xbf16, #tpu.memory_space<vmem>>, vector<256x128xbf16>,
    } else {
    }
    return
  }
  func.func @transform_0(%arg0: i32, %arg1: i32, %arg2: i32) -> (i32, i32) {
    %c0_i32 = arith.constant 0 : i32
    return %arg0, %arg2 : i32, i32
  }
  func.func @transform_1(%arg0: i32, %arg1: i32, %arg2: i32) -> (i32, i32) {
    %c0_i32 = arith.constant 0 : i32
    return %arg2, %arg1 : i32, i32
  }
  func.func @transform_2(%arg0: i32, %arg1: i32, %arg2: i32) -> (i32, i32) {
    %c0_i32 = arith.constant 0 : i32
    %c0_i32_0 = arith.constant 0 : i32
    return %c0_i32, %arg1 : i32, i32
  }
  func.func @transform_3(%arg0: i32, %arg1: i32, %arg2: i32) -> (i32, i32) {
    %c0_i32 = arith.constant 0 : i32
    return %arg0, %arg1 : i32, i32
  }
}

module attributes {stable_mosaic.version = 11 : i64} {
  func.func @_gemm_bias_act_kernel(%arg0: i32, %arg1: i32, %arg2: i32, %arg3: memref<128x128xbf16, #tpu.memory_space<vmem>>, %arg4: memref<128x128xbf16, #tpu.memory_space<vmem>>, %arg5: memref<1x128xf32, #tpu.memory_space<vmem>>, %arg6: memref<128x128xbf16, #tpu.memory_space<vmem>>, %arg7: memref<128x128xf32, #tpu.memory_space<vmem>>) attributes {dimension_semantics = [#tpu.dimension_semantics<parallel>, #tpu.dimension_semantics<parallel>, #tpu.dimension_semantics<arbitrary>], iteration_bounds = array<i64: 1, 1, 1>, scalar_prefetch = 0 : i64, scratch_operands = 1 : i64, tpu.core_type = #tpu.core_type<tc>, window_params = [{transform_indices = @transform_0, window_bounds = array<i64: 128, 128>}, {transform_indices = @transform_1, window_bounds = array<i64: 128, 128>}, {transform_indices = @transform_2, window_bounds = array<i64: 1, 128>}, {transform_indices = @transform_3, window_bounds = array<i64: 128, 128>}]} {
    %c0_i32 = arith.constant 0 : i32
    %0 = arith.cmpi eq, %arg2, %c0_i32 : i32
    %1 = arith.extui %0 : i1 to i32
    %c0_i32_0 = arith.constant 0 : i32
    %2 = arith.cmpi ne, %1, %c0_i32_0 : i32
    scf.if %2 {
      %cst_10 = arith.constant 0.000000e+00 : f32
      %12 = vector.broadcast %cst_10 : f32 to vector<128x128xf32>
      %c0_11 = arith.constant 0 : index
      %c0_12 = arith.constant 0 : index
      %13 = vector.load %arg7[%c0_11, %c0_12] : memref<128x128xf32, #tpu.memory_space<vmem>>, vector<128x128xf32>
      tpu.vector_store %arg7[%c0_11, %c0_12], %12 {strides = array<i32>} : memref<128x128xf32, #tpu.memory_space<vmem>>, vector<128x128xf32>,
    } else {
    }
    %c0 = arith.constant 0 : index
    %c0_1 = arith.constant 0 : index
    %3 = vector.load %arg7[%c0, %c0_1] : memref<128x128xf32, #tpu.memory_space<vmem>>, vector<128x128xf32>
    %c0_2 = arith.constant 0 : index
    %c0_3 = arith.constant 0 : index
    %4 = vector.load %arg3[%c0_2, %c0_3] : memref<128x128xbf16, #tpu.memory_space<vmem>>, vector<128x128xbf16>
    %c0_4 = arith.constant 0 : index
    %c0_5 = arith.constant 0 : index
    %5 = vector.load %arg4[%c0_4, %c0_5] : memref<128x128xbf16, #tpu.memory_space<vmem>>, vector<128x128xbf16>
    %cst = arith.constant dense<0.000000e+00> : vector<128x128xf32>
    %6 = tpu.matmul %4, %5, %cst {dimension_numbers = #tpu.dot_dimension_numbers<[1], [0], [0], [1], [0, 0, 1, 1], [], []>} : vector<128x128xbf16>, vector<128x128xbf16>, vector<128x128xf32> -> vector<128x128xf32>
    %7 = arith.addf %3, %6 : vector<128x128xf32>
    %c0_6 = arith.constant 0 : index
    %c0_7 = arith.constant 0 : index
    %8 = vector.load %arg7[%c0_6, %c0_7] : memref<128x128xf32, #tpu.memory_space<vmem>>, vector<128x128xf32>
    tpu.vector_store %arg7[%c0_6, %c0_7], %7 {strides = array<i32>} : memref<128x128xf32, #tpu.memory_space<vmem>>, vector<128x128xf32>,
    %c0_i32_8 = arith.constant 0 : i32
    %9 = arith.cmpi eq, %arg2, %c0_i32_8 : i32
    %10 = arith.extui %9 : i1 to i32
    %c0_i32_9 = arith.constant 0 : i32
    %11 = arith.cmpi ne, %10, %c0_i32_9 : i32
    scf.if %11 {
      %c0_10 = arith.constant 0 : index
      %c0_11 = arith.constant 0 : index
      %12 = vector.load %arg7[%c0_10, %c0_11] : memref<128x128xf32, #tpu.memory_space<vmem>>, vector<128x128xf32>
      %c0_12 = arith.constant 0 : index
      %c0_13 = arith.constant 0 : index
      %13 = vector.load %arg5[%c0_12, %c0_13] : memref<1x128xf32, #tpu.memory_space<vmem>>, vector<1x128xf32>
      %14 = vector.broadcast %13 : vector<1x128xf32> to vector<128x128xf32>
      %15 = arith.addf %12, %14 : vector<128x128xf32>
      %cst_14 = arith.constant 0.000000e+00 : f32
      %16 = vector.broadcast %cst_14 : f32 to vector<128x128xf32>
      %17 = arith.cmpf oge, %15, %16 : vector<128x128xf32>
      %cst_15 = arith.constant 2.000000e-01 : f32
      %18 = vector.broadcast %cst_15 : f32 to vector<128x128xf32>
      %19 = arith.mulf %18, %15 : vector<128x128xf32>
      %20 = arith.select %17, %15, %19 : vector<128x128xi1>, vector<128x128xf32>
      %21 = arith.truncf %20 : vector<128x128xf32> to vector<128x128xbf16>
      %c0_16 = arith.constant 0 : index
      %c0_17 = arith.constant 0 : index
      %22 = vector.load %arg6[%c0_16, %c0_17] : memref<128x128xbf16, #tpu.memory_space<vmem>>, vector<128x128xbf16>
      tpu.vector_store %arg6[%c0_16, %c0_17], %21 {strides = array<i32>} : memref<128x128xbf16, #tpu.memory_space<vmem>>, vector<128x128xbf16>,
    } else {
    }
    return
  }
  func.func @transform_0(%arg0: i32, %arg1: i32, %arg2: i32) -> (i32, i32) {
    %c0_i32 = arith.constant 0 : i32
    return %arg0, %arg2 : i32, i32
  }
  func.func @transform_1(%arg0: i32, %arg1: i32, %arg2: i32) -> (i32, i32) {
    %c0_i32 = arith.constant 0 : i32
    return %arg2, %arg1 : i32, i32
  }
  func.func @transform_2(%arg0: i32, %arg1: i32, %arg2: i32) -> (i32, i32) {
    %c0_i32 = arith.constant 0 : i32
    %c0_i32_0 = arith.constant 0 : i32
    return %c0_i32, %arg1 : i32, i32
  }
  func.func @transform_3(%arg0: i32, %arg1: i32, %arg2: i32) -> (i32, i32) {
    %c0_i32 = arith.constant 0 : i32
    return %arg0, %arg1 : i32, i32
  }
}

module attributes {stable_mosaic.version = 11 : i64} {
  func.func @_gemm_bias_act_kernel(%arg0: i32, %arg1: i32, %arg2: i32, %arg3: memref<32x256xbf16, #tpu.memory_space<vmem>>, %arg4: memref<256x128xbf16, #tpu.memory_space<vmem>>, %arg5: memref<1x128xf32, #tpu.memory_space<vmem>>, %arg6: memref<32x128xbf16, #tpu.memory_space<vmem>>, %arg7: memref<32x128xf32, #tpu.memory_space<vmem>>) attributes {dimension_semantics = [#tpu.dimension_semantics<parallel>, #tpu.dimension_semantics<parallel>, #tpu.dimension_semantics<arbitrary>], iteration_bounds = array<i64: 1, 1, 1>, scalar_prefetch = 0 : i64, scratch_operands = 1 : i64, tpu.core_type = #tpu.core_type<tc>, window_params = [{transform_indices = @transform_0, window_bounds = array<i64: 32, 256>}, {transform_indices = @transform_1, window_bounds = array<i64: 256, 128>}, {transform_indices = @transform_2, window_bounds = array<i64: 1, 128>}, {transform_indices = @transform_3, window_bounds = array<i64: 32, 128>}]} {
    %c0_i32 = arith.constant 0 : i32
    %0 = arith.cmpi eq, %arg2, %c0_i32 : i32
    %1 = arith.extui %0 : i1 to i32
    %c0_i32_0 = arith.constant 0 : i32
    %2 = arith.cmpi ne, %1, %c0_i32_0 : i32
    scf.if %2 {
      %cst_10 = arith.constant 0.000000e+00 : f32
      %12 = vector.broadcast %cst_10 : f32 to vector<32x128xf32>
      %c0_11 = arith.constant 0 : index
      %c0_12 = arith.constant 0 : index
      %13 = vector.load %arg7[%c0_11, %c0_12] : memref<32x128xf32, #tpu.memory_space<vmem>>, vector<32x128xf32>
      tpu.vector_store %arg7[%c0_11, %c0_12], %12 {strides = array<i32>} : memref<32x128xf32, #tpu.memory_space<vmem>>, vector<32x128xf32>,
    } else {
    }
    %c0 = arith.constant 0 : index
    %c0_1 = arith.constant 0 : index
    %3 = vector.load %arg7[%c0, %c0_1] : memref<32x128xf32, #tpu.memory_space<vmem>>, vector<32x128xf32>
    %c0_2 = arith.constant 0 : index
    %c0_3 = arith.constant 0 : index
    %4 = vector.load %arg3[%c0_2, %c0_3] : memref<32x256xbf16, #tpu.memory_space<vmem>>, vector<32x256xbf16>
    %c0_4 = arith.constant 0 : index
    %c0_5 = arith.constant 0 : index
    %5 = vector.load %arg4[%c0_4, %c0_5] : memref<256x128xbf16, #tpu.memory_space<vmem>>, vector<256x128xbf16>
    %cst = arith.constant dense<0.000000e+00> : vector<32x128xf32>
    %6 = tpu.matmul %4, %5, %cst {dimension_numbers = #tpu.dot_dimension_numbers<[1], [0], [0], [1], [0, 0, 1, 1], [], []>} : vector<32x256xbf16>, vector<256x128xbf16>, vector<32x128xf32> -> vector<32x128xf32>
    %7 = arith.addf %3, %6 : vector<32x128xf32>
    %c0_6 = arith.constant 0 : index
    %c0_7 = arith.constant 0 : index
    %8 = vector.load %arg7[%c0_6, %c0_7] : memref<32x128xf32, #tpu.memory_space<vmem>>, vector<32x128xf32>
    tpu.vector_store %arg7[%c0_6, %c0_7], %7 {strides = array<i32>} : memref<32x128xf32, #tpu.memory_space<vmem>>, vector<32x128xf32>,
    %c0_i32_8 = arith.constant 0 : i32
    %9 = arith.cmpi eq, %arg2, %c0_i32_8 : i32
    %10 = arith.extui %9 : i1 to i32
    %c0_i32_9 = arith.constant 0 : i32
    %11 = arith.cmpi ne, %10, %c0_i32_9 : i32
    scf.if %11 {
      %c0_10 = arith.constant 0 : index
      %c0_11 = arith.constant 0 : index
      %12 = vector.load %arg7[%c0_10, %c0_11] : memref<32x128xf32, #tpu.memory_space<vmem>>, vector<32x128xf32>
      %c0_12 = arith.constant 0 : index
      %c0_13 = arith.constant 0 : index
      %13 = vector.load %arg5[%c0_12, %c0_13] : memref<1x128xf32, #tpu.memory_space<vmem>>, vector<1x128xf32>
      %14 = vector.broadcast %13 : vector<1x128xf32> to vector<32x128xf32>
      %15 = arith.addf %12, %14 : vector<32x128xf32>
      %cst_14 = arith.constant 0.000000e+00 : f32
      %16 = vector.broadcast %cst_14 : f32 to vector<32x128xf32>
      %17 = arith.cmpf oge, %15, %16 : vector<32x128xf32>
      %cst_15 = arith.constant 2.000000e-01 : f32
      %18 = vector.broadcast %cst_15 : f32 to vector<32x128xf32>
      %19 = arith.mulf %18, %15 : vector<32x128xf32>
      %20 = arith.select %17, %15, %19 : vector<32x128xi1>, vector<32x128xf32>
      %21 = arith.truncf %20 : vector<32x128xf32> to vector<32x128xbf16>
      %c0_16 = arith.constant 0 : index
      %c0_17 = arith.constant 0 : index
      %22 = vector.load %arg6[%c0_16, %c0_17] : memref<32x128xbf16, #tpu.memory_space<vmem>>, vector<32x128xbf16>
      tpu.vector_store %arg6[%c0_16, %c0_17], %21 {strides = array<i32>} : memref<32x128xbf16, #tpu.memory_space<vmem>>, vector<32x128xbf16>,
    } else {
    }
    return
  }
  func.func @transform_0(%arg0: i32, %arg1: i32, %arg2: i32) -> (i32, i32) {
    %c0_i32 = arith.constant 0 : i32
    return %arg0, %arg2 : i32, i32
  }
  func.func @transform_1(%arg0: i32, %arg1: i32, %arg2: i32) -> (i32, i32) {
    %c0_i32 = arith.constant 0 : i32
    return %arg2, %arg1 : i32, i32
  }
  func.func @transform_2(%arg0: i32, %arg1: i32, %arg2: i32) -> (i32, i32) {
    %c0_i32 = arith.constant 0 : i32
    %c0_i32_0 = arith.constant 0 : i32
    return %c0_i32, %arg1 : i32, i32
  }
  func.func @transform_3(%arg0: i32, %arg1: i32, %arg2: i32) -> (i32, i32) {
    %c0_i32 = arith.constant 0 : i32
    return %arg0, %arg1 : i32, i32
  }
}

module attributes {stable_mosaic.version = 11 : i64} {
  func.func @_gemm_bias_act_kernel(%arg0: i32, %arg1: i32, %arg2: i32, %arg3: memref<16x512xbf16, #tpu.memory_space<vmem>>, %arg4: memref<512x128xbf16, #tpu.memory_space<vmem>>, %arg5: memref<1x128xf32, #tpu.memory_space<vmem>>, %arg6: memref<16x128xbf16, #tpu.memory_space<vmem>>, %arg7: memref<16x128xf32, #tpu.memory_space<vmem>>) attributes {dimension_semantics = [#tpu.dimension_semantics<parallel>, #tpu.dimension_semantics<parallel>, #tpu.dimension_semantics<arbitrary>], iteration_bounds = array<i64: 1, 1, 1>, scalar_prefetch = 0 : i64, scratch_operands = 1 : i64, tpu.core_type = #tpu.core_type<tc>, window_params = [{transform_indices = @transform_0, window_bounds = array<i64: 16, 512>}, {transform_indices = @transform_1, window_bounds = array<i64: 512, 128>}, {transform_indices = @transform_2, window_bounds = array<i64: 1, 128>}, {transform_indices = @transform_3, window_bounds = array<i64: 16, 128>}]} {
    %c0_i32 = arith.constant 0 : i32
    %0 = arith.cmpi eq, %arg2, %c0_i32 : i32
    %1 = arith.extui %0 : i1 to i32
    %c0_i32_0 = arith.constant 0 : i32
    %2 = arith.cmpi ne, %1, %c0_i32_0 : i32
    scf.if %2 {
      %cst_10 = arith.constant 0.000000e+00 : f32
      %12 = vector.broadcast %cst_10 : f32 to vector<16x128xf32>
      %c0_11 = arith.constant 0 : index
      %c0_12 = arith.constant 0 : index
      %13 = vector.load %arg7[%c0_11, %c0_12] : memref<16x128xf32, #tpu.memory_space<vmem>>, vector<16x128xf32>
      tpu.vector_store %arg7[%c0_11, %c0_12], %12 {strides = array<i32>} : memref<16x128xf32, #tpu.memory_space<vmem>>, vector<16x128xf32>,
    } else {
    }
    %c0 = arith.constant 0 : index
    %c0_1 = arith.constant 0 : index
    %3 = vector.load %arg7[%c0, %c0_1] : memref<16x128xf32, #tpu.memory_space<vmem>>, vector<16x128xf32>
    %c0_2 = arith.constant 0 : index
    %c0_3 = arith.constant 0 : index
    %4 = vector.load %arg3[%c0_2, %c0_3] : memref<16x512xbf16, #tpu.memory_space<vmem>>, vector<16x512xbf16>
    %c0_4 = arith.constant 0 : index
    %c0_5 = arith.constant 0 : index
    %5 = vector.load %arg4[%c0_4, %c0_5] : memref<512x128xbf16, #tpu.memory_space<vmem>>, vector<512x128xbf16>
    %cst = arith.constant dense<0.000000e+00> : vector<16x128xf32>
    %6 = tpu.matmul %4, %5, %cst {dimension_numbers = #tpu.dot_dimension_numbers<[1], [0], [0], [1], [0, 0, 1, 1], [], []>} : vector<16x512xbf16>, vector<512x128xbf16>, vector<16x128xf32> -> vector<16x128xf32>
    %7 = arith.addf %3, %6 : vector<16x128xf32>
    %c0_6 = arith.constant 0 : index
    %c0_7 = arith.constant 0 : index
    %8 = vector.load %arg7[%c0_6, %c0_7] : memref<16x128xf32, #tpu.memory_space<vmem>>, vector<16x128xf32>
    tpu.vector_store %arg7[%c0_6, %c0_7], %7 {strides = array<i32>} : memref<16x128xf32, #tpu.memory_space<vmem>>, vector<16x128xf32>,
    %c0_i32_8 = arith.constant 0 : i32
    %9 = arith.cmpi eq, %arg2, %c0_i32_8 : i32
    %10 = arith.extui %9 : i1 to i32
    %c0_i32_9 = arith.constant 0 : i32
    %11 = arith.cmpi ne, %10, %c0_i32_9 : i32
    scf.if %11 {
      %c0_10 = arith.constant 0 : index
      %c0_11 = arith.constant 0 : index
      %12 = vector.load %arg7[%c0_10, %c0_11] : memref<16x128xf32, #tpu.memory_space<vmem>>, vector<16x128xf32>
      %c0_12 = arith.constant 0 : index
      %c0_13 = arith.constant 0 : index
      %13 = vector.load %arg5[%c0_12, %c0_13] : memref<1x128xf32, #tpu.memory_space<vmem>>, vector<1x128xf32>
      %14 = vector.broadcast %13 : vector<1x128xf32> to vector<16x128xf32>
      %15 = arith.addf %12, %14 : vector<16x128xf32>
      %cst_14 = arith.constant 0.000000e+00 : f32
      %16 = vector.broadcast %cst_14 : f32 to vector<16x128xf32>
      %17 = arith.cmpf oge, %15, %16 : vector<16x128xf32>
      %cst_15 = arith.constant 2.000000e-01 : f32
      %18 = vector.broadcast %cst_15 : f32 to vector<16x128xf32>
      %19 = arith.mulf %18, %15 : vector<16x128xf32>
      %20 = arith.select %17, %15, %19 : vector<16x128xi1>, vector<16x128xf32>
      %21 = arith.truncf %20 : vector<16x128xf32> to vector<16x128xbf16>
      %c0_16 = arith.constant 0 : index
      %c0_17 = arith.constant 0 : index
      %22 = vector.load %arg6[%c0_16, %c0_17] : memref<16x128xbf16, #tpu.memory_space<vmem>>, vector<16x128xbf16>
      tpu.vector_store %arg6[%c0_16, %c0_17], %21 {strides = array<i32>} : memref<16x128xbf16, #tpu.memory_space<vmem>>, vector<16x128xbf16>,
    } else {
    }
    return
  }
  func.func @transform_0(%arg0: i32, %arg1: i32, %arg2: i32) -> (i32, i32) {
    %c0_i32 = arith.constant 0 : i32
    return %arg0, %arg2 : i32, i32
  }
  func.func @transform_1(%arg0: i32, %arg1: i32, %arg2: i32) -> (i32, i32) {
    %c0_i32 = arith.constant 0 : i32
    return %arg2, %arg1 : i32, i32
  }
  func.func @transform_2(%arg0: i32, %arg1: i32, %arg2: i32) -> (i32, i32) {
    %c0_i32 = arith.constant 0 : i32
    %c0_i32_0 = arith.constant 0 : i32
    return %c0_i32, %arg1 : i32, i32
  }
  func.func @transform_3(%arg0: i32, %arg1: i32, %arg2: i32) -> (i32, i32) {
    %c0_i32 = arith.constant 0 : i32
    return %arg0, %arg1 : i32, i32
  }
}

module attributes {stable_mosaic.version = 11 : i64} {
  func.func @_gemm_bias_act_kernel(%arg0: i32, %arg1: i32, %arg2: i32, %arg3: memref<16x512xbf16, #tpu.memory_space<vmem>>, %arg4: memref<512x128xbf16, #tpu.memory_space<vmem>>, %arg5: memref<1x128xf32, #tpu.memory_space<vmem>>, %arg6: memref<16x128xf32, #tpu.memory_space<vmem>>, %arg7: memref<16x128xf32, #tpu.memory_space<vmem>>) attributes {dimension_semantics = [#tpu.dimension_semantics<parallel>, #tpu.dimension_semantics<parallel>, #tpu.dimension_semantics<arbitrary>], iteration_bounds = array<i64: 1, 1, 2>, scalar_prefetch = 0 : i64, scratch_operands = 1 : i64, tpu.core_type = #tpu.core_type<tc>, window_params = [{transform_indices = @transform_0, window_bounds = array<i64: 16, 512>}, {transform_indices = @transform_1, window_bounds = array<i64: 512, 128>}, {transform_indices = @transform_2, window_bounds = array<i64: 1, 128>}, {transform_indices = @transform_3, window_bounds = array<i64: 16, 128>}]} {
    %c0_i32 = arith.constant 0 : i32
    %0 = arith.cmpi eq, %arg2, %c0_i32 : i32
    %1 = arith.extui %0 : i1 to i32
    %c0_i32_0 = arith.constant 0 : i32
    %2 = arith.cmpi ne, %1, %c0_i32_0 : i32
    scf.if %2 {
      %cst_9 = arith.constant 0.000000e+00 : f32
      %12 = vector.broadcast %cst_9 : f32 to vector<16x128xf32>
      %c0_10 = arith.constant 0 : index
      %c0_11 = arith.constant 0 : index
      %13 = vector.load %arg7[%c0_10, %c0_11] : memref<16x128xf32, #tpu.memory_space<vmem>>, vector<16x128xf32>
      tpu.vector_store %arg7[%c0_10, %c0_11], %12 {strides = array<i32>} : memref<16x128xf32, #tpu.memory_space<vmem>>, vector<16x128xf32>,
    } else {
    }
    %c0 = arith.constant 0 : index
    %c0_1 = arith.constant 0 : index
    %3 = vector.load %arg7[%c0, %c0_1] : memref<16x128xf32, #tpu.memory_space<vmem>>, vector<16x128xf32>
    %c0_2 = arith.constant 0 : index
    %c0_3 = arith.constant 0 : index
    %4 = vector.load %arg3[%c0_2, %c0_3] : memref<16x512xbf16, #tpu.memory_space<vmem>>, vector<16x512xbf16>
    %c0_4 = arith.constant 0 : index
    %c0_5 = arith.constant 0 : index
    %5 = vector.load %arg4[%c0_4, %c0_5] : memref<512x128xbf16, #tpu.memory_space<vmem>>, vector<512x128xbf16>
    %cst = arith.constant dense<0.000000e+00> : vector<16x128xf32>
    %6 = tpu.matmul %4, %5, %cst {dimension_numbers = #tpu.dot_dimension_numbers<[1], [0], [0], [1], [0, 0, 1, 1], [], []>} : vector<16x512xbf16>, vector<512x128xbf16>, vector<16x128xf32> -> vector<16x128xf32>
    %7 = arith.addf %3, %6 : vector<16x128xf32>
    %c0_6 = arith.constant 0 : index
    %c0_7 = arith.constant 0 : index
    %8 = vector.load %arg7[%c0_6, %c0_7] : memref<16x128xf32, #tpu.memory_space<vmem>>, vector<16x128xf32>
    tpu.vector_store %arg7[%c0_6, %c0_7], %7 {strides = array<i32>} : memref<16x128xf32, #tpu.memory_space<vmem>>, vector<16x128xf32>,
    %c1_i32 = arith.constant 1 : i32
    %9 = arith.cmpi eq, %arg2, %c1_i32 : i32
    %10 = arith.extui %9 : i1 to i32
    %c0_i32_8 = arith.constant 0 : i32
    %11 = arith.cmpi ne, %10, %c0_i32_8 : i32
    scf.if %11 {
      %c0_9 = arith.constant 0 : index
      %c0_10 = arith.constant 0 : index
      %12 = vector.load %arg7[%c0_9, %c0_10] : memref<16x128xf32, #tpu.memory_space<vmem>>, vector<16x128xf32>
      %c0_11 = arith.constant 0 : index
      %c0_12 = arith.constant 0 : index
      %13 = vector.load %arg5[%c0_11, %c0_12] : memref<1x128xf32, #tpu.memory_space<vmem>>, vector<1x128xf32>
      %14 = vector.broadcast %13 : vector<1x128xf32> to vector<16x128xf32>
      %15 = arith.addf %12, %14 : vector<16x128xf32>
      %c0_13 = arith.constant 0 : index
      %c0_14 = arith.constant 0 : index
      %16 = vector.load %arg6[%c0_13, %c0_14] : memref<16x128xf32, #tpu.memory_space<vmem>>, vector<16x128xf32>
      tpu.vector_store %arg6[%c0_13, %c0_14], %15 {strides = array<i32>} : memref<16x128xf32, #tpu.memory_space<vmem>>, vector<16x128xf32>,
    } else {
    }
    return
  }
  func.func @transform_0(%arg0: i32, %arg1: i32, %arg2: i32) -> (i32, i32) {
    %c0_i32 = arith.constant 0 : i32
    return %arg0, %arg2 : i32, i32
  }
  func.func @transform_1(%arg0: i32, %arg1: i32, %arg2: i32) -> (i32, i32) {
    %c0_i32 = arith.constant 0 : i32
    return %arg2, %arg1 : i32, i32
  }
  func.func @transform_2(%arg0: i32, %arg1: i32, %arg2: i32) -> (i32, i32) {
    %c0_i32 = arith.constant 0 : i32
    %c0_i32_0 = arith.constant 0 : i32
    return %c0_i32, %arg1 : i32, i32
  }
  func.func @transform_3(%arg0: i32, %arg1: i32, %arg2: i32) -> (i32, i32) {
    %c0_i32 = arith.constant 0 : i32
    return %arg0, %arg1 : i32, i32
  }
}

</mosaic_0001>

<llo_original>
// kernel: _stage_forward.5
$region0: #{_stage_forward.5}
  #allocation0 [shape = 'u32[]', space=smem, size = 0x4, offset = 0x4, fixed_abs, tag = 'smem constant byte address 0x4 - core index']
  #allocation1 [shape = 'u32[144,128]{1,0:T(1,128)}', space=vmem, size = 0x12000, scoped, tag = 'internal scratch']
  #allocation2 [shape = 'f32[256,128]{1,0:T(8,128)}', space=vmem, size = 0x20000, scoped, tag = 'scratch operand']
  %s0 = inlined_call_operand.vmem [shape: bf16[512,128], index: 0, kind: input, shape index: {}]
  %s1 = inlined_call_operand.vmem [shape: bf16[128,128], index: 1, kind: input, shape index: {}]
  %s2 = inlined_call_operand.vmem [shape: f32[1,128], index: 2, kind: input, shape index: {}]
  %s3 = inlined_call_operand.vmem [shape: bf16[512,128], index: 3, kind: output, shape index: {}]
  %s4 = sld [smem:[#allocation0]]
  $region53: #{_stage_forward.5} parent=0
    _
  %s6 = ssub.s32 1, %s4
  %s7 = scalar_select 0, %s6, %s4
  loop: start=0, step=1, limit=4
  $region2: #{_stage_forward.5} parent=0 // loop_pre_header
    _
  $region3: #{_stage_forward.5} parent=0 // loop_header
    %s9 = sphi 0, %s13
    %p10 = scmp.ge.s32.totalorder %s9, 4
    %s16 = sphi 0, %s35
    %s17 = sphi 0, %s31
    %s18 = sphi 0, %s27
    %s19 = sphi 0, %s16
    %s20 = sphi 0, %s17
    %s21 = sphi 0, %s18
    %s22 = sphi 0, %s19
    %s23 = sphi 0, %s20
    %s24 = sphi 0, %s21
    %s40 = sphi 0, %s42
    %s43 = sphi 0, %s40
    %s44 = sphi 0, %s43
    %s60 = sphi 0, %s44
    %s68 = sphi 0, %s70
    %s71 = sphi 0, %s68
    %s72 = sphi 0, %s71
    %s88 = sphi 0, %s72
    %s94 = sphi 0, %s96
    %s97 = sphi 0, %s94
    %s98 = sphi 0, %s97
    %s114 = sphi 0, %s98
    %s122 = sphi 0, %s124
    %s125 = sphi 0, %s122
    %s126 = sphi 0, %s125
    %s142 = sphi 0, %s126
  $region4: #{_stage_forward.5} parent=0 // loop_header_branch
    %12 = sbr.rel (%p10) target = $region8
  $region5: #{_stage_forward.5} parent=0 // loop_body
    %s14 = ssub.s32 %s9, 1
    %s15 = ssub.s32 %s9, 2
    %s25 = sadd.s32 1, %s18
    %p26 = scmp.ge.s32.totalorder %s25, 1
    %s27 = scalar_select %p26, 0, %s25
    %s28 = sadd.s32 1, %s17
    %s29 = scalar_select %p26, %s28, %s17
    %p30 = scmp.ge.s32.totalorder %s29, 1
    %s31 = scalar_select %p30, 0, %s29
    %s32 = sadd.s32 1, %s16
    %s33 = scalar_select %p30, %s32, %s16
    %p34 = scmp.ge.s32.totalorder %s33, 2
    %s35 = scalar_select %p34, 0, %s33
    %s36 = ssub.s32 %s16, %s35
    %s37 = ssub.s32 %s18, %s27
    %s38 = sor.u32 %s36, %s37
    %p39 = scmp.eq.s32.totalorder %s38, 0
    %s41 = sadd.s32 %s40, 1
    %s42 = scalar_select %p39, %s40, %s41
    %p45 = pneg %p39
    %p46 = scmp.eq.s32.totalorder %s9, 1
    %p47 = por %p45, %p46
    %p48 = scmp.ne.s32.totalorder %s40, %s43
    %p49 = scmp.eq.s32.totalorder %s9, 0
    %p50 = por %p48, %p49
    %p51 = scmp.ne.s32.totalorder %s40, %s43
    %p52 = scmp.eq.s32.totalorder %s14, 1
    %p53 = por %p51, %p52
    %p54 = scmp.ne.s32.totalorder %s43, %s44
    %p55 = scmp.eq.s32.totalorder %s14, 0
    %p56 = por %p54, %p55
    %p57 = scmp.ne.s32.totalorder %s43, %s44
    %p58 = scmp.eq.s32.totalorder %s15, 1
    %p59 = por %p57, %p58
    %p61 = scmp.ne.s32.totalorder %s44, %s60
    %p62 = scmp.eq.s32.totalorder %s15, 0
    %p63 = por %p61, %p62
    %s64 = ssub.s32 %s18, %s27
    %s65 = ssub.s32 %s17, %s31
    %s66 = sor.u32 %s64, %s65
    %p67 = scmp.eq.s32.totalorder %s66, 0
    %s69 = sadd.s32 %s68, 1
    %s70 = scalar_select %p67, %s68, %s69
    %p73 = pneg %p67
    %p74 = scmp.eq.s32.totalorder %s9, 1
    %p75 = por %p73, %p74
    %p76 = scmp.ne.s32.totalorder %s68, %s71
    %p77 = scmp.eq.s32.totalorder %s9, 0
    %p78 = por %p76, %p77
    %p79 = scmp.ne.s32.totalorder %s68, %s71
    %p80 = scmp.eq.s32.totalorder %s14, 1
    %p81 = por %p79, %p80
    %p82 = scmp.ne.s32.totalorder %s71, %s72
    %p83 = scmp.eq.s32.totalorder %s14, 0
    %p84 = por %p82, %p83
    %p85 = scmp.ne.s32.totalorder %s71, %s72
    %p86 = scmp.eq.s32.totalorder %s15, 1
    %p87 = por %p85, %p86
    %p89 = scmp.ne.s32.totalorder %s72, %s88
    %p90 = scmp.eq.s32.totalorder %s15, 0
    %p91 = por %p89, %p90
    %s92 = ssub.s32 %s17, %s31
    %p93 = scmp.eq.s32.totalorder %s92, 0
    %s95 = sadd.s32 %s94, 1
    %s96 = scalar_select %p93, %s94, %s95
    %p99 = pneg %p93
    %p100 = scmp.eq.s32.totalorder %s9, 1
    %p101 = por %p99, %p100
    %p102 = scmp.ne.s32.totalorder %s94, %s97
    %p103 = scmp.eq.s32.totalorder %s9, 0
    %p104 = por %p102, %p103
    %p105 = scmp.ne.s32.totalorder %s94, %s97
    %p106 = scmp.eq.s32.totalorder %s14, 1
    %p107 = por %p105, %p106
    %p108 = scmp.ne.s32.totalorder %s97, %s98
    %p109 = scmp.eq.s32.totalorder %s14, 0
    %p110 = por %p108, %p109
    %p111 = scmp.ne.s32.totalorder %s97, %s98
    %p112 = scmp.eq.s32.totalorder %s15, 1
    %p113 = por %p111, %p112
    %p115 = scmp.ne.s32.totalorder %s98, %s114
    %p116 = scmp.eq.s32.totalorder %s15, 0
    %p117 = por %p115, %p116
    %s118 = ssub.s32 %s16, %s35
    %s119 = ssub.s32 %s17, %s31
    %s120 = sor.u32 %s118, %s119
    %p121 = scmp.eq.s32.totalorder %s120, 0
    %s123 = sadd.s32 %s122, 1
    %s124 = scalar_select %p121, %s122, %s123
    %p127 = pneg %p121
    %p128 = scmp.eq.s32.totalorder %s9, 1
    %p129 = por %p127, %p128
    %p130 = scmp.ne.s32.totalorder %s122, %s125
    %p131 = scmp.eq.s32.totalorder %s9, 0
    %p132 = por %p130, %p131
    %p133 = scmp.ne.s32.totalorder %s122, %s125
    %p134 = scmp.eq.s32.totalorder %s14, 1
    %p135 = por %p133, %p134
    %p136 = scmp.ne.s32.totalorder %s125, %s126
    %p137 = scmp.eq.s32.totalorder %s14, 0
    %p138 = por %p136, %p137
    %p139 = scmp.ne.s32.totalorder %s125, %s126
    %p140 = scmp.eq.s32.totalorder %s15, 1
    %p141 = por %p139, %p140
    %p143 = scmp.ne.s32.totalorder %s126, %s142
    %p144 = scmp.eq.s32.totalorder %s15, 0
    %p145 = por %p143, %p144
    %p146 = scmp.le.s32.totalorder 1, %s9
    %p147 = scmp.lt.s32.totalorder %s9, 3
    %p148 = pnand %p146, %p147
    %p149 = pneg %p148
    // Predicated region
    $region9: #{_stage_forward.5} parent=5 // pred_check
      _
    $region10: #{_stage_forward.5} parent=5 // pred_check_branch
      %151 = sbr.rel (%p148) target = $region12
    $region11: #{_stage_forward.5} parent=5 // pred_region
      %s152 = ssub.s32 %s9, 1
      // Predicated region
      $region13: #{_stage_forward.5} parent=11 // pred_check
        %p153 = pneg %p84
      $region14: #{_stage_forward.5} parent=11 // pred_check_branch
        %155 = sbr.rel (%p153) target = $region16
      $region15: #{_stage_forward.5} parent=11 // pred_region
        %s156 = smul.u32 16, %s21
        %p157 = scmp.lt.s32.totalorder %s156, 15
        %s158 = scalar_select %p157, %s156, 15
        %p159 = scmp.lt.s32.totalorder %s20, 0
        %s160 = scalar_select %p159, %s20, 0
        %s161 = sadd.s32 %s160, %s158
        %s162 = smul.addr %s161, 4
        %s163 = scalar_lea.vmem %s1, %s162
        %s164 = smul.u32 16, %s21
      $region16: #{_stage_forward.5} parent=11 // pred_fallthru
        _
      // Predicated region
      $region17: #{_stage_forward.5} parent=11 // pred_check
        %p165 = pneg %p110
      $region18: #{_stage_forward.5} parent=11 // pred_check_branch
        %167 = sbr.rel (%p165) target = $region20
      $region19: #{_stage_forward.5} parent=11 // pred_region
        %p168 = scmp.lt.s32.totalorder %s20, 0
        %s169 = scalar_select %p168, %s20, 0
        %s170 = scalar_lea.vmem %s2, %s169
      $region20: #{_stage_forward.5} parent=11 // pred_fallthru
        _
    $region12: #{_stage_forward.5} parent=5 // pred_fallthru
      _
    %p171 = scmp.lt.s32.totalorder %s9, 2
    // Predicated region
    $region21: #{_stage_forward.5} parent=5 // pred_check
      %p172 = pneg %p171
    $region22: #{_stage_forward.5} parent=5 // pred_check_branch
      %174 = sbr.rel (%p172) target = $region24
    $region23: #{_stage_forward.5} parent=5 // pred_region
      // Predicated region
      $region25: #{_stage_forward.5} parent=23 // pred_check
        %p175 = pneg %p50
      $region26: #{_stage_forward.5} parent=23 // pred_check_branch
        %177 = sbr.rel (%p175) target = $region28
      $region27: #{_stage_forward.5} parent=23 // pred_region
        %s178 = smul.u32 32, %s16
        %p179 = scmp.lt.s32.totalorder %s178, 63
        %s180 = scalar_select %p179, %s178, 63
        %p181 = scmp.lt.s32.totalorder %s18, 0
        %s182 = scalar_select %p181, %s18, 0
        %s183 = sadd.s32 %s182, %s180
        %s184 = smul.addr %s183, 4
        %s185 = scalar_lea.vmem %s0, %s184
        %s186 = smul.u32 32, %s16
      $region28: #{_stage_forward.5} parent=23 // pred_fallthru
        _
    $region24: #{_stage_forward.5} parent=5 // pred_fallthru
      _
    %p187 = scmp.le.s32.totalorder 1, %s9
    %p188 = scmp.lt.s32.totalorder %s9, 3
    %p189 = pnand %p187, %p188
    %p190 = pneg %p189
    // Predicated region
    $region29: #{_stage_forward.5} parent=5 // pred_check
      _
    $region30: #{_stage_forward.5} parent=5 // pred_check_branch
      %192 = sbr.rel (%p189) target = $region32
    $region31: #{_stage_forward.5} parent=5 // pred_region
      %s193 = ssub.s32 %s9, 1
      %s194 = smul.u32 32, %s19
      %p195 = scmp.lt.s32.totalorder %s194, 63
      %s196 = scalar_select %p195, %s194, 63
      %p197 = scmp.lt.s32.totalorder %s21, 0
      %s198 = scalar_select %p197, %s21, 0
      %s199 = sadd.s32 %s198, %s196
      %s200 = smul.addr %s199, 4
      %s201 = scalar_lea.vmem %s0, %s200
      %p202 = pneg %p56
      %p203 = pneg %p53
      %s204 = smul.u32 16, %s21
      %p205 = scmp.lt.s32.totalorder %s204, 15
      %s206 = scalar_select %p205, %s204, 15
      %p207 = scmp.lt.s32.totalorder %s20, 0
      %s208 = scalar_select %p207, %s20, 0
      %s209 = sadd.s32 %s208, %s206
      %s210 = smul.addr %s209, 4
      %s211 = scalar_lea.vmem %s1, %s210
      %p212 = pneg %p84
      %p213 = pneg %p81
      %p214 = scmp.lt.s32.totalorder %s20, 0
      %s215 = scalar_select %p214, %s20, 0
      %s216 = scalar_lea.vmem %s2, %s215
      %p217 = pneg %p110
      %p218 = pneg %p107
      %p219 = pneg %p138
      %p220 = pneg %p135
      %s221 = smul.u32 32, %s19
      %p222 = scmp.lt.s32.totalorder %s221, 63
      %s223 = scalar_select %p222, %s221, 63
      %p224 = scmp.lt.s32.totalorder %s20, 0
      %s225 = scalar_select %p224, %s20, 0
      %s226 = sadd.s32 %s225, %s223
      %s227 = smul.addr %s226, 4
      %s228 = scalar_lea.vmem %s3, %s227
      %s229 = smul.u32 32, %s19
      %p230 = scmp.lt.s32.totalorder %s229, 63
      %s231 = scalar_select %p230, %s229, 63
      %p232 = scmp.lt.s32.totalorder %s21, 0
      %s233 = scalar_select %p232, %s21, 0
      %s234 = sadd.s32 %s233, %s231
      %s235 = smul.addr %s234, 4
      %s236 = scalar_lea.vmem %s0, %s235
      %s237 = smul.u32 32, %s19
      %s238 = smul.u32 16, %s21
      %p239 = scmp.lt.s32.totalorder %s238, 15
      %s240 = scalar_select %p239, %s238, 15
      %p241 = scmp.lt.s32.totalorder %s20, 0
      %s242 = scalar_select %p241, %s20, 0
      %s243 = sadd.s32 %s242, %s240
      %s244 = smul.addr %s243, 4
      %s245 = scalar_lea.vmem %s1, %s244
      %s246 = smul.u32 16, %s21
      %p247 = scmp.lt.s32.totalorder %s20, 0
      %s248 = scalar_select %p247, %s20, 0
      %s249 = scalar_lea.vmem %s2, %s248
      %s250 = smul.u32 32, %s19
      %p251 = scmp.lt.s32.totalorder %s250, 63
      %s252 = scalar_select %p251, %s250, 63
      %p253 = scmp.lt.s32.totalorder %s20, 0
      %s254 = scalar_select %p253, %s20, 0
      %s255 = sadd.s32 %s254, %s252
      %s256 = smul.addr %s255, 4
      %s257 = scalar_lea.vmem %s3, %s256
      %s258 = smul.u32 32, %s19
      %p260 = scmp.eq.s32.totalorder %s21, 0
      // Predicated region
      $region33: #{_stage_forward.5} parent=31 // pred_check
        %p261 = pneg %p260
      $region34: #{_stage_forward.5} parent=31 // pred_check_branch
        %263 = sbr.rel (%p261) target = $region36
      $region35: #{_stage_forward.5} parent=31 // pred_region
        %264 = vst [vmem:[#allocation2] sm:$0xff] 0.0
        %265 = vst [vmem:[#allocation2 + $0x8] sm:$0xff] 0.0
        %266 = vst [vmem:[#allocation2 + $0x10] sm:$0xff] 0.0
        %267 = vst [vmem:[#allocation2 + $0x18] sm:$0xff] 0.0
        %268 = vst [vmem:[#allocation2 + $0x20] sm:$0xff] 0.0
        %269 = vst [vmem:[#allocation2 + $0x28] sm:$0xff] 0.0
        %270 = vst [vmem:[#allocation2 + $0x30] sm:$0xff] 0.0
        %271 = vst [vmem:[#allocation2 + $0x38] sm:$0xff] 0.0
        %272 = vst [vmem:[#allocation2 + $0x40] sm:$0xff] 0.0
        %273 = vst [vmem:[#allocation2 + $0x48] sm:$0xff] 0.0
        %274 = vst [vmem:[#allocation2 + $0x50] sm:$0xff] 0.0
        %275 = vst [vmem:[#allocation2 + $0x58] sm:$0xff] 0.0
        %276 = vst [vmem:[#allocation2 + $0x60] sm:$0xff] 0.0
        %277 = vst [vmem:[#allocation2 + $0x68] sm:$0xff] 0.0
        %278 = vst [vmem:[#allocation2 + $0x70] sm:$0xff] 0.0
        %279 = vst [vmem:[#allocation2 + $0x78] sm:$0xff] 0.0
        %280 = vst [vmem:[#allocation2 + $0x80] sm:$0xff] 0.0
        %281 = vst [vmem:[#allocation2 + $0x88] sm:$0xff] 0.0
        %282 = vst [vmem:[#allocation2 + $0x90] sm:$0xff] 0.0
        %283 = vst [vmem:[#allocation2 + $0x98] sm:$0xff] 0.0
        %284 = vst [vmem:[#allocation2 + $0xa0] sm:$0xff] 0.0
        %285 = vst [vmem:[#allocation2 + $0xa8] sm:$0xff] 0.0
        %286 = vst [vmem:[#allocation2 + $0xb0] sm:$0xff] 0.0
        %287 = vst [vmem:[#allocation2 + $0xb8] sm:$0xff] 0.0
        %288 = vst [vmem:[#allocation2 + $0xc0] sm:$0xff] 0.0
        %289 = vst [vmem:[#allocation2 + $0xc8] sm:$0xff] 0.0
        %290 = vst [vmem:[#allocation2 + $0xd0] sm:$0xff] 0.0
        %291 = vst [vmem:[#allocation2 + $0xd8] sm:$0xff] 0.0
        %292 = vst [vmem:[#allocation2 + $0xe0] sm:$0xff] 0.0
        %293 = vst [vmem:[#allocation2 + $0xe8] sm:$0xff] 0.0
        %294 = vst [vmem:[#allocation2 + $0xf0] sm:$0xff] 0.0
        %295 = vst [vmem:[#allocation2 + $0xf8] sm:$0xff] 0.0
      $region36: #{_stage_forward.5} parent=31 // pred_fallthru
        _
      %v296 = vld [vmem:[#allocation2] sm:$0xff]
      %v297 = vld [vmem:[#allocation2 + $0x8] sm:$0xff]
      %v298 = vld [vmem:[#allocation2 + $0x10] sm:$0xff]
      %v299 = vld [vmem:[#allocation2 + $0x18] sm:$0xff]
      %v300 = vld [vmem:[#allocation2 + $0x20] sm:$0xff]
      %v301 = vld [vmem:[#allocation2 + $0x28] sm:$0xff]
      %v302 = vld [vmem:[#allocation2 + $0x30] sm:$0xff]
      %v303 = vld [vmem:[#allocation2 + $0x38] sm:$0xff]
      %v304 = vld [vmem:[#allocation2 + $0x40] sm:$0xff]
      %v305 = vld [vmem:[#allocation2 + $0x48] sm:$0xff]
      %v306 = vld [vmem:[#allocation2 + $0x50] sm:$0xff]
      %v307 = vld [vmem:[#allocation2 + $0x58] sm:$0xff]
      %v308 = vld [vmem:[#allocation2 + $0x60] sm:$0xff]
      %v309 = vld [vmem:[#allocation2 + $0x68] sm:$0xff]
      %v310 = vld [vmem:[#allocation2 + $0x70] sm:$0xff]
      %v311 = vld [vmem:[#allocation2 + $0x78] sm:$0xff]
      %v312 = vld [vmem:[#allocation2 + $0x80] sm:$0xff]
      %v313 = vld [vmem:[#allocation2 + $0x88] sm:$0xff]
      %v314 = vld [vmem:[#allocation2 + $0x90] sm:$0xff]
      %v315 = vld [vmem:[#allocation2 + $0x98] sm:$0xff]
      %v316 = vld [vmem:[#allocation2 + $0xa0] sm:$0xff]
      %v317 = vld [vmem:[#allocation2 + $0xa8] sm:$0xff]
      %v318 = vld [vmem:[#allocation2 + $0xb0] sm:$0xff]
      %v319 = vld [vmem:[#allocation2 + $0xb8] sm:$0xff]
      %v320 = vld [vmem:[#allocation2 + $0xc0] sm:$0xff]
      %v321 = vld [vmem:[#allocation2 + $0xc8] sm:$0xff]
      %v322 = vld [vmem:[#allocation2 + $0xd0] sm:$0xff]
      %v323 = vld [vmem:[#allocation2 + $0xd8] sm:$0xff]
      %v324 = vld [vmem:[#allocation2 + $0xe0] sm:$0xff]
      %v325 = vld [vmem:[#allocation2 + $0xe8] sm:$0xff]
      %v326 = vld [vmem:[#allocation2 + $0xf0] sm:$0xff]
      %v327 = vld [vmem:[#allocation2 + $0xf8] sm:$0xff]
      %v328 = vld [vmem:[%s236] sm:$0xf]
      %v329 = vld [vmem:[%s236 + $0x4] sm:$0xf]
      %v330 = vld [vmem:[%s236 + $0x8] sm:$0xf]
      %v331 = vld [vmem:[%s236 + $0xc] sm:$0xf]
      %v332 = vld [vmem:[%s236 + $0x10] sm:$0xf]
      %v333 = vld [vmem:[%s236 + $0x14] sm:$0xf]
      %v334 = vld [vmem:[%s236 + $0x18] sm:$0xf]
      %v335 = vld [vmem:[%s236 + $0x1c] sm:$0xf]
      %v336 = vld [vmem:[%s236 + $0x20] sm:$0xf]
      %v337 = vld [vmem:[%s236 + $0x24] sm:$0xf]
      %v338 = vld [vmem:[%s236 + $0x28] sm:$0xf]
      %v339 = vld [vmem:[%s236 + $0x2c] sm:$0xf]
      %v340 = vld [vmem:[%s236 + $0x30] sm:$0xf]
      %v341 = vld [vmem:[%s236 + $0x34] sm:$0xf]
      %v342 = vld [vmem:[%s236 + $0x38] sm:$0xf]
      %v343 = vld [vmem:[%s236 + $0x3c] sm:$0xf]
      %v344 = vld [vmem:[%s236 + $0x40] sm:$0xf]
      %v345 = vld [vmem:[%s236 + $0x44] sm:$0xf]
      %v346 = vld [vmem:[%s236 + $0x48] sm:$0xf]
      %v347 = vld [vmem:[%s236 + $0x4c] sm:$0xf]
      %v348 = vld [vmem:[%s236 + $0x50] sm:$0xf]
      %v349 = vld [vmem:[%s236 + $0x54] sm:$0xf]
      %v350 = vld [vmem:[%s236 + $0x58] sm:$0xf]
      %v351 = vld [vmem:[%s236 + $0x5c] sm:$0xf]
      %v352 = vld [vmem:[%s236 + $0x60] sm:$0xf]
      %v353 = vld [vmem:[%s236 + $0x64] sm:$0xf]
      %v354 = vld [vmem:[%s236 + $0x68] sm:$0xf]
      %v355 = vld [vmem:[%s236 + $0x6c] sm:$0xf]
      %v356 = vld [vmem:[%s236 + $0x70] sm:$0xf]
      %v357 = vld [vmem:[%s236 + $0x74] sm:$0xf]
      %v358 = vld [vmem:[%s236 + $0x78] sm:$0xf]
      %v359 = vld [vmem:[%s236 + $0x7c] sm:$0xf]
      %v360 = vld [vmem:[%s245] sm:$0xf]
      %v361 = vld [vmem:[%s245 + $0x4] sm:$0xf]
      %v362 = vld [vmem:[%s245 + $0x8] sm:$0xf]
      %v363 = vld [vmem:[%s245 + $0xc] sm:$0xf]
      %v364 = vld [vmem:[%s245 + $0x10] sm:$0xf]
      %v365 = vld [vmem:[%s245 + $0x14] sm:$0xf]
      %v366 = vld [vmem:[%s245 + $0x18] sm:$0xf]
      %v367 = vld [vmem:[%s245 + $0x1c] sm:$0xf]
      %v368 = vld [vmem:[%s245 + $0x20] sm:$0xf]
      %v369 = vld [vmem:[%s245 + $0x24] sm:$0xf]
      %v370 = vld [vmem:[%s245 + $0x28] sm:$0xf]
      %v371 = vld [vmem:[%s245 + $0x2c] sm:$0xf]
      %v372 = vld [vmem:[%s245 + $0x30] sm:$0xf]
      %v373 = vld [vmem:[%s245 + $0x34] sm:$0xf]
      %v374 = vld [vmem:[%s245 + $0x38] sm:$0xf]
      %v375 = vld [vmem:[%s245 + $0x3c] sm:$0xf]
      %v408 = vunpack.c.l.b16 %v328
      %v409 = vunpack.c.l.b16 %v329
      %v410 = vunpack.c.l.b16 %v330
      %v411 = vunpack.c.l.b16 %v331
      %v412 = vunpack.c.l.b16 %v332
      %v413 = vunpack.c.l.b16 %v333
      %v414 = vunpack.c.l.b16 %v334
      %v415 = vunpack.c.l.b16 %v335
      %v416 = vunpack.c.l.b16 %v336
      %v417 = vunpack.c.l.b16 %v337
      %v418 = vunpack.c.l.b16 %v338
      %v419 = vunpack.c.l.b16 %v339
      %v420 = vunpack.c.l.b16 %v340
      %v421 = vunpack.c.l.b16 %v341
      %v422 = vunpack.c.l.b16 %v342
      %v423 = vunpack.c.l.b16 %v343
      %v424 = vunpack.c.l.b16 %v344
      %v425 = vunpack.c.l.b16 %v345
      %v426 = vunpack.c.l.b16 %v346
      %v427 = vunpack.c.l.b16 %v347
      %v428 = vunpack.c.l.b16 %v348
      %v429 = vunpack.c.l.b16 %v349
      %v430 = vunpack.c.l.b16 %v350
      %v431 = vunpack.c.l.b16 %v351
      %v432 = vunpack.c.l.b16 %v352
      %v433 = vunpack.c.l.b16 %v353
      %v434 = vunpack.c.l.b16 %v354
      %v435 = vunpack.c.l.b16 %v355
      %v436 = vunpack.c.l.b16 %v356
      %v437 = vunpack.c.l.b16 %v357
      %v438 = vunpack.c.l.b16 %v358
      %v439 = vunpack.c.l.b16 %v359
      %v440 = vpack.c.b16 %v409, %v408
      %v441 = vpack.c.b16 %v411, %v410
      %v442 = vpack.c.b16 %v413, %v412
      %v443 = vpack.c.b16 %v415, %v414
      %v444 = vpack.c.b16 %v417, %v416
      %v445 = vpack.c.b16 %v419, %v418
      %v446 = vpack.c.b16 %v421, %v420
      %v447 = vpack.c.b16 %v423, %v422
      %v448 = vpack.c.b16 %v425, %v424
      %v449 = vpack.c.b16 %v427, %v426
      %v450 = vpack.c.b16 %v429, %v428
      %v451 = vpack.c.b16 %v431, %v430
      %v452 = vpack.c.b16 %v433, %v432
      %v453 = vpack.c.b16 %v435, %v434
      %v454 = vpack.c.b16 %v437, %v436
      %v455 = vpack.c.b16 %v439, %v438
      %v488 = vunpack.c.l.b16 %v360
      %v489 = vunpack.c.l.b16 %v361
      %v490 = vunpack.c.l.b16 %v362
      %v491 = vunpack.c.l.b16 %v363
      %v492 = vunpack.c.l.b16 %v364
      %v493 = vunpack.c.l.b16 %v365
      %v494 = vunpack.c.l.b16 %v366
      %v495 = vunpack.c.l.b16 %v367
      %v496 = vunpack.c.l.b16 %v368
      %v497 = vunpack.c.l.b16 %v369
      %v498 = vunpack.c.l.b16 %v370
      %v499 = vunpack.c.l.b16 %v371
      %v500 = vunpack.c.l.b16 %v372
      %v501 = vunpack.c.l.b16 %v373
      %v502 = vunpack.c.l.b16 %v374
      %v503 = vunpack.c.l.b16 %v375
      %v504 = vpack.c.b16 %v489, %v488
      %v505 = vpack.c.b16 %v491, %v490
      %v506 = vpack.c.b16 %v493, %v492
      %v507 = vpack.c.b16 %v495, %v494
      %v508 = vpack.c.b16 %v497, %v496
      %v509 = vpack.c.b16 %v499, %v498
      %v510 = vpack.c.b16 %v501, %v500
      %v511 = vpack.c.b16 %v503, %v502
      %520 = vmatprep.subr.bf16.mxu0 0
      %521 = vmatpush1.bf16.msra.mxu0 %v511
      %522 = vmatprep.subr.bf16.mxu0 0
      %523 = vmatpush1.bf16.msra.mxu0 %v510
      %524 = vmatprep.subr.bf16.mxu0 0
      %525 = vmatpush1.bf16.msra.mxu0 %v509
      %526 = vmatprep.subr.bf16.mxu0 0
      %527 = vmatpush1.bf16.msra.mxu0 %v508
      %528 = vmatprep.subr.bf16.mxu0 0
      %529 = vmatpush1.bf16.msra.mxu0 %v507
      %530 = vmatprep.subr.bf16.mxu0 0
      %531 = vmatpush1.bf16.msra.mxu0 %v506
      %532 = vmatprep.subr.bf16.mxu0 0
      %533 = vmatpush1.bf16.msra.mxu0 %v505
      %534 = vmatprep.subr.bf16.mxu0 0
      %535 = vmatpush1.bf16.msra.mxu0 %v504
      %536 = vmatprep.subr.bf16.mxu0 0
      %537 = vmatpush2.bf16.msra.mxu0 0
      %538 = vmatprep.subr.bf16.mxu0 0
      %539 = vmatpush2.bf16.msra.mxu0 0
      %540 = vmatprep.subr.bf16.mxu0 0
      %541 = vmatpush2.bf16.msra.mxu0 0
      %542 = vmatprep.subr.bf16.mxu0 0
      %543 = vmatpush2.bf16.msra.mxu0 0
      %544 = vmatprep.subr.bf16.mxu0 0
      %545 = vmatpush2.bf16.msra.mxu0 0
      %546 = vmatprep.subr.bf16.mxu0 0
      %547 = vmatpush2.bf16.msra.mxu0 0
      %548 = vmatprep.subr.bf16.mxu0 0
      %549 = vmatpush2.bf16.msra.mxu0 0
      %550 = vmatprep.subr.bf16.mxu0 0
      %551 = vmatpush2.bf16.msra.mxu0 0
      %552 = vmatprep.mubr.bf16.mxu0 0
      %553 = vmatmul.mubr.bf16.gmra.mxu0 %v440
      %v554 = vpop.f32.mrf.mxu0
      %v555 = vadd.f32 0.0, %v554
      %v556 = vpop.f32.mrf.mxu0
      %v557 = vpop.f32.mrf.mxu0
      %v558 = vadd.f32 0.0, %v557
      %v559 = vpop.f32.mrf.mxu0
      %560 = vmatprep.mubr.bf16.mxu0 0
      %561 = vmatmul.mubr.bf16.gmra.mxu0 %v441
      %v562 = vpop.f32.mrf.mxu0
      %v563 = vadd.f32 0.0, %v562
      %v564 = vpop.f32.mrf.mxu0
      %v565 = vpop.f32.mrf.mxu0
      %v566 = vadd.f32 0.0, %v565
      %v567 = vpop.f32.mrf.mxu0
      %568 = vmatprep.mubr.bf16.mxu0 0
      %569 = vmatmul.mubr.bf16.gmra.mxu0 %v442
      %v570 = vpop.f32.mrf.mxu0
      %v571 = vadd.f32 0.0, %v570
      %v572 = vpop.f32.mrf.mxu0
      %v573 = vpop.f32.mrf.mxu0
      %v574 = vadd.f32 0.0, %v573
      %v575 = vpop.f32.mrf.mxu0
      %576 = vmatprep.mubr.bf16.mxu0 0
      %577 = vmatmul.mubr.bf16.gmra.mxu0 %v443
      %v578 = vpop.f32.mrf.mxu0
      %v579 = vadd.f32 0.0, %v578
      %v580 = vpop.f32.mrf.mxu0
      %v581 = vpop.f32.mrf.mxu0
      %v582 = vadd.f32 0.0, %v581
      %v583 = vpop.f32.mrf.mxu0
      %584 = vmatprep.mubr.bf16.mxu0 0
      %585 = vmatmul.mubr.bf16.gmra.mxu0 %v444
      %v586 = vpop.f32.mrf.mxu0
      %v587 = vadd.f32 0.0, %v586
      %v588 = vpop.f32.mrf.mxu0
      %v589 = vpop.f32.mrf.mxu0
      %v590 = vadd.f32 0.0, %v589
      %v591 = vpop.f32.mrf.mxu0
      %592 = vmatprep.mubr.bf16.mxu0 0
      %593 = vmatmul.mubr.bf16.gmra.mxu0 %v445
      %v594 = vpop.f32.mrf.mxu0
      %v595 = vadd.f32 0.0, %v594
      %v596 = vpop.f32.mrf.mxu0
      %v597 = vpop.f32.mrf.mxu0
      %v598 = vadd.f32 0.0, %v597
      %v599 = vpop.f32.mrf.mxu0
      %600 = vmatprep.mubr.bf16.mxu0 0
      %601 = vmatmul.mubr.bf16.gmra.mxu0 %v446
      %v602 = vpop.f32.mrf.mxu0
      %v603 = vadd.f32 0.0, %v602
      %v604 = vpop.f32.mrf.mxu0
      %v605 = vpop.f32.mrf.mxu0
      %v606 = vadd.f32 0.0, %v605
      %v607 = vpop.f32.mrf.mxu0
      %608 = vmatprep.mubr.bf16.mxu0 0
      %609 = vmatmul.mubr.bf16.gmra.mxu0 %v447
      %v610 = vpop.f32.mrf.mxu0
      %v611 = vadd.f32 0.0, %v610
      %v612 = vpop.f32.mrf.mxu0
      %v613 = vpop.f32.mrf.mxu0
      %v614 = vadd.f32 0.0, %v613
      %v615 = vpop.f32.mrf.mxu0
      %616 = vmatprep.mubr.bf16.mxu0 0
      %617 = vmatmul.mubr.bf16.gmra.mxu0 %v448
      %v618 = vpop.f32.mrf.mxu0
      %v619 = vadd.f32 0.0, %v618
      %v620 = vpop.f32.mrf.mxu0
      %v621 = vpop.f32.mrf.mxu0
      %v622 = vadd.f32 0.0, %v621
      %v623 = vpop.f32.mrf.mxu0
      %624 = vmatprep.mubr.bf16.mxu0 0
      %625 = vmatmul.mubr.bf16.gmra.mxu0 %v449
      %v626 = vpop.f32.mrf.mxu0
      %v627 = vadd.f32 0.0, %v626
      %v628 = vpop.f32.mrf.mxu0
      %v629 = vpop.f32.mrf.mxu0
      %v630 = vadd.f32 0.0, %v629
      %v631 = vpop.f32.mrf.mxu0
      %632 = vmatprep.mubr.bf16.mxu0 0
      %633 = vmatmul.mubr.bf16.gmra.mxu0 %v450
      %v634 = vpop.f32.mrf.mxu0
      %v635 = vadd.f32 0.0, %v634
      %v636 = vpop.f32.mrf.mxu0
      %v637 = vpop.f32.mrf.mxu0
      %v638 = vadd.f32 0.0, %v637
      %v639 = vpop.f32.mrf.mxu0
      %640 = vmatprep.mubr.bf16.mxu0 0
      %641 = vmatmul.mubr.bf16.gmra.mxu0 %v451
      %v642 = vpop.f32.mrf.mxu0
      %v643 = vadd.f32 0.0, %v642
      %v644 = vpop.f32.mrf.mxu0
      %v645 = vpop.f32.mrf.mxu0
      %v646 = vadd.f32 0.0, %v645
      %v647 = vpop.f32.mrf.mxu0
      %648 = vmatprep.mubr.bf16.mxu0 0
      %649 = vmatmul.mubr.bf16.gmra.mxu0 %v452
      %v650 = vpop.f32.mrf.mxu0
      %v651 = vadd.f32 0.0, %v650
      %v652 = vpop.f32.mrf.mxu0
      %v653 = vpop.f32.mrf.mxu0
      %v654 = vadd.f32 0.0, %v653
      %v655 = vpop.f32.mrf.mxu0
      %656 = vmatprep.mubr.bf16.mxu0 0
      %657 = vmatmul.mubr.bf16.gmra.mxu0 %v453
      %v658 = vpop.f32.mrf.mxu0
      %v659 = vadd.f32 0.0, %v658
      %v660 = vpop.f32.mrf.mxu0
      %v661 = vpop.f32.mrf.mxu0
      %v662 = vadd.f32 0.0, %v661
      %v663 = vpop.f32.mrf.mxu0
      %664 = vmatprep.mubr.bf16.mxu0 0
      %665 = vmatmul.mubr.bf16.gmra.mxu0 %v454
      %v666 = vpop.f32.mrf.mxu0
      %v667 = vadd.f32 0.0, %v666
      %v668 = vpop.f32.mrf.mxu0
      %v669 = vpop.f32.mrf.mxu0
      %v670 = vadd.f32 0.0, %v669
      %v671 = vpop.f32.mrf.mxu0
      %672 = vmatprep.mubr.bf16.mxu0 0
      %673 = vmatmul.mubr.bf16.gmra.mxu0 %v455
      %v674 = vpop.f32.mrf.mxu0
      %v675 = vadd.f32 0.0, %v674
      %v676 = vpop.f32.mrf.mxu0
      %v677 = vpop.f32.mrf.mxu0
      %v678 = vadd.f32 0.0, %v677
      %v679 = vpop.f32.mrf.mxu0
      %680 = vdwg.mxu0
      %v681 = vadd.f32 %v296, %v555
      %v682 = vadd.f32 %v297, %v558
      %v683 = vadd.f32 %v298, %v563
      %v684 = vadd.f32 %v299, %v566
      %v685 = vadd.f32 %v300, %v571
      %v686 = vadd.f32 %v301, %v574
      %v687 = vadd.f32 %v302, %v579
      %v688 = vadd.f32 %v303, %v582
      %v689 = vadd.f32 %v304, %v587
      %v690 = vadd.f32 %v305, %v590
      %v691 = vadd.f32 %v306, %v595
      %v692 = vadd.f32 %v307, %v598
      %v693 = vadd.f32 %v308, %v603
      %v694 = vadd.f32 %v309, %v606
      %v695 = vadd.f32 %v310, %v611
      %v696 = vadd.f32 %v311, %v614
      %v697 = vadd.f32 %v312, %v619
      %v698 = vadd.f32 %v313, %v622
      %v699 = vadd.f32 %v314, %v627
      %v700 = vadd.f32 %v315, %v630
      %v701 = vadd.f32 %v316, %v635
      %v702 = vadd.f32 %v317, %v638
      %v703 = vadd.f32 %v318, %v643
      %v704 = vadd.f32 %v319, %v646
      %v705 = vadd.f32 %v320, %v651
      %v706 = vadd.f32 %v321, %v654
      %v707 = vadd.f32 %v322, %v659
      %v708 = vadd.f32 %v323, %v662
      %v709 = vadd.f32 %v324, %v667
      %v710 = vadd.f32 %v325, %v670
      %v711 = vadd.f32 %v326, %v675
      %v712 = vadd.f32 %v327, %v678
      %713 = vst [vmem:[#allocation2] sm:$0xff] %v681
      %714 = vst [vmem:[#allocation2 + $0x8] sm:$0xff] %v682
      %715 = vst [vmem:[#allocation2 + $0x10] sm:$0xff] %v683
      %716 = vst [vmem:[#allocation2 + $0x18] sm:$0xff] %v684
      %717 = vst [vmem:[#allocation2 + $0x20] sm:$0xff] %v685
      %718 = vst [vmem:[#allocation2 + $0x28] sm:$0xff] %v686
      %719 = vst [vmem:[#allocation2 + $0x30] sm:$0xff] %v687
      %720 = vst [vmem:[#allocation2 + $0x38] sm:$0xff] %v688
      %721 = vst [vmem:[#allocation2 + $0x40] sm:$0xff] %v689
      %722 = vst [vmem:[#allocation2 + $0x48] sm:$0xff] %v690
      %723 = vst [vmem:[#allocation2 + $0x50] sm:$0xff] %v691
      %724 = vst [vmem:[#allocation2 + $0x58] sm:$0xff] %v692
      %725 = vst [vmem:[#allocation2 + $0x60] sm:$0xff] %v693
      %726 = vst [vmem:[#allocation2 + $0x68] sm:$0xff] %v694
      %727 = vst [vmem:[#allocation2 + $0x70] sm:$0xff] %v695
      %728 = vst [vmem:[#allocation2 + $0x78] sm:$0xff] %v696
      %729 = vst [vmem:[#allocation2 + $0x80] sm:$0xff] %v697
      %730 = vst [vmem:[#allocation2 + $0x88] sm:$0xff] %v698
      %731 = vst [vmem:[#allocation2 + $0x90] sm:$0xff] %v699
      %732 = vst [vmem:[#allocation2 + $0x98] sm:$0xff] %v700
      %733 = vst [vmem:[#allocation2 + $0xa0] sm:$0xff] %v701
      %734 = vst [vmem:[#allocation2 + $0xa8] sm:$0xff] %v702
      %735 = vst [vmem:[#allocation2 + $0xb0] sm:$0xff] %v703
      %736 = vst [vmem:[#allocation2 + $0xb8] sm:$0xff] %v704
      %737 = vst [vmem:[#allocation2 + $0xc0] sm:$0xff] %v705
      %738 = vst [vmem:[#allocation2 + $0xc8] sm:$0xff] %v706
      %739 = vst [vmem:[#allocation2 + $0xd0] sm:$0xff] %v707
      %740 = vst [vmem:[#allocation2 + $0xd8] sm:$0xff] %v708
      %741 = vst [vmem:[#allocation2 + $0xe0] sm:$0xff] %v709
      %742 = vst [vmem:[#allocation2 + $0xe8] sm:$0xff] %v710
      %743 = vst [vmem:[#allocation2 + $0xf0] sm:$0xff] %v711
      %744 = vst [vmem:[#allocation2 + $0xf8] sm:$0xff] %v712
      // Predicated region
      $region37: #{_stage_forward.5} parent=31 // pred_check
        %p745 = pneg %p260
      $region38: #{_stage_forward.5} parent=31 // pred_check_branch
        %747 = sbr.rel (%p745) target = $region40
      $region39: #{_stage_forward.5} parent=31 // pred_region
        %v748 = vld [vmem:[#allocation2] sm:$0xff]
        %v749 = vld [vmem:[#allocation2 + $0x8] sm:$0xff]
        %v750 = vld [vmem:[#allocation2 + $0x10] sm:$0xff]
        %v751 = vld [vmem:[#allocation2 + $0x18] sm:$0xff]
        %v752 = vld [vmem:[#allocation2 + $0x20] sm:$0xff]
        %v753 = vld [vmem:[#allocation2 + $0x28] sm:$0xff]
        %v754 = vld [vmem:[#allocation2 + $0x30] sm:$0xff]
        %v755 = vld [vmem:[#allocation2 + $0x38] sm:$0xff]
        %v756 = vld [vmem:[#allocation2 + $0x40] sm:$0xff]
        %v757 = vld [vmem:[#allocation2 + $0x48] sm:$0xff]
        %v758 = vld [vmem:[#allocation2 + $0x50] sm:$0xff]
        %v759 = vld [vmem:[#allocation2 + $0x58] sm:$0xff]
        %v760 = vld [vmem:[#allocation2 + $0x60] sm:$0xff]
        %v761 = vld [vmem:[#allocation2 + $0x68] sm:$0xff]
        %v762 = vld [vmem:[#allocation2 + $0x70] sm:$0xff]
        %v763 = vld [vmem:[#allocation2 + $0x78] sm:$0xff]
        %v764 = vld [vmem:[#allocation2 + $0x80] sm:$0xff]
        %v765 = vld [vmem:[#allocation2 + $0x88] sm:$0xff]
        %v766 = vld [vmem:[#allocation2 + $0x90] sm:$0xff]
        %v767 = vld [vmem:[#allocation2 + $0x98] sm:$0xff]
        %v768 = vld [vmem:[#allocation2 + $0xa0] sm:$0xff]
        %v769 = vld [vmem:[#allocation2 + $0xa8] sm:$0xff]
        %v770 = vld [vmem:[#allocation2 + $0xb0] sm:$0xff]
        %v771 = vld [vmem:[#allocation2 + $0xb8] sm:$0xff]
        %v772 = vld [vmem:[#allocation2 + $0xc0] sm:$0xff]
        %v773 = vld [vmem:[#allocation2 + $0xc8] sm:$0xff]
        %v774 = vld [vmem:[#allocation2 + $0xd0] sm:$0xff]
        %v775 = vld [vmem:[#allocation2 + $0xd8] sm:$0xff]
        %v776 = vld [vmem:[#allocation2 + $0xe0] sm:$0xff]
        %v777 = vld [vmem:[#allocation2 + $0xe8] sm:$0xff]
        %v778 = vld [vmem:[#allocation2 + $0xf0] sm:$0xff]
        %v779 = vld [vmem:[#allocation2 + $0xf8] sm:$0xff]
        %v780 = vld [vmem:[%s249] sm:$0x1]
        %v782 = vlaneseq
        %v783 = vshrl.u32 %v782, 7
        %v784 = vsub.s32 0, %v783
        %v785 = vrot.slane %v780, %v784
        %v787 = vadd.f32 %v748, %v785
        %v788 = vadd.f32 %v749, %v785
        %v789 = vadd.f32 %v750, %v785
        %v790 = vadd.f32 %v751, %v785
        %v791 = vadd.f32 %v752, %v785
        %v792 = vadd.f32 %v753, %v785
        %v793 = vadd.f32 %v754, %v785
        %v794 = vadd.f32 %v755, %v785
        %v795 = vadd.f32 %v756, %v785
        %v796 = vadd.f32 %v757, %v785
        %v797 = vadd.f32 %v758, %v785
        %v798 = vadd.f32 %v759, %v785
        %v799 = vadd.f32 %v760, %v785
        %v800 = vadd.f32 %v761, %v785
        %v801 = vadd.f32 %v762, %v785
        %v802 = vadd.f32 %v763, %v785
        %v803 = vadd.f32 %v764, %v785
        %v804 = vadd.f32 %v765, %v785
        %v805 = vadd.f32 %v766, %v785
        %v806 = vadd.f32 %v767, %v785
        %v807 = vadd.f32 %v768, %v785
        %v808 = vadd.f32 %v769, %v785
        %v809 = vadd.f32 %v770, %v785
        %v810 = vadd.f32 %v771, %v785
        %v811 = vadd.f32 %v772, %v785
        %v812 = vadd.f32 %v773, %v785
        %v813 = vadd.f32 %v774, %v785
        %v814 = vadd.f32 %v775, %v785
        %v815 = vadd.f32 %v776, %v785
        %v816 = vadd.f32 %v777, %v785
        %v817 = vadd.f32 %v778, %v785
        %v818 = vadd.f32 %v779, %v785
        %vm819 = vcmp.ge.f32.partialorder %v787, 0.0
        %vm820 = vcmp.ge.f32.partialorder %v788, 0.0
        %vm821 = vcmp.ge.f32.partialorder %v789, 0.0
        %vm822 = vcmp.ge.f32.partialorder %v790, 0.0
        %vm823 = vcmp.ge.f32.partialorder %v791, 0.0
        %vm824 = vcmp.ge.f32.partialorder %v792, 0.0
        %vm825 = vcmp.ge.f32.partialorder %v793, 0.0
        %vm826 = vcmp.ge.f32.partialorder %v794, 0.0
        %vm827 = vcmp.ge.f32.partialorder %v795, 0.0
        %vm828 = vcmp.ge.f32.partialorder %v796, 0.0
        %vm829 = vcmp.ge.f32.partialorder %v797, 0.0
        %vm830 = vcmp.ge.f32.partialorder %v798, 0.0
        %vm831 = vcmp.ge.f32.partialorder %v799, 0.0
        %vm832 = vcmp.ge.f32.partialorder %v800, 0.0
        %vm833 = vcmp.ge.f32.partialorder %v801, 0.0
        %vm834 = vcmp.ge.f32.partialorder %v802, 0.0
        %vm835 = vcmp.ge.f32.partialorder %v803, 0.0
        %vm836 = vcmp.ge.f32.partialorder %v804, 0.0
        %vm837 = vcmp.ge.f32.partialorder %v805, 0.0
        %vm838 = vcmp.ge.f32.partialorder %v806, 0.0
        %vm839 = vcmp.ge.f32.partialorder %v807, 0.0
        %vm840 = vcmp.ge.f32.partialorder %v808, 0.0
        %vm841 = vcmp.ge.f32.partialorder %v809, 0.0
        %vm842 = vcmp.ge.f32.partialorder %v810, 0.0
        %vm843 = vcmp.ge.f32.partialorder %v811, 0.0
        %vm844 = vcmp.ge.f32.partialorder %v812, 0.0
        %vm845 = vcmp.ge.f32.partialorder %v813, 0.0
        %vm846 = vcmp.ge.f32.partialorder %v814, 0.0
        %vm847 = vcmp.ge.f32.partialorder %v815, 0.0
        %vm848 = vcmp.ge.f32.partialorder %v816, 0.0
        %vm849 = vcmp.ge.f32.partialorder %v817, 0.0
        %vm850 = vcmp.ge.f32.partialorder %v818, 0.0
        %v851 = vmul.f32 %v787, 0.2
        %v852 = vmul.f32 %v788, 0.2
        %v853 = vmul.f32 %v789, 0.2
        %v854 = vmul.f32 %v790, 0.2
        %v855 = vmul.f32 %v791, 0.2
        %v856 = vmul.f32 %v792, 0.2
        %v857 = vmul.f32 %v793, 0.2
        %v858 = vmul.f32 %v794, 0.2
        %v859 = vmul.f32 %v795, 0.2
        %v860 = vmul.f32 %v796, 0.2
        %v861 = vmul.f32 %v797, 0.2
        %v862 = vmul.f32 %v798, 0.2
        %v863 = vmul.f32 %v799, 0.2
        %v864 = vmul.f32 %v800, 0.2
        %v865 = vmul.f32 %v801, 0.2
        %v866 = vmul.f32 %v802, 0.2
        %v867 = vmul.f32 %v803, 0.2
        %v868 = vmul.f32 %v804, 0.2
        %v869 = vmul.f32 %v805, 0.2
        %v870 = vmul.f32 %v806, 0.2
        %v871 = vmul.f32 %v807, 0.2
        %v872 = vmul.f32 %v808, 0.2
        %v873 = vmul.f32 %v809, 0.2
        %v874 = vmul.f32 %v810, 0.2
        %v875 = vmul.f32 %v811, 0.2
        %v876 = vmul.f32 %v812, 0.2
        %v877 = vmul.f32 %v813, 0.2
        %v878 = vmul.f32 %v814, 0.2
        %v879 = vmul.f32 %v815, 0.2
        %v880 = vmul.f32 %v816, 0.2
        %v881 = vmul.f32 %v817, 0.2
        %v882 = vmul.f32 %v818, 0.2
        %v883 = vsel %vm819, %v787, %v851
        %v884 = vsel %vm820, %v788, %v852
        %v885 = vsel %vm821, %v789, %v853
        %v886 = vsel %vm822, %v790, %v854
        %v887 = vsel %vm823, %v791, %v855
        %v888 = vsel %vm824, %v792, %v856
        %v889 = vsel %vm825, %v793, %v857
        %v890 = vsel %vm826, %v794, %v858
        %v891 = vsel %vm827, %v795, %v859
        %v892 = vsel %vm828, %v796, %v860
        %v893 = vsel %vm829, %v797, %v861
        %v894 = vsel %vm830, %v798, %v862
        %v895 = vsel %vm831, %v799, %v863
        %v896 = vsel %vm832, %v800, %v864
        %v897 = vsel %vm833, %v801, %v865
        %v898 = vsel %vm834, %v802, %v866
        %v899 = vsel %vm835, %v803, %v867
        %v900 = vsel %vm836, %v804, %v868
        %v901 = vsel %vm837, %v805, %v869
        %v902 = vsel %vm838, %v806, %v870
        %v903 = vsel %vm839, %v807, %v871
        %v904 = vsel %vm840, %v808, %v872
        %v905 = vsel %vm841, %v809, %v873
        %v906 = vsel %vm842, %v810, %v874
        %v907 = vsel %vm843, %v811, %v875
        %v908 = vsel %vm844, %v812, %v876
        %v909 = vsel %vm845, %v813, %v877
        %v910 = vsel %vm846, %v814, %v878
        %v911 = vsel %vm847, %v815, %v879
        %v912 = vsel %vm848, %v816, %v880
        %v913 = vsel %vm849, %v817, %v881
        %v914 = vsel %vm850, %v818, %v882
        %v915 = vpack.c.bf16 %v884, %v883
        %v916 = vpack.c.bf16 %v886, %v885
        %v917 = vpack.c.bf16 %v888, %v887
        %v918 = vpack.c.bf16 %v890, %v889
        %v919 = vpack.c.bf16 %v892, %v891
        %v920 = vpack.c.bf16 %v894, %v893
        %v921 = vpack.c.bf16 %v896, %v895
        %v922 = vpack.c.bf16 %v898, %v897
        %v923 = vpack.c.bf16 %v900, %v899
        %v924 = vpack.c.bf16 %v902, %v901
        %v925 = vpack.c.bf16 %v904, %v903
        %v926 = vpack.c.bf16 %v906, %v905
        %v927 = vpack.c.bf16 %v908, %v907
        %v928 = vpack.c.bf16 %v910, %v909
        %v929 = vpack.c.bf16 %v912, %v911
        %v930 = vpack.c.bf16 %v914, %v913
        %v947 = vunpack.c.l.b16 %v915
        %v948 = vunpack.c.h.b16 %v915
        %v949 = vunpack.c.l.b16 %v916
        %v950 = vunpack.c.h.b16 %v916
        %v951 = vunpack.c.l.b16 %v917
        %v952 = vunpack.c.h.b16 %v917
        %v953 = vunpack.c.l.b16 %v918
        %v954 = vunpack.c.h.b16 %v918
        %v955 = vunpack.c.l.b16 %v919
        %v956 = vunpack.c.h.b16 %v919
        %v957 = vunpack.c.l.b16 %v920
        %v958 = vunpack.c.h.b16 %v920
        %v959 = vunpack.c.l.b16 %v921
        %v960 = vunpack.c.h.b16 %v921
        %v961 = vunpack.c.l.b16 %v922
        %v962 = vunpack.c.h.b16 %v922
        %v963 = vunpack.c.l.b16 %v923
        %v964 = vunpack.c.h.b16 %v923
        %v965 = vunpack.c.l.b16 %v924
        %v966 = vunpack.c.h.b16 %v924
        %v967 = vunpack.c.l.b16 %v925
        %v968 = vunpack.c.h.b16 %v925
        %v969 = vunpack.c.l.b16 %v926
        %v970 = vunpack.c.h.b16 %v926
        %v971 = vunpack.c.l.b16 %v927
        %v972 = vunpack.c.h.b16 %v927
        %v973 = vunpack.c.l.b16 %v928
        %v974 = vunpack.c.h.b16 %v928
        %v975 = vunpack.c.l.b16 %v929
        %v976 = vunpack.c.h.b16 %v929
        %v977 = vunpack.c.l.b16 %v930
        %v978 = vunpack.c.h.b16 %v930
        %v979 = vpack.c.b16 %v947, %v947
        %v980 = vpack.c.b16 %v948, %v948
        %v981 = vpack.c.b16 %v949, %v949
        %v982 = vpack.c.b16 %v950, %v950
        %v983 = vpack.c.b16 %v951, %v951
        %v984 = vpack.c.b16 %v952, %v952
        %v985 = vpack.c.b16 %v953, %v953
        %v986 = vpack.c.b16 %v954, %v954
        %v987 = vpack.c.b16 %v955, %v955
        %v988 = vpack.c.b16 %v956, %v956
        %v989 = vpack.c.b16 %v957, %v957
        %v990 = vpack.c.b16 %v958, %v958
        %v991 = vpack.c.b16 %v959, %v959
        %v992 = vpack.c.b16 %v960, %v960
        %v993 = vpack.c.b16 %v961, %v961
        %v994 = vpack.c.b16 %v962, %v962
        %v995 = vpack.c.b16 %v963, %v963
        %v996 = vpack.c.b16 %v964, %v964
        %v997 = vpack.c.b16 %v965, %v965
        %v998 = vpack.c.b16 %v966, %v966
        %v999 = vpack.c.b16 %v967, %v967
        %v1000 = vpack.c.b16 %v968, %v968
        %v1001 = vpack.c.b16 %v969, %v969
        %v1002 = vpack.c.b16 %v970, %v970
        %v1003 = vpack.c.b16 %v971, %v971
        %v1004 = vpack.c.b16 %v972, %v972
        %v1005 = vpack.c.b16 %v973, %v973
        %v1006 = vpack.c.b16 %v974, %v974
        %v1007 = vpack.c.b16 %v975, %v975
        %v1008 = vpack.c.b16 %v976, %v976
        %v1009 = vpack.c.b16 %v977, %v977
        %v1010 = vpack.c.b16 %v978, %v978
        %1043 = vst [vmem:[%s257] sm:$0xf] %v979
        %1044 = vst [vmem:[%s257 + $0x4] sm:$0xf] %v980
        %1045 = vst [vmem:[%s257 + $0x8] sm:$0xf] %v981
        %1046 = vst [vmem:[%s257 + $0xc] sm:$0xf] %v982
        %1047 = vst [vmem:[%s257 + $0x10] sm:$0xf] %v983
        %1048 = vst [vmem:[%s257 + $0x14] sm:$0xf] %v984
        %1049 = vst [vmem:[%s257 + $0x18] sm:$0xf] %v985
        %1050 = vst [vmem:[%s257 + $0x1c] sm:$0xf] %v986
        %1051 = vst [vmem:[%s257 + $0x20] sm:$0xf] %v987
        %1052 = vst [vmem:[%s257 + $0x24] sm:$0xf] %v988
        %1053 = vst [vmem:[%s257 + $0x28] sm:$0xf] %v989
        %1054 = vst [vmem:[%s257 + $0x2c] sm:$0xf] %v990
        %1055 = vst [vmem:[%s257 + $0x30] sm:$0xf] %v991
        %1056 = vst [vmem:[%s257 + $0x34] sm:$0xf] %v992
        %1057 = vst [vmem:[%s257 + $0x38] sm:$0xf] %v993
        %1058 = vst [vmem:[%s257 + $0x3c] sm:$0xf] %v994
        %1059 = vst [vmem:[%s257 + $0x40] sm:$0xf] %v995
        %1060 = vst [vmem:[%s257 + $0x44] sm:$0xf] %v996
        %1061 = vst [vmem:[%s257 + $0x48] sm:$0xf] %v997
        %1062 = vst [vmem:[%s257 + $0x4c] sm:$0xf] %v998
        %1063 = vst [vmem:[%s257 + $0x50] sm:$0xf] %v999
        %1064 = vst [vmem:[%s257 + $0x54] sm:$0xf] %v1000
        %1065 = vst [vmem:[%s257 + $0x58] sm:$0xf] %v1001
        %1066 = vst [vmem:[%s257 + $0x5c] sm:$0xf] %v1002
        %1067 = vst [vmem:[%s257 + $0x60] sm:$0xf] %v1003
        %1068 = vst [vmem:[%s257 + $0x64] sm:$0xf] %v1004
        %1069 = vst [vmem:[%s257 + $0x68] sm:$0xf] %v1005
        %1070 = vst [vmem:[%s257 + $0x6c] sm:$0xf] %v1006
        %1071 = vst [vmem:[%s257 + $0x70] sm:$0xf] %v1007
        %1072 = vst [vmem:[%s257 + $0x74] sm:$0xf] %v1008
        %1073 = vst [vmem:[%s257 + $0x78] sm:$0xf] %v1009
        %1074 = vst [vmem:[%s257 + $0x7c] sm:$0xf] %v1010
      $region40: #{_stage_forward.5} parent=31 // pred_fallthru
        _
      %s1075 = smul.u32 32, %s19
      %p1076 = scmp.lt.s32.totalorder %s1075, 63
      %s1077 = scalar_select %p1076, %s1075, 63
      %p1078 = scmp.lt.s32.totalorder %s20, 0
      %s1079 = scalar_select %p1078, %s20, 0
      %s1080 = sadd.s32 %s1079, %s1077
      %s1081 = smul.addr %s1080, 4
      %s1082 = scalar_lea.vmem %s3, %s1081
      // Predicated region
      $region41: #{_stage_forward.5} parent=31 // pred_check
        %p1083 = pneg %p135
      $region42: #{_stage_forward.5} parent=31 // pred_check_branch
        %1085 = sbr.rel (%p1083) target = $region44
      $region43: #{_stage_forward.5} parent=31 // pred_region
        %s1086 = smul.u32 32, %s19
      $region44: #{_stage_forward.5} parent=31 // pred_fallthru
        _
    $region32: #{_stage_forward.5} parent=5 // pred_fallthru
      _
    %p1087 = scmp.le.s32.totalorder 2, %s9
    // Predicated region
    $region45: #{_stage_forward.5} parent=5 // pred_check
      %p1088 = pneg %p1087
    $region46: #{_stage_forward.5} parent=5 // pred_check_branch
      %1090 = sbr.rel (%p1088) target = $region48
    $region47: #{_stage_forward.5} parent=5 // pred_region
      %s1091 = ssub.s32 %s9, 2
      // Predicated region
      $region49: #{_stage_forward.5} parent=47 // pred_check
        %p1092 = pneg %p141
      $region50: #{_stage_forward.5} parent=47 // pred_check_branch
        %1094 = sbr.rel (%p1092) target = $region52
      $region51: #{_stage_forward.5} parent=47 // pred_region
        %s1095 = smul.u32 32, %s22
        %p1096 = scmp.lt.s32.totalorder %s1095, 63
        %s1097 = scalar_select %p1096, %s1095, 63
        %p1098 = scmp.lt.s32.totalorder %s23, 0
        %s1099 = scalar_select %p1098, %s23, 0
        %s1100 = sadd.s32 %s1099, %s1097
        %s1101 = smul.addr %s1100, 4
        %s1102 = scalar_lea.vmem %s3, %s1101
      $region52: #{_stage_forward.5} parent=47 // pred_fallthru
        _
    $region48: #{_stage_forward.5} parent=5 // pred_fallthru
      _
  $region6: #{_stage_forward.5} parent=0 // loop_footer
    %s13 = sadd.s32 1, %s9
  $region7: #{_stage_forward.5} parent=0 // loop_footer_branch
    %8 = sbr.rel target = $region3
  $region8: #{_stage_forward.5} parent=0 // loop_exit
    _

// kernel: _stage_forward.6
$region0: #{_stage_forward.6}
  #allocation0 [shape = 'u32[]', space=smem, size = 0x4, offset = 0x4, fixed_abs, tag = 'smem constant byte address 0x4 - core index']
  #allocation1 [shape = 'u32[144,128]{1,0:T(1,128)}', space=vmem, size = 0x12000, scoped, tag = 'internal scratch']
  #allocation2 [shape = 'f32[128,128]{1,0:T(8,128)}', space=vmem, size = 0x10000, scoped, tag = 'scratch operand']
  %s0 = inlined_call_operand.vmem [shape: bf16[128,128], index: 0, kind: input, shape index: {}]
  %s1 = inlined_call_operand.vmem [shape: bf16[128,128], index: 1, kind: input, shape index: {}]
  %s2 = inlined_call_operand.vmem [shape: f32[1,128], index: 2, kind: input, shape index: {}]
  %s3 = inlined_call_operand.vmem [shape: bf16[128,128], index: 3, kind: output, shape index: {}]
  %s4 = sld [smem:[#allocation0]]
  $region30: #{_stage_forward.6} parent=0
    _
  %s6 = ssub.s32 1, %s4
  %s7 = scalar_select 0, %s6, %s4
  // Predicated region
  $region2: #{_stage_forward.6} parent=0 // pred_check
    _
  $region3: #{_stage_forward.6} parent=0 // pred_check_branch
    %9 = sbr.rel (0) target = $region5
  $region4: #{_stage_forward.6} parent=0 // pred_region
    _
  $region5: #{_stage_forward.6} parent=0 // pred_fallthru
    _
  // Predicated region
  $region6: #{_stage_forward.6} parent=0 // pred_check
    _
  $region7: #{_stage_forward.6} parent=0 // pred_check_branch
    %11 = sbr.rel (0) target = $region9
  $region8: #{_stage_forward.6} parent=0 // pred_region
    _
  $region9: #{_stage_forward.6} parent=0 // pred_fallthru
    _
  // Predicated region
  $region10: #{_stage_forward.6} parent=0 // pred_check
    _
  $region11: #{_stage_forward.6} parent=0 // pred_check_branch
    %13 = sbr.rel (0) target = $region13
  $region12: #{_stage_forward.6} parent=0 // pred_region
    _
  $region13: #{_stage_forward.6} parent=0 // pred_fallthru
    _
  %p15 = scmp.eq.s32.totalorder 0, 0
  // Predicated region
  $region14: #{_stage_forward.6} parent=0 // pred_check
    %p16 = pneg %p15
  $region15: #{_stage_forward.6} parent=0 // pred_check_branch
    %18 = sbr.rel (%p16) target = $region17
  $region16: #{_stage_forward.6} parent=0 // pred_region
    %19 = vst [vmem:[#allocation2] sm:$0xff] 0.0
    %20 = vst [vmem:[#allocation2 + $0x8] sm:$0xff] 0.0
    %21 = vst [vmem:[#allocation2 + $0x10] sm:$0xff] 0.0
    %22 = vst [vmem:[#allocation2 + $0x18] sm:$0xff] 0.0
    %23 = vst [vmem:[#allocation2 + $0x20] sm:$0xff] 0.0
    %24 = vst [vmem:[#allocation2 + $0x28] sm:$0xff] 0.0
    %25 = vst [vmem:[#allocation2 + $0x30] sm:$0xff] 0.0
    %26 = vst [vmem:[#allocation2 + $0x38] sm:$0xff] 0.0
    %27 = vst [vmem:[#allocation2 + $0x40] sm:$0xff] 0.0
    %28 = vst [vmem:[#allocation2 + $0x48] sm:$0xff] 0.0
    %29 = vst [vmem:[#allocation2 + $0x50] sm:$0xff] 0.0
    %30 = vst [vmem:[#allocation2 + $0x58] sm:$0xff] 0.0
    %31 = vst [vmem:[#allocation2 + $0x60] sm:$0xff] 0.0
    %32 = vst [vmem:[#allocation2 + $0x68] sm:$0xff] 0.0
    %33 = vst [vmem:[#allocation2 + $0x70] sm:$0xff] 0.0
    %34 = vst [vmem:[#allocation2 + $0x78] sm:$0xff] 0.0
  $region17: #{_stage_forward.6} parent=0 // pred_fallthru
    _
  %v35 = vld [vmem:[#allocation2] sm:$0xff]
  %v36 = vld [vmem:[#allocation2 + $0x8] sm:$0xff]
  %v37 = vld [vmem:[#allocation2 + $0x10] sm:$0xff]
  %v38 = vld [vmem:[#allocation2 + $0x18] sm:$0xff]
  %v39 = vld [vmem:[#allocation2 + $0x20] sm:$0xff]
  %v40 = vld [vmem:[#allocation2 + $0x28] sm:$0xff]
  %v41 = vld [vmem:[#allocation2 + $0x30] sm:$0xff]
  %v42 = vld [vmem:[#allocation2 + $0x38] sm:$0xff]
  %v43 = vld [vmem:[#allocation2 + $0x40] sm:$0xff]
  %v44 = vld [vmem:[#allocation2 + $0x48] sm:$0xff]
  %v45 = vld [vmem:[#allocation2 + $0x50] sm:$0xff]
  %v46 = vld [vmem:[#allocation2 + $0x58] sm:$0xff]
  %v47 = vld [vmem:[#allocation2 + $0x60] sm:$0xff]
  %v48 = vld [vmem:[#allocation2 + $0x68] sm:$0xff]
  %v49 = vld [vmem:[#allocation2 + $0x70] sm:$0xff]
  %v50 = vld [vmem:[#allocation2 + $0x78] sm:$0xff]
  %v51 = vld [vmem:[%s0] sm:$0xf]
  %v52 = vld [vmem:[%s0 + $0x4] sm:$0xf]
  %v53 = vld [vmem:[%s0 + $0x8] sm:$0xf]
  %v54 = vld [vmem:[%s0 + $0xc] sm:$0xf]
  %v55 = vld [vmem:[%s0 + $0x10] sm:$0xf]
  %v56 = vld [vmem:[%s0 + $0x14] sm:$0xf]
  %v57 = vld [vmem:[%s0 + $0x18] sm:$0xf]
  %v58 = vld [vmem:[%s0 + $0x1c] sm:$0xf]
  %v59 = vld [vmem:[%s0 + $0x20] sm:$0xf]
  %v60 = vld [vmem:[%s0 + $0x24] sm:$0xf]
  %v61 = vld [vmem:[%s0 + $0x28] sm:$0xf]
  %v62 = vld [vmem:[%s0 + $0x2c] sm:$0xf]
  %v63 = vld [vmem:[%s0 + $0x30] sm:$0xf]
  %v64 = vld [vmem:[%s0 + $0x34] sm:$0xf]
  %v65 = vld [vmem:[%s0 + $0x38] sm:$0xf]
  %v66 = vld [vmem:[%s0 + $0x3c] sm:$0xf]
  %v67 = vld [vmem:[%s1] sm:$0xf]
  %v68 = vld [vmem:[%s1 + $0x4] sm:$0xf]
  %v69 = vld [vmem:[%s1 + $0x8] sm:$0xf]
  %v70 = vld [vmem:[%s1 + $0xc] sm:$0xf]
  %v71 = vld [vmem:[%s1 + $0x10] sm:$0xf]
  %v72 = vld [vmem:[%s1 + $0x14] sm:$0xf]
  %v73 = vld [vmem:[%s1 + $0x18] sm:$0xf]
  %v74 = vld [vmem:[%s1 + $0x1c] sm:$0xf]
  %v75 = vld [vmem:[%s1 + $0x20] sm:$0xf]
  %v76 = vld [vmem:[%s1 + $0x24] sm:$0xf]
  %v77 = vld [vmem:[%s1 + $0x28] sm:$0xf]
  %v78 = vld [vmem:[%s1 + $0x2c] sm:$0xf]
  %v79 = vld [vmem:[%s1 + $0x30] sm:$0xf]
  %v80 = vld [vmem:[%s1 + $0x34] sm:$0xf]
  %v81 = vld [vmem:[%s1 + $0x38] sm:$0xf]
  %v82 = vld [vmem:[%s1 + $0x3c] sm:$0xf]
  %v99 = vunpack.c.l.b16 %v51
  %v100 = vunpack.c.l.b16 %v52
  %v101 = vunpack.c.l.b16 %v53
  %v102 = vunpack.c.l.b16 %v54
  %v103 = vunpack.c.l.b16 %v55
  %v104 = vunpack.c.l.b16 %v56
  %v105 = vunpack.c.l.b16 %v57
  %v106 = vunpack.c.l.b16 %v58
  %v107 = vunpack.c.l.b16 %v59
  %v108 = vunpack.c.l.b16 %v60
  %v109 = vunpack.c.l.b16 %v61
  %v110 = vunpack.c.l.b16 %v62
  %v111 = vunpack.c.l.b16 %v63
  %v112 = vunpack.c.l.b16 %v64
  %v113 = vunpack.c.l.b16 %v65
  %v114 = vunpack.c.l.b16 %v66
  %v115 = vpack.c.b16 %v100, %v99
  %v116 = vpack.c.b16 %v102, %v101
  %v117 = vpack.c.b16 %v104, %v103
  %v118 = vpack.c.b16 %v106, %v105
  %v119 = vpack.c.b16 %v108, %v107
  %v120 = vpack.c.b16 %v110, %v109
  %v121 = vpack.c.b16 %v112, %v111
  %v122 = vpack.c.b16 %v114, %v113
  %v147 = vunpack.c.l.b16 %v67
  %v148 = vunpack.c.l.b16 %v68
  %v149 = vunpack.c.l.b16 %v69
  %v150 = vunpack.c.l.b16 %v70
  %v151 = vunpack.c.l.b16 %v71
  %v152 = vunpack.c.l.b16 %v72
  %v153 = vunpack.c.l.b16 %v73
  %v154 = vunpack.c.l.b16 %v74
  %v155 = vunpack.c.l.b16 %v75
  %v156 = vunpack.c.l.b16 %v76
  %v157 = vunpack.c.l.b16 %v77
  %v158 = vunpack.c.l.b16 %v78
  %v159 = vunpack.c.l.b16 %v79
  %v160 = vunpack.c.l.b16 %v80
  %v161 = vunpack.c.l.b16 %v81
  %v162 = vunpack.c.l.b16 %v82
  %v163 = vpack.c.b16 %v148, %v147
  %v164 = vpack.c.b16 %v150, %v149
  %v165 = vpack.c.b16 %v152, %v151
  %v166 = vpack.c.b16 %v154, %v153
  %v167 = vpack.c.b16 %v156, %v155
  %v168 = vpack.c.b16 %v158, %v157
  %v169 = vpack.c.b16 %v160, %v159
  %v170 = vpack.c.b16 %v162, %v161
  %179 = vmatprep.subr.bf16.mxu0 0
  %180 = vmatpush1.bf16.msra.mxu0 %v170
  %181 = vmatprep.subr.bf16.mxu0 0
  %182 = vmatpush1.bf16.msra.mxu0 %v169
  %183 = vmatprep.subr.bf16.mxu0 0
  %184 = vmatpush1.bf16.msra.mxu0 %v168
  %185 = vmatprep.subr.bf16.mxu0 0
  %186 = vmatpush1.bf16.msra.mxu0 %v167
  %187 = vmatprep.subr.bf16.mxu0 0
  %188 = vmatpush1.bf16.msra.mxu0 %v166
  %189 = vmatprep.subr.bf16.mxu0 0
  %190 = vmatpush1.bf16.msra.mxu0 %v165
  %191 = vmatprep.subr.bf16.mxu0 0
  %192 = vmatpush1.bf16.msra.mxu0 %v164
  %193 = vmatprep.subr.bf16.mxu0 0
  %194 = vmatpush1.bf16.msra.mxu0 %v163
  %195 = vmatprep.subr.bf16.mxu0 0
  %196 = vmatpush2.bf16.msra.mxu0 0
  %197 = vmatprep.subr.bf16.mxu0 0
  %198 = vmatpush2.bf16.msra.mxu0 0
  %199 = vmatprep.subr.bf16.mxu0 0
  %200 = vmatpush2.bf16.msra.mxu0 0
  %201 = vmatprep.subr.bf16.mxu0 0
  %202 = vmatpush2.bf16.msra.mxu0 0
  %203 = vmatprep.subr.bf16.mxu0 0
  %204 = vmatpush2.bf16.msra.mxu0 0
  %205 = vmatprep.subr.bf16.mxu0 0
  %206 = vmatpush2.bf16.msra.mxu0 0
  %207 = vmatprep.subr.bf16.mxu0 0
  %208 = vmatpush2.bf16.msra.mxu0 0
  %209 = vmatprep.subr.bf16.mxu0 0
  %210 = vmatpush2.bf16.msra.mxu0 0
  %211 = vmatprep.mubr.bf16.mxu0 0
  %212 = vmatmul.mubr.bf16.gmra.mxu0 %v115
  %v213 = vpop.f32.mrf.mxu0
  %v214 = vadd.f32 0.0, %v213
  %v215 = vpop.f32.mrf.mxu0
  %v216 = vpop.f32.mrf.mxu0
  %v217 = vadd.f32 0.0, %v216
  %v218 = vpop.f32.mrf.mxu0
  %219 = vmatprep.mubr.bf16.mxu0 0
  %220 = vmatmul.mubr.bf16.gmra.mxu0 %v116
  %v221 = vpop.f32.mrf.mxu0
  %v222 = vadd.f32 0.0, %v221
  %v223 = vpop.f32.mrf.mxu0
  %v224 = vpop.f32.mrf.mxu0
  %v225 = vadd.f32 0.0, %v224
  %v226 = vpop.f32.mrf.mxu0
  %227 = vmatprep.mubr.bf16.mxu0 0
  %228 = vmatmul.mubr.bf16.gmra.mxu0 %v117
  %v229 = vpop.f32.mrf.mxu0
  %v230 = vadd.f32 0.0, %v229
  %v231 = vpop.f32.mrf.mxu0
  %v232 = vpop.f32.mrf.mxu0
  %v233 = vadd.f32 0.0, %v232
  %v234 = vpop.f32.mrf.mxu0
  %235 = vmatprep.mubr.bf16.mxu0 0
  %236 = vmatmul.mubr.bf16.gmra.mxu0 %v118
  %v237 = vpop.f32.mrf.mxu0
  %v238 = vadd.f32 0.0, %v237
  %v239 = vpop.f32.mrf.mxu0
  %v240 = vpop.f32.mrf.mxu0
  %v241 = vadd.f32 0.0, %v240
  %v242 = vpop.f32.mrf.mxu0
  %243 = vmatprep.mubr.bf16.mxu0 0
  %244 = vmatmul.mubr.bf16.gmra.mxu0 %v119
  %v245 = vpop.f32.mrf.mxu0
  %v246 = vadd.f32 0.0, %v245
  %v247 = vpop.f32.mrf.mxu0
  %v248 = vpop.f32.mrf.mxu0
  %v249 = vadd.f32 0.0, %v248
  %v250 = vpop.f32.mrf.mxu0
  %251 = vmatprep.mubr.bf16.mxu0 0
  %252 = vmatmul.mubr.bf16.gmra.mxu0 %v120
  %v253 = vpop.f32.mrf.mxu0
  %v254 = vadd.f32 0.0, %v253
  %v255 = vpop.f32.mrf.mxu0
  %v256 = vpop.f32.mrf.mxu0
  %v257 = vadd.f32 0.0, %v256
  %v258 = vpop.f32.mrf.mxu0
  %259 = vmatprep.mubr.bf16.mxu0 0
  %260 = vmatmul.mubr.bf16.gmra.mxu0 %v121
  %v261 = vpop.f32.mrf.mxu0
  %v262 = vadd.f32 0.0, %v261
  %v263 = vpop.f32.mrf.mxu0
  %v264 = vpop.f32.mrf.mxu0
  %v265 = vadd.f32 0.0, %v264
  %v266 = vpop.f32.mrf.mxu0
  %267 = vmatprep.mubr.bf16.mxu0 0
  %268 = vmatmul.mubr.bf16.gmra.mxu0 %v122
  %v269 = vpop.f32.mrf.mxu0
  %v270 = vadd.f32 0.0, %v269
  %v271 = vpop.f32.mrf.mxu0
  %v272 = vpop.f32.mrf.mxu0
  %v273 = vadd.f32 0.0, %v272
  %v274 = vpop.f32.mrf.mxu0
  %275 = vdwg.mxu0
  %v276 = vadd.f32 %v35, %v214
  %v277 = vadd.f32 %v36, %v217
  %v278 = vadd.f32 %v37, %v222
  %v279 = vadd.f32 %v38, %v225
  %v280 = vadd.f32 %v39, %v230
  %v281 = vadd.f32 %v40, %v233
  %v282 = vadd.f32 %v41, %v238
  %v283 = vadd.f32 %v42, %v241
  %v284 = vadd.f32 %v43, %v246
  %v285 = vadd.f32 %v44, %v249
  %v286 = vadd.f32 %v45, %v254
  %v287 = vadd.f32 %v46, %v257
  %v288 = vadd.f32 %v47, %v262
  %v289 = vadd.f32 %v48, %v265
  %v290 = vadd.f32 %v49, %v270
  %v291 = vadd.f32 %v50, %v273
  %292 = vst [vmem:[#allocation2] sm:$0xff] %v276
  %293 = vst [vmem:[#allocation2 + $0x8] sm:$0xff] %v277
  %294 = vst [vmem:[#allocation2 + $0x10] sm:$0xff] %v278
  %295 = vst [vmem:[#allocation2 + $0x18] sm:$0xff] %v279
  %296 = vst [vmem:[#allocation2 + $0x20] sm:$0xff] %v280
  %297 = vst [vmem:[#allocation2 + $0x28] sm:$0xff] %v281
  %298 = vst [vmem:[#allocation2 + $0x30] sm:$0xff] %v282
  %299 = vst [vmem:[#allocation2 + $0x38] sm:$0xff] %v283
  %300 = vst [vmem:[#allocation2 + $0x40] sm:$0xff] %v284
  %301 = vst [vmem:[#allocation2 + $0x48] sm:$0xff] %v285
  %302 = vst [vmem:[#allocation2 + $0x50] sm:$0xff] %v286
  %303 = vst [vmem:[#allocation2 + $0x58] sm:$0xff] %v287
  %304 = vst [vmem:[#allocation2 + $0x60] sm:$0xff] %v288
  %305 = vst [vmem:[#allocation2 + $0x68] sm:$0xff] %v289
  %306 = vst [vmem:[#allocation2 + $0x70] sm:$0xff] %v290
  %307 = vst [vmem:[#allocation2 + $0x78] sm:$0xff] %v291
  // Predicated region
  $region18: #{_stage_forward.6} parent=0 // pred_check
    %p308 = pneg %p15
  $region19: #{_stage_forward.6} parent=0 // pred_check_branch
    %310 = sbr.rel (%p308) target = $region21
  $region20: #{_stage_forward.6} parent=0 // pred_region
    %v311 = vld [vmem:[#allocation2] sm:$0xff]
    %v312 = vld [vmem:[#allocation2 + $0x8] sm:$0xff]
    %v313 = vld [vmem:[#allocation2 + $0x10] sm:$0xff]
    %v314 = vld [vmem:[#allocation2 + $0x18] sm:$0xff]
    %v315 = vld [vmem:[#allocation2 + $0x20] sm:$0xff]
    %v316 = vld [vmem:[#allocation2 + $0x28] sm:$0xff]
    %v317 = vld [vmem:[#allocation2 + $0x30] sm:$0xff]
    %v318 = vld [vmem:[#allocation2 + $0x38] sm:$0xff]
    %v319 = vld [vmem:[#allocation2 + $0x40] sm:$0xff]
    %v320 = vld [vmem:[#allocation2 + $0x48] sm:$0xff]
    %v321 = vld [vmem:[#allocation2 + $0x50] sm:$0xff]
    %v322 = vld [vmem:[#allocation2 + $0x58] sm:$0xff]
    %v323 = vld [vmem:[#allocation2 + $0x60] sm:$0xff]
    %v324 = vld [vmem:[#allocation2 + $0x68] sm:$0xff]
    %v325 = vld [vmem:[#allocation2 + $0x70] sm:$0xff]
    %v326 = vld [vmem:[#allocation2 + $0x78] sm:$0xff]
    %v327 = vld [vmem:[%s2] sm:$0x1]
    %v329 = vlaneseq
    %v330 = vshrl.u32 %v329, 7
    %v331 = vsub.s32 0, %v330
    %v332 = vrot.slane %v327, %v331
    %v334 = vadd.f32 %v311, %v332
    %v335 = vadd.f32 %v312, %v332
    %v336 = vadd.f32 %v313, %v332
    %v337 = vadd.f32 %v314, %v332
    %v338 = vadd.f32 %v315, %v332
    %v339 = vadd.f32 %v316, %v332
    %v340 = vadd.f32 %v317, %v332
    %v341 = vadd.f32 %v318, %v332
    %v342 = vadd.f32 %v319, %v332
    %v343 = vadd.f32 %v320, %v332
    %v344 = vadd.f32 %v321, %v332
    %v345 = vadd.f32 %v322, %v332
    %v346 = vadd.f32 %v323, %v332
    %v347 = vadd.f32 %v324, %v332
    %v348 = vadd.f32 %v325, %v332
    %v349 = vadd.f32 %v326, %v332
    %vm350 = vcmp.ge.f32.partialorder %v334, 0.0
    %vm351 = vcmp.ge.f32.partialorder %v335, 0.0
    %vm352 = vcmp.ge.f32.partialorder %v336, 0.0
    %vm353 = vcmp.ge.f32.partialorder %v337, 0.0
    %vm354 = vcmp.ge.f32.partialorder %v338, 0.0
    %vm355 = vcmp.ge.f32.partialorder %v339, 0.0
    %vm356 = vcmp.ge.f32.partialorder %v340, 0.0
    %vm357 = vcmp.ge.f32.partialorder %v341, 0.0
    %vm358 = vcmp.ge.f32.partialorder %v342, 0.0
    %vm359 = vcmp.ge.f32.partialorder %v343, 0.0
    %vm360 = vcmp.ge.f32.partialorder %v344, 0.0
    %vm361 = vcmp.ge.f32.partialorder %v345, 0.0
    %vm362 = vcmp.ge.f32.partialorder %v346, 0.0
    %vm363 = vcmp.ge.f32.partialorder %v347, 0.0
    %vm364 = vcmp.ge.f32.partialorder %v348, 0.0
    %vm365 = vcmp.ge.f32.partialorder %v349, 0.0
    %v366 = vmul.f32 %v334, 0.2
    %v367 = vmul.f32 %v335, 0.2
    %v368 = vmul.f32 %v336, 0.2
    %v369 = vmul.f32 %v337, 0.2
    %v370 = vmul.f32 %v338, 0.2
    %v371 = vmul.f32 %v339, 0.2
    %v372 = vmul.f32 %v340, 0.2
    %v373 = vmul.f32 %v341, 0.2
    %v374 = vmul.f32 %v342, 0.2
    %v375 = vmul.f32 %v343, 0.2
    %v376 = vmul.f32 %v344, 0.2
    %v377 = vmul.f32 %v345, 0.2
    %v378 = vmul.f32 %v346, 0.2
    %v379 = vmul.f32 %v347, 0.2
    %v380 = vmul.f32 %v348, 0.2
    %v381 = vmul.f32 %v349, 0.2
    %v382 = vsel %vm350, %v334, %v366
    %v383 = vsel %vm351, %v335, %v367
    %v384 = vsel %vm352, %v336, %v368
    %v385 = vsel %vm353, %v337, %v369
    %v386 = vsel %vm354, %v338, %v370
    %v387 = vsel %vm355, %v339, %v371
    %v388 = vsel %vm356, %v340, %v372
    %v389 = vsel %vm357, %v341, %v373
    %v390 = vsel %vm358, %v342, %v374
    %v391 = vsel %vm359, %v343, %v375
    %v392 = vsel %vm360, %v344, %v376
    %v393 = vsel %vm361, %v345, %v377
    %v394 = vsel %vm362, %v346, %v378
    %v395 = vsel %vm363, %v347, %v379
    %v396 = vsel %vm364, %v348, %v380
    %v397 = vsel %vm365, %v349, %v381
    %v398 = vpack.c.bf16 %v383, %v382
    %v399 = vpack.c.bf16 %v385, %v384
    %v400 = vpack.c.bf16 %v387, %v386
    %v401 = vpack.c.bf16 %v389, %v388
    %v402 = vpack.c.bf16 %v391, %v390
    %v403 = vpack.c.bf16 %v393, %v392
    %v404 = vpack.c.bf16 %v395, %v394
    %v405 = vpack.c.bf16 %v397, %v396
    %v414 = vunpack.c.l.b16 %v398
    %v415 = vunpack.c.h.b16 %v398
    %v416 = vunpack.c.l.b16 %v399
    %v417 = vunpack.c.h.b16 %v399
    %v418 = vunpack.c.l.b16 %v400
    %v419 = vunpack.c.h.b16 %v400
    %v420 = vunpack.c.l.b16 %v401
    %v421 = vunpack.c.h.b16 %v401
    %v422 = vunpack.c.l.b16 %v402
    %v423 = vunpack.c.h.b16 %v402
    %v424 = vunpack.c.l.b16 %v403
    %v425 = vunpack.c.h.b16 %v403
    %v426 = vunpack.c.l.b16 %v404
    %v427 = vunpack.c.h.b16 %v404
    %v428 = vunpack.c.l.b16 %v405
    %v429 = vunpack.c.h.b16 %v405
    %v430 = vpack.c.b16 %v414, %v414
    %v431 = vpack.c.b16 %v415, %v415
    %v432 = vpack.c.b16 %v416, %v416
    %v433 = vpack.c.b16 %v417, %v417
    %v434 = vpack.c.b16 %v418, %v418
    %v435 = vpack.c.b16 %v419, %v419
    %v436 = vpack.c.b16 %v420, %v420
    %v437 = vpack.c.b16 %v421, %v421
    %v438 = vpack.c.b16 %v422, %v422
    %v439 = vpack.c.b16 %v423, %v423
    %v440 = vpack.c.b16 %v424, %v424
    %v441 = vpack.c.b16 %v425, %v425
    %v442 = vpack.c.b16 %v426, %v426
    %v443 = vpack.c.b16 %v427, %v427
    %v444 = vpack.c.b16 %v428, %v428
    %v445 = vpack.c.b16 %v429, %v429
    %462 = vst [vmem:[%s3] sm:$0xf] %v430
    %463 = vst [vmem:[%s3 + $0x4] sm:$0xf] %v431
    %464 = vst [vmem:[%s3 + $0x8] sm:$0xf] %v432
    %465 = vst [vmem:[%s3 + $0xc] sm:$0xf] %v433
    %466 = vst [vmem:[%s3 + $0x10] sm:$0xf] %v434
    %467 = vst [vmem:[%s3 + $0x14] sm:$0xf] %v435
    %468 = vst [vmem:[%s3 + $0x18] sm:$0xf] %v436
    %469 = vst [vmem:[%s3 + $0x1c] sm:$0xf] %v437
    %470 = vst [vmem:[%s3 + $0x20] sm:$0xf] %v438
    %471 = vst [vmem:[%s3 + $0x24] sm:$0xf] %v439
    %472 = vst [vmem:[%s3 + $0x28] sm:$0xf] %v440
    %473 = vst [vmem:[%s3 + $0x2c] sm:$0xf] %v441
    %474 = vst [vmem:[%s3 + $0x30] sm:$0xf] %v442
    %475 = vst [vmem:[%s3 + $0x34] sm:$0xf] %v443
    %476 = vst [vmem:[%s3 + $0x38] sm:$0xf] %v444
    %477 = vst [vmem:[%s3 + $0x3c] sm:$0xf] %v445
  $region21: #{_stage_forward.6} parent=0 // pred_fallthru
    _
  // Predicated region
  $region22: #{_stage_forward.6} parent=0 // pred_check
    _
  $region23: #{_stage_forward.6} parent=0 // pred_check_branch
    %479 = sbr.rel (0) target = $region25
  $region24: #{_stage_forward.6} parent=0 // pred_region
    _
  $region25: #{_stage_forward.6} parent=0 // pred_fallthru
    _
  // Predicated region
  $region26: #{_stage_forward.6} parent=0 // pred_check
    _
  $region27: #{_stage_forward.6} parent=0 // pred_check_branch
    %481 = sbr.rel (0) target = $region29
  $region28: #{_stage_forward.6} parent=0 // pred_region
    _
  $region29: #{_stage_forward.6} parent=0 // pred_fallthru
    _

// kernel: _stage_forward.7
$region0: #{_stage_forward.7}
  #allocation0 [shape = 'u32[]', space=smem, size = 0x4, offset = 0x4, fixed_abs, tag = 'smem constant byte address 0x4 - core index']
  #allocation1 [shape = 'u32[144,128]{1,0:T(1,128)}', space=vmem, size = 0x12000, scoped, tag = 'internal scratch']
  #allocation2 [shape = 'f32[32,128]{1,0:T(8,128)}', space=vmem, size = 0x4000, scoped, tag = 'scratch operand']
  %s0 = inlined_call_operand.vmem [shape: bf16[32,256], index: 0, kind: input, shape index: {}]
  %s1 = inlined_call_operand.vmem [shape: bf16[256,128], index: 1, kind: input, shape index: {}]
  %s2 = inlined_call_operand.vmem [shape: f32[1,128], index: 2, kind: input, shape index: {}]
  %s3 = inlined_call_operand.vmem [shape: bf16[32,128], index: 3, kind: output, shape index: {}]
  %s4 = sld [smem:[#allocation0]]
  $region30: #{_stage_forward.7} parent=0
    _
  %s6 = ssub.s32 1, %s4
  %s7 = scalar_select 0, %s6, %s4
  // Predicated region
  $region2: #{_stage_forward.7} parent=0 // pred_check
    _
  $region3: #{_stage_forward.7} parent=0 // pred_check_branch
    %9 = sbr.rel (0) target = $region5
  $region4: #{_stage_forward.7} parent=0 // pred_region
    _
  $region5: #{_stage_forward.7} parent=0 // pred_fallthru
    _
  // Predicated region
  $region6: #{_stage_forward.7} parent=0 // pred_check
    _
  $region7: #{_stage_forward.7} parent=0 // pred_check_branch
    %11 = sbr.rel (0) target = $region9
  $region8: #{_stage_forward.7} parent=0 // pred_region
    _
  $region9: #{_stage_forward.7} parent=0 // pred_fallthru
    _
  // Predicated region
  $region10: #{_stage_forward.7} parent=0 // pred_check
    _
  $region11: #{_stage_forward.7} parent=0 // pred_check_branch
    %13 = sbr.rel (0) target = $region13
  $region12: #{_stage_forward.7} parent=0 // pred_region
    _
  $region13: #{_stage_forward.7} parent=0 // pred_fallthru
    _
  %p15 = scmp.eq.s32.totalorder 0, 0
  // Predicated region
  $region14: #{_stage_forward.7} parent=0 // pred_check
    %p16 = pneg %p15
  $region15: #{_stage_forward.7} parent=0 // pred_check_branch
    %18 = sbr.rel (%p16) target = $region17
  $region16: #{_stage_forward.7} parent=0 // pred_region
    %19 = vst [vmem:[#allocation2] sm:$0xff] 0.0
    %20 = vst [vmem:[#allocation2 + $0x8] sm:$0xff] 0.0
    %21 = vst [vmem:[#allocation2 + $0x10] sm:$0xff] 0.0
    %22 = vst [vmem:[#allocation2 + $0x18] sm:$0xff] 0.0
  $region17: #{_stage_forward.7} parent=0 // pred_fallthru
    _
  %v23 = vld [vmem:[#allocation2] sm:$0xff]
  %v24 = vld [vmem:[#allocation2 + $0x8] sm:$0xff]
  %v25 = vld [vmem:[#allocation2 + $0x10] sm:$0xff]
  %v26 = vld [vmem:[#allocation2 + $0x18] sm:$0xff]
  %v27 = vld [vmem:[%s0] sm:$0xff]
  %v28 = vld [vmem:[%s0 + $0x8] sm:$0xff]
  %v29 = vld [vmem:[%s0 + $0x10] sm:$0xff]
  %v30 = vld [vmem:[%s0 + $0x18] sm:$0xff]
  %v31 = vld [vmem:[%s1] sm:$0xf]
  %v32 = vld [vmem:[%s1 + $0x4] sm:$0xf]
  %v33 = vld [vmem:[%s1 + $0x8] sm:$0xf]
  %v34 = vld [vmem:[%s1 + $0xc] sm:$0xf]
  %v35 = vld [vmem:[%s1 + $0x10] sm:$0xf]
  %v36 = vld [vmem:[%s1 + $0x14] sm:$0xf]
  %v37 = vld [vmem:[%s1 + $0x18] sm:$0xf]
  %v38 = vld [vmem:[%s1 + $0x1c] sm:$0xf]
  %v39 = vld [vmem:[%s1 + $0x20] sm:$0xf]
  %v40 = vld [vmem:[%s1 + $0x24] sm:$0xf]
  %v41 = vld [vmem:[%s1 + $0x28] sm:$0xf]
  %v42 = vld [vmem:[%s1 + $0x2c] sm:$0xf]
  %v43 = vld [vmem:[%s1 + $0x30] sm:$0xf]
  %v44 = vld [vmem:[%s1 + $0x34] sm:$0xf]
  %v45 = vld [vmem:[%s1 + $0x38] sm:$0xf]
  %v46 = vld [vmem:[%s1 + $0x3c] sm:$0xf]
  %v47 = vld [vmem:[%s1 + $0x40] sm:$0xf]
  %v48 = vld [vmem:[%s1 + $0x44] sm:$0xf]
  %v49 = vld [vmem:[%s1 + $0x48] sm:$0xf]
  %v50 = vld [vmem:[%s1 + $0x4c] sm:$0xf]
  %v51 = vld [vmem:[%s1 + $0x50] sm:$0xf]
  %v52 = vld [vmem:[%s1 + $0x54] sm:$0xf]
  %v53 = vld [vmem:[%s1 + $0x58] sm:$0xf]
  %v54 = vld [vmem:[%s1 + $0x5c] sm:$0xf]
  %v55 = vld [vmem:[%s1 + $0x60] sm:$0xf]
  %v56 = vld [vmem:[%s1 + $0x64] sm:$0xf]
  %v57 = vld [vmem:[%s1 + $0x68] sm:$0xf]
  %v58 = vld [vmem:[%s1 + $0x6c] sm:$0xf]
  %v59 = vld [vmem:[%s1 + $0x70] sm:$0xf]
  %v60 = vld [vmem:[%s1 + $0x74] sm:$0xf]
  %v61 = vld [vmem:[%s1 + $0x78] sm:$0xf]
  %v62 = vld [vmem:[%s1 + $0x7c] sm:$0xf]
  %v67 = vunpack.c.l.b16 %v27
  %v68 = vunpack.c.h.b16 %v27
  %v69 = vunpack.c.l.b16 %v28
  %v70 = vunpack.c.h.b16 %v28
  %v71 = vunpack.c.l.b16 %v29
  %v72 = vunpack.c.h.b16 %v29
  %v73 = vunpack.c.l.b16 %v30
  %v74 = vunpack.c.h.b16 %v30
  %v75 = vpack.c.b16 %v69, %v67
  %v76 = vpack.c.b16 %v70, %v68
  %v77 = vpack.c.b16 %v73, %v71
  %v78 = vpack.c.b16 %v74, %v72
  %v115 = vunpack.c.l.b16 %v31
  %v116 = vunpack.c.l.b16 %v32
  %v117 = vunpack.c.l.b16 %v33
  %v118 = vunpack.c.l.b16 %v34
  %v119 = vunpack.c.l.b16 %v35
  %v120 = vunpack.c.l.b16 %v36
  %v121 = vunpack.c.l.b16 %v37
  %v122 = vunpack.c.l.b16 %v38
  %v123 = vunpack.c.l.b16 %v39
  %v124 = vunpack.c.l.b16 %v40
  %v125 = vunpack.c.l.b16 %v41
  %v126 = vunpack.c.l.b16 %v42
  %v127 = vunpack.c.l.b16 %v43
  %v128 = vunpack.c.l.b16 %v44
  %v129 = vunpack.c.l.b16 %v45
  %v130 = vunpack.c.l.b16 %v46
  %v131 = vunpack.c.l.b16 %v47
  %v132 = vunpack.c.l.b16 %v48
  %v133 = vunpack.c.l.b16 %v49
  %v134 = vunpack.c.l.b16 %v50
  %v135 = vunpack.c.l.b16 %v51
  %v136 = vunpack.c.l.b16 %v52
  %v137 = vunpack.c.l.b16 %v53
  %v138 = vunpack.c.l.b16 %v54
  %v139 = vunpack.c.l.b16 %v55
  %v140 = vunpack.c.l.b16 %v56
  %v141 = vunpack.c.l.b16 %v57
  %v142 = vunpack.c.l.b16 %v58
  %v143 = vunpack.c.l.b16 %v59
  %v144 = vunpack.c.l.b16 %v60
  %v145 = vunpack.c.l.b16 %v61
  %v146 = vunpack.c.l.b16 %v62
  %v147 = vpack.c.b16 %v116, %v115
  %v148 = vpack.c.b16 %v118, %v117
  %v149 = vpack.c.b16 %v120, %v119
  %v150 = vpack.c.b16 %v122, %v121
  %v151 = vpack.c.b16 %v124, %v123
  %v152 = vpack.c.b16 %v126, %v125
  %v153 = vpack.c.b16 %v128, %v127
  %v154 = vpack.c.b16 %v130, %v129
  %v155 = vpack.c.b16 %v132, %v131
  %v156 = vpack.c.b16 %v134, %v133
  %v157 = vpack.c.b16 %v136, %v135
  %v158 = vpack.c.b16 %v138, %v137
  %v159 = vpack.c.b16 %v140, %v139
  %v160 = vpack.c.b16 %v142, %v141
  %v161 = vpack.c.b16 %v144, %v143
  %v162 = vpack.c.b16 %v146, %v145
  %179 = vmatprep.subr.bf16.mxu0 0
  %180 = vmatpush1.bf16.msra.mxu0 %v154
  %181 = vmatprep.subr.bf16.mxu0 0
  %182 = vmatpush1.bf16.msra.mxu0 %v153
  %183 = vmatprep.subr.bf16.mxu0 0
  %184 = vmatpush1.bf16.msra.mxu0 %v152
  %185 = vmatprep.subr.bf16.mxu0 0
  %186 = vmatpush1.bf16.msra.mxu0 %v151
  %187 = vmatprep.subr.bf16.mxu0 0
  %188 = vmatpush1.bf16.msra.mxu0 %v150
  %189 = vmatprep.subr.bf16.mxu0 0
  %190 = vmatpush1.bf16.msra.mxu0 %v149
  %191 = vmatprep.subr.bf16.mxu0 0
  %192 = vmatpush1.bf16.msra.mxu0 %v148
  %193 = vmatprep.subr.bf16.mxu0 0
  %194 = vmatpush1.bf16.msra.mxu0 %v147
  %195 = vmatprep.subr.bf16.mxu0 0
  %196 = vmatpush2.bf16.msra.mxu0 %v162
  %197 = vmatprep.subr.bf16.mxu0 0
  %198 = vmatpush2.bf16.msra.mxu0 %v161
  %199 = vmatprep.subr.bf16.mxu0 0
  %200 = vmatpush2.bf16.msra.mxu0 %v160
  %201 = vmatprep.subr.bf16.mxu0 0
  %202 = vmatpush2.bf16.msra.mxu0 %v159
  %203 = vmatprep.subr.bf16.mxu0 0
  %204 = vmatpush2.bf16.msra.mxu0 %v158
  %205 = vmatprep.subr.bf16.mxu0 0
  %206 = vmatpush2.bf16.msra.mxu0 %v157
  %207 = vmatprep.subr.bf16.mxu0 0
  %208 = vmatpush2.bf16.msra.mxu0 %v156
  %209 = vmatprep.subr.bf16.mxu0 0
  %210 = vmatpush2.bf16.msra.mxu0 %v155
  %211 = vmatprep.mubr.bf16.mxu0 %v76
  %212 = vmatmul.mubr.bf16.gmra.mxu0 %v75
  %v213 = vpop.f32.mrf.mxu0
  %v214 = vadd.f32 0.0, %v213
  %v215 = vpop.f32.mrf.mxu0
  %v216 = vpop.f32.mrf.mxu0
  %v217 = vadd.f32 0.0, %v216
  %v218 = vpop.f32.mrf.mxu0
  %219 = vmatprep.mubr.bf16.mxu0 %v78
  %220 = vmatmul.mubr.bf16.gmra.mxu0 %v77
  %v221 = vpop.f32.mrf.mxu0
  %v222 = vadd.f32 0.0, %v221
  %v223 = vpop.f32.mrf.mxu0
  %v224 = vpop.f32.mrf.mxu0
  %v225 = vadd.f32 0.0, %v224
  %v226 = vpop.f32.mrf.mxu0
  %227 = vdwg.mxu0
  %v228 = vadd.f32 %v23, %v214
  %v229 = vadd.f32 %v24, %v217
  %v230 = vadd.f32 %v25, %v222
  %v231 = vadd.f32 %v26, %v225
  %232 = vst [vmem:[#allocation2] sm:$0xff] %v228
  %233 = vst [vmem:[#allocation2 + $0x8] sm:$0xff] %v229
  %234 = vst [vmem:[#allocation2 + $0x10] sm:$0xff] %v230
  %235 = vst [vmem:[#allocation2 + $0x18] sm:$0xff] %v231
  // Predicated region
  $region18: #{_stage_forward.7} parent=0 // pred_check
    %p236 = pneg %p15
  $region19: #{_stage_forward.7} parent=0 // pred_check_branch
    %238 = sbr.rel (%p236) target = $region21
  $region20: #{_stage_forward.7} parent=0 // pred_region
    %v239 = vld [vmem:[#allocation2] sm:$0xff]
    %v240 = vld [vmem:[#allocation2 + $0x8] sm:$0xff]
    %v241 = vld [vmem:[#allocation2 + $0x10] sm:$0xff]
    %v242 = vld [vmem:[#allocation2 + $0x18] sm:$0xff]
    %v243 = vld [vmem:[%s2] sm:$0x1]
    %v245 = vlaneseq
    %v246 = vshrl.u32 %v245, 7
    %v247 = vsub.s32 0, %v246
    %v248 = vrot.slane %v243, %v247
    %v250 = vadd.f32 %v239, %v248
    %v251 = vadd.f32 %v240, %v248
    %v252 = vadd.f32 %v241, %v248
    %v253 = vadd.f32 %v242, %v248
    %vm254 = vcmp.ge.f32.partialorder %v250, 0.0
    %vm255 = vcmp.ge.f32.partialorder %v251, 0.0
    %vm256 = vcmp.ge.f32.partialorder %v252, 0.0
    %vm257 = vcmp.ge.f32.partialorder %v253, 0.0
    %v258 = vmul.f32 %v250, 0.2
    %v259 = vmul.f32 %v251, 0.2
    %v260 = vmul.f32 %v252, 0.2
    %v261 = vmul.f32 %v253, 0.2
    %v262 = vsel %vm254, %v250, %v258
    %v263 = vsel %vm255, %v251, %v259
    %v264 = vsel %vm256, %v252, %v260
    %v265 = vsel %vm257, %v253, %v261
    %v266 = vpack.c.bf16 %v263, %v262
    %v267 = vpack.c.bf16 %v265, %v264
    %v270 = vunpack.c.l.b16 %v266
    %v271 = vunpack.c.h.b16 %v266
    %v272 = vunpack.c.l.b16 %v267
    %v273 = vunpack.c.h.b16 %v267
    %v274 = vpack.c.b16 %v270, %v270
    %v275 = vpack.c.b16 %v271, %v271
    %v276 = vpack.c.b16 %v272, %v272
    %v277 = vpack.c.b16 %v273, %v273
    %282 = vst [vmem:[%s3] sm:$0xf] %v274
    %283 = vst [vmem:[%s3 + $0x4] sm:$0xf] %v275
    %284 = vst [vmem:[%s3 + $0x8] sm:$0xf] %v276
    %285 = vst [vmem:[%s3 + $0xc] sm:$0xf] %v277
  $region21: #{_stage_forward.7} parent=0 // pred_fallthru
    _
  // Predicated region
  $region22: #{_stage_forward.7} parent=0 // pred_check
    _
  $region23: #{_stage_forward.7} parent=0 // pred_check_branch
    %287 = sbr.rel (0) target = $region25
  $region24: #{_stage_forward.7} parent=0 // pred_region
    _
  $region25: #{_stage_forward.7} parent=0 // pred_fallthru
    _
  // Predicated region
  $region26: #{_stage_forward.7} parent=0 // pred_check
    _
  $region27: #{_stage_forward.7} parent=0 // pred_check_branch
    %289 = sbr.rel (0) target = $region29
  $region28: #{_stage_forward.7} parent=0 // pred_region
    _
  $region29: #{_stage_forward.7} parent=0 // pred_fallthru
    _

// kernel: _stage_forward.8
$region0: #{_stage_forward.8}
  #allocation0 [shape = 'u32[]', space=smem, size = 0x4, offset = 0x4, fixed_abs, tag = 'smem constant byte address 0x4 - core index']
  #allocation1 [shape = 'u32[144,128]{1,0:T(1,128)}', space=vmem, size = 0x12000, scoped, tag = 'internal scratch']
  #allocation2 [shape = 'f32[16,128]{1,0:T(8,128)}', space=vmem, size = 0x2000, scoped, tag = 'scratch operand']
  %s0 = inlined_call_operand.vmem [shape: bf16[16,512], index: 0, kind: input, shape index: {}]
  %s1 = inlined_call_operand.vmem [shape: bf16[512,128], index: 1, kind: input, shape index: {}]
  %s2 = inlined_call_operand.vmem [shape: f32[1,128], index: 2, kind: input, shape index: {}]
  %s3 = inlined_call_operand.vmem [shape: bf16[16,128], index: 3, kind: output, shape index: {}]
  %s4 = sld [smem:[#allocation0]]
  $region30: #{_stage_forward.8} parent=0
    _
  %s6 = ssub.s32 1, %s4
  %s7 = scalar_select 0, %s6, %s4
  // Predicated region
  $region2: #{_stage_forward.8} parent=0 // pred_check
    _
  $region3: #{_stage_forward.8} parent=0 // pred_check_branch
    %9 = sbr.rel (0) target = $region5
  $region4: #{_stage_forward.8} parent=0 // pred_region
    _
  $region5: #{_stage_forward.8} parent=0 // pred_fallthru
    _
  // Predicated region
  $region6: #{_stage_forward.8} parent=0 // pred_check
    _
  $region7: #{_stage_forward.8} parent=0 // pred_check_branch
    %11 = sbr.rel (0) target = $region9
  $region8: #{_stage_forward.8} parent=0 // pred_region
    _
  $region9: #{_stage_forward.8} parent=0 // pred_fallthru
    _
  // Predicated region
  $region10: #{_stage_forward.8} parent=0 // pred_check
    _
  $region11: #{_stage_forward.8} parent=0 // pred_check_branch
    %13 = sbr.rel (0) target = $region13
  $region12: #{_stage_forward.8} parent=0 // pred_region
    _
  $region13: #{_stage_forward.8} parent=0 // pred_fallthru
    _
  %p15 = scmp.eq.s32.totalorder 0, 0
  // Predicated region
  $region14: #{_stage_forward.8} parent=0 // pred_check
    %p16 = pneg %p15
  $region15: #{_stage_forward.8} parent=0 // pred_check_branch
    %18 = sbr.rel (%p16) target = $region17
  $region16: #{_stage_forward.8} parent=0 // pred_region
    %19 = vst [vmem:[#allocation2] sm:$0xff] 0.0
    %20 = vst [vmem:[#allocation2 + $0x8] sm:$0xff] 0.0
  $region17: #{_stage_forward.8} parent=0 // pred_fallthru
    _
  %v21 = vld [vmem:[#allocation2] sm:$0xff]
  %v22 = vld [vmem:[#allocation2 + $0x8] sm:$0xff]
  %v23 = vld [vmem:[%s0] sm:$0xff]
  %v24 = vld [vmem:[%s0 + $0x8] sm:$0xff]
  %v25 = vld [vmem:[%s0 + $0x10] sm:$0xff]
  %v26 = vld [vmem:[%s0 + $0x18] sm:$0xff]
  %v27 = vld [vmem:[%s1] sm:$0xf]
  %v28 = vld [vmem:[%s1 + $0x4] sm:$0xf]
  %v29 = vld [vmem:[%s1 + $0x8] sm:$0xf]
  %v30 = vld [vmem:[%s1 + $0xc] sm:$0xf]
  %v31 = vld [vmem:[%s1 + $0x10] sm:$0xf]
  %v32 = vld [vmem:[%s1 + $0x14] sm:$0xf]
  %v33 = vld [vmem:[%s1 + $0x18] sm:$0xf]
  %v34 = vld [vmem:[%s1 + $0x1c] sm:$0xf]
  %v35 = vld [vmem:[%s1 + $0x20] sm:$0xf]
  %v36 = vld [vmem:[%s1 + $0x24] sm:$0xf]
  %v37 = vld [vmem:[%s1 + $0x28] sm:$0xf]
  %v38 = vld [vmem:[%s1 + $0x2c] sm:$0xf]
  %v39 = vld [vmem:[%s1 + $0x30] sm:$0xf]
  %v40 = vld [vmem:[%s1 + $0x34] sm:$0xf]
  %v41 = vld [vmem:[%s1 + $0x38] sm:$0xf]
  %v42 = vld [vmem:[%s1 + $0x3c] sm:$0xf]
  %v43 = vld [vmem:[%s1 + $0x40] sm:$0xf]
  %v44 = vld [vmem:[%s1 + $0x44] sm:$0xf]
  %v45 = vld [vmem:[%s1 + $0x48] sm:$0xf]
  %v46 = vld [vmem:[%s1 + $0x4c] sm:$0xf]
  %v47 = vld [vmem:[%s1 + $0x50] sm:$0xf]
  %v48 = vld [vmem:[%s1 + $0x54] sm:$0xf]
  %v49 = vld [vmem:[%s1 + $0x58] sm:$0xf]
  %v50 = vld [vmem:[%s1 + $0x5c] sm:$0xf]
  %v51 = vld [vmem:[%s1 + $0x60] sm:$0xf]
  %v52 = vld [vmem:[%s1 + $0x64] sm:$0xf]
  %v53 = vld [vmem:[%s1 + $0x68] sm:$0xf]
  %v54 = vld [vmem:[%s1 + $0x6c] sm:$0xf]
  %v55 = vld [vmem:[%s1 + $0x70] sm:$0xf]
  %v56 = vld [vmem:[%s1 + $0x74] sm:$0xf]
  %v57 = vld [vmem:[%s1 + $0x78] sm:$0xf]
  %v58 = vld [vmem:[%s1 + $0x7c] sm:$0xf]
  %v59 = vld [vmem:[%s1 + $0x80] sm:$0xf]
  %v60 = vld [vmem:[%s1 + $0x84] sm:$0xf]
  %v61 = vld [vmem:[%s1 + $0x88] sm:$0xf]
  %v62 = vld [vmem:[%s1 + $0x8c] sm:$0xf]
  %v63 = vld [vmem:[%s1 + $0x90] sm:$0xf]
  %v64 = vld [vmem:[%s1 + $0x94] sm:$0xf]
  %v65 = vld [vmem:[%s1 + $0x98] sm:$0xf]
  %v66 = vld [vmem:[%s1 + $0x9c] sm:$0xf]
  %v67 = vld [vmem:[%s1 + $0xa0] sm:$0xf]
  %v68 = vld [vmem:[%s1 + $0xa4] sm:$0xf]
  %v69 = vld [vmem:[%s1 + $0xa8] sm:$0xf]
  %v70 = vld [vmem:[%s1 + $0xac] sm:$0xf]
  %v71 = vld [vmem:[%s1 + $0xb0] sm:$0xf]
  %v72 = vld [vmem:[%s1 + $0xb4] sm:$0xf]
  %v73 = vld [vmem:[%s1 + $0xb8] sm:$0xf]
  %v74 = vld [vmem:[%s1 + $0xbc] sm:$0xf]
  %v75 = vld [vmem:[%s1 + $0xc0] sm:$0xf]
  %v76 = vld [vmem:[%s1 + $0xc4] sm:$0xf]
  %v77 = vld [vmem:[%s1 + $0xc8] sm:$0xf]
  %v78 = vld [vmem:[%s1 + $0xcc] sm:$0xf]
  %v79 = vld [vmem:[%s1 + $0xd0] sm:$0xf]
  %v80 = vld [vmem:[%s1 + $0xd4] sm:$0xf]
  %v81 = vld [vmem:[%s1 + $0xd8] sm:$0xf]
  %v82 = vld [vmem:[%s1 + $0xdc] sm:$0xf]
  %v83 = vld [vmem:[%s1 + $0xe0] sm:$0xf]
  %v84 = vld [vmem:[%s1 + $0xe4] sm:$0xf]
  %v85 = vld [vmem:[%s1 + $0xe8] sm:$0xf]
  %v86 = vld [vmem:[%s1 + $0xec] sm:$0xf]
  %v87 = vld [vmem:[%s1 + $0xf0] sm:$0xf]
  %v88 = vld [vmem:[%s1 + $0xf4] sm:$0xf]
  %v89 = vld [vmem:[%s1 + $0xf8] sm:$0xf]
  %v90 = vld [vmem:[%s1 + $0xfc] sm:$0xf]
  %v95 = vunpack.c.l.b16 %v23
  %v96 = vunpack.c.h.b16 %v23
  %v97 = vunpack.c.l.b16 %v24
  %v98 = vunpack.c.h.b16 %v24
  %v99 = vunpack.c.l.b16 %v25
  %v100 = vunpack.c.h.b16 %v25
  %v101 = vunpack.c.l.b16 %v26
  %v102 = vunpack.c.h.b16 %v26
  %v103 = vpack.c.b16 %v99, %v95
  %v104 = vpack.c.b16 %v100, %v96
  %v105 = vpack.c.b16 %v101, %v97
  %v106 = vpack.c.b16 %v102, %v98
  %v175 = vunpack.c.l.b16 %v27
  %v176 = vunpack.c.l.b16 %v28
  %v177 = vunpack.c.l.b16 %v29
  %v178 = vunpack.c.l.b16 %v30
  %v179 = vunpack.c.l.b16 %v31
  %v180 = vunpack.c.l.b16 %v32
  %v181 = vunpack.c.l.b16 %v33
  %v182 = vunpack.c.l.b16 %v34
  %v183 = vunpack.c.l.b16 %v35
  %v184 = vunpack.c.l.b16 %v36
  %v185 = vunpack.c.l.b16 %v37
  %v186 = vunpack.c.l.b16 %v38
  %v187 = vunpack.c.l.b16 %v39
  %v188 = vunpack.c.l.b16 %v40
  %v189 = vunpack.c.l.b16 %v41
  %v190 = vunpack.c.l.b16 %v42
  %v191 = vunpack.c.l.b16 %v43
  %v192 = vunpack.c.l.b16 %v44
  %v193 = vunpack.c.l.b16 %v45
  %v194 = vunpack.c.l.b16 %v46
  %v195 = vunpack.c.l.b16 %v47
  %v196 = vunpack.c.l.b16 %v48
  %v197 = vunpack.c.l.b16 %v49
  %v198 = vunpack.c.l.b16 %v50
  %v199 = vunpack.c.l.b16 %v51
  %v200 = vunpack.c.l.b16 %v52
  %v201 = vunpack.c.l.b16 %v53
  %v202 = vunpack.c.l.b16 %v54
  %v203 = vunpack.c.l.b16 %v55
  %v204 = vunpack.c.l.b16 %v56
  %v205 = vunpack.c.l.b16 %v57
  %v206 = vunpack.c.l.b16 %v58
  %v207 = vunpack.c.l.b16 %v59
  %v208 = vunpack.c.l.b16 %v60
  %v209 = vunpack.c.l.b16 %v61
  %v210 = vunpack.c.l.b16 %v62
  %v211 = vunpack.c.l.b16 %v63
  %v212 = vunpack.c.l.b16 %v64
  %v213 = vunpack.c.l.b16 %v65
  %v214 = vunpack.c.l.b16 %v66
  %v215 = vunpack.c.l.b16 %v67
  %v216 = vunpack.c.l.b16 %v68
  %v217 = vunpack.c.l.b16 %v69
  %v218 = vunpack.c.l.b16 %v70
  %v219 = vunpack.c.l.b16 %v71
  %v220 = vunpack.c.l.b16 %v72
  %v221 = vunpack.c.l.b16 %v73
  %v222 = vunpack.c.l.b16 %v74
  %v223 = vunpack.c.l.b16 %v75
  %v224 = vunpack.c.l.b16 %v76
  %v225 = vunpack.c.l.b16 %v77
  %v226 = vunpack.c.l.b16 %v78
  %v227 = vunpack.c.l.b16 %v79
  %v228 = vunpack.c.l.b16 %v80
  %v229 = vunpack.c.l.b16 %v81
  %v230 = vunpack.c.l.b16 %v82
  %v231 = vunpack.c.l.b16 %v83
  %v232 = vunpack.c.l.b16 %v84
  %v233 = vunpack.c.l.b16 %v85
  %v234 = vunpack.c.l.b16 %v86
  %v235 = vunpack.c.l.b16 %v87
  %v236 = vunpack.c.l.b16 %v88
  %v237 = vunpack.c.l.b16 %v89
  %v238 = vunpack.c.l.b16 %v90
  %v239 = vpack.c.b16 %v176, %v175
  %v240 = vpack.c.b16 %v178, %v177
  %v241 = vpack.c.b16 %v180, %v179
  %v242 = vpack.c.b16 %v182, %v181
  %v243 = vpack.c.b16 %v184, %v183
  %v244 = vpack.c.b16 %v186, %v185
  %v245 = vpack.c.b16 %v188, %v187
  %v246 = vpack.c.b16 %v190, %v189
  %v247 = vpack.c.b16 %v192, %v191
  %v248 = vpack.c.b16 %v194, %v193
  %v249 = vpack.c.b16 %v196, %v195
  %v250 = vpack.c.b16 %v198, %v197
  %v251 = vpack.c.b16 %v200, %v199
  %v252 = vpack.c.b16 %v202, %v201
  %v253 = vpack.c.b16 %v204, %v203
  %v254 = vpack.c.b16 %v206, %v205
  %v255 = vpack.c.b16 %v208, %v207
  %v256 = vpack.c.b16 %v210, %v209
  %v257 = vpack.c.b16 %v212, %v211
  %v258 = vpack.c.b16 %v214, %v213
  %v259 = vpack.c.b16 %v216, %v215
  %v260 = vpack.c.b16 %v218, %v217
  %v261 = vpack.c.b16 %v220, %v219
  %v262 = vpack.c.b16 %v222, %v221
  %v263 = vpack.c.b16 %v224, %v223
  %v264 = vpack.c.b16 %v226, %v225
  %v265 = vpack.c.b16 %v228, %v227
  %v266 = vpack.c.b16 %v230, %v229
  %v267 = vpack.c.b16 %v232, %v231
  %v268 = vpack.c.b16 %v234, %v233
  %v269 = vpack.c.b16 %v236, %v235
  %v270 = vpack.c.b16 %v238, %v237
  %303 = vmatprep.subr.bf16.mxu0 0
  %304 = vmatpush1.bf16.msra.mxu0 %v246
  %305 = vmatprep.subr.bf16.mxu0 0
  %306 = vmatpush1.bf16.msra.mxu0 %v245
  %307 = vmatprep.subr.bf16.mxu0 0
  %308 = vmatpush1.bf16.msra.mxu0 %v244
  %309 = vmatprep.subr.bf16.mxu0 0
  %310 = vmatpush1.bf16.msra.mxu0 %v243
  %311 = vmatprep.subr.bf16.mxu0 0
  %312 = vmatpush1.bf16.msra.mxu0 %v242
  %313 = vmatprep.subr.bf16.mxu0 0
  %314 = vmatpush1.bf16.msra.mxu0 %v241
  %315 = vmatprep.subr.bf16.mxu0 0
  %316 = vmatpush1.bf16.msra.mxu0 %v240
  %317 = vmatprep.subr.bf16.mxu0 0
  %318 = vmatpush1.bf16.msra.mxu0 %v239
  %319 = vmatprep.subr.bf16.mxu0 0
  %320 = vmatpush2.bf16.msra.mxu0 %v254
  %321 = vmatprep.subr.bf16.mxu0 0
  %322 = vmatpush2.bf16.msra.mxu0 %v253
  %323 = vmatprep.subr.bf16.mxu0 0
  %324 = vmatpush2.bf16.msra.mxu0 %v252
  %325 = vmatprep.subr.bf16.mxu0 0
  %326 = vmatpush2.bf16.msra.mxu0 %v251
  %327 = vmatprep.subr.bf16.mxu0 0
  %328 = vmatpush2.bf16.msra.mxu0 %v250
  %329 = vmatprep.subr.bf16.mxu0 0
  %330 = vmatpush2.bf16.msra.mxu0 %v249
  %331 = vmatprep.subr.bf16.mxu0 0
  %332 = vmatpush2.bf16.msra.mxu0 %v248
  %333 = vmatprep.subr.bf16.mxu0 0
  %334 = vmatpush2.bf16.msra.mxu0 %v247
  %335 = vmatprep.mubr.bf16.mxu0 %v104
  %336 = vmatmul.mubr.bf16.gmra.mxu0 %v103
  %v337 = vpop.f32.mrf.mxu0
  %v338 = vadd.f32 0.0, %v337
  %v339 = vpop.f32.mrf.mxu0
  %v340 = vpop.f32.mrf.mxu0
  %v341 = vadd.f32 0.0, %v340
  %v342 = vpop.f32.mrf.mxu0
  %343 = vdwg.mxu0
  %344 = vmatprep.subr.bf16.mxu0 0
  %345 = vmatpush1.bf16.msra.mxu0 %v262
  %346 = vmatprep.subr.bf16.mxu0 0
  %347 = vmatpush1.bf16.msra.mxu0 %v261
  %348 = vmatprep.subr.bf16.mxu0 0
  %349 = vmatpush1.bf16.msra.mxu0 %v260
  %350 = vmatprep.subr.bf16.mxu0 0
  %351 = vmatpush1.bf16.msra.mxu0 %v259
  %352 = vmatprep.subr.bf16.mxu0 0
  %353 = vmatpush1.bf16.msra.mxu0 %v258
  %354 = vmatprep.subr.bf16.mxu0 0
  %355 = vmatpush1.bf16.msra.mxu0 %v257
  %356 = vmatprep.subr.bf16.mxu0 0
  %357 = vmatpush1.bf16.msra.mxu0 %v256
  %358 = vmatprep.subr.bf16.mxu0 0
  %359 = vmatpush1.bf16.msra.mxu0 %v255
  %360 = vmatprep.subr.bf16.mxu0 0
  %361 = vmatpush2.bf16.msra.mxu0 %v270
  %362 = vmatprep.subr.bf16.mxu0 0
  %363 = vmatpush2.bf16.msra.mxu0 %v269
  %364 = vmatprep.subr.bf16.mxu0 0
  %365 = vmatpush2.bf16.msra.mxu0 %v268
  %366 = vmatprep.subr.bf16.mxu0 0
  %367 = vmatpush2.bf16.msra.mxu0 %v267
  %368 = vmatprep.subr.bf16.mxu0 0
  %369 = vmatpush2.bf16.msra.mxu0 %v266
  %370 = vmatprep.subr.bf16.mxu0 0
  %371 = vmatpush2.bf16.msra.mxu0 %v265
  %372 = vmatprep.subr.bf16.mxu0 0
  %373 = vmatpush2.bf16.msra.mxu0 %v264
  %374 = vmatprep.subr.bf16.mxu0 0
  %375 = vmatpush2.bf16.msra.mxu0 %v263
  %376 = vmatprep.mubr.bf16.mxu0 %v106
  %377 = vmatmul.mubr.bf16.gmra.mxu0 %v105
  %v378 = vpop.f32.mrf.mxu0
  %v379 = vadd.f32 %v338, %v378
  %v380 = vpop.f32.mrf.mxu0
  %v381 = vpop.f32.mrf.mxu0
  %v382 = vadd.f32 %v341, %v381
  %v383 = vpop.f32.mrf.mxu0
  %384 = vdwg.mxu0
  %v385 = vadd.f32 %v21, %v379
  %v386 = vadd.f32 %v22, %v382
  %387 = vst [vmem:[#allocation2] sm:$0xff] %v385
  %388 = vst [vmem:[#allocation2 + $0x8] sm:$0xff] %v386
  // Predicated region
  $region18: #{_stage_forward.8} parent=0 // pred_check
    %p389 = pneg %p15
  $region19: #{_stage_forward.8} parent=0 // pred_check_branch
    %391 = sbr.rel (%p389) target = $region21
  $region20: #{_stage_forward.8} parent=0 // pred_region
    %v392 = vld [vmem:[#allocation2] sm:$0xff]
    %v393 = vld [vmem:[#allocation2 + $0x8] sm:$0xff]
    %v394 = vld [vmem:[%s2] sm:$0x1]
    %v396 = vlaneseq
    %v397 = vshrl.u32 %v396, 7
    %v398 = vsub.s32 0, %v397
    %v399 = vrot.slane %v394, %v398
    %v401 = vadd.f32 %v392, %v399
    %v402 = vadd.f32 %v393, %v399
    %vm403 = vcmp.ge.f32.partialorder %v401, 0.0
    %vm404 = vcmp.ge.f32.partialorder %v402, 0.0
    %v405 = vmul.f32 %v401, 0.2
    %v406 = vmul.f32 %v402, 0.2
    %v407 = vsel %vm403, %v401, %v405
    %v408 = vsel %vm404, %v402, %v406
    %v409 = vpack.c.bf16 %v408, %v407
    %v411 = vunpack.c.l.b16 %v409
    %v412 = vunpack.c.h.b16 %v409
    %v413 = vpack.c.b16 %v411, %v411
    %v414 = vpack.c.b16 %v412, %v412
    %417 = vst [vmem:[%s3] sm:$0xf] %v413
    %418 = vst [vmem:[%s3 + $0x4] sm:$0xf] %v414
  $region21: #{_stage_forward.8} parent=0 // pred_fallthru
    _
  // Predicated region
  $region22: #{_stage_forward.8} parent=0 // pred_check
    _
  $region23: #{_stage_forward.8} parent=0 // pred_check_branch
    %420 = sbr.rel (0) target = $region25
  $region24: #{_stage_forward.8} parent=0 // pred_region
    _
  $region25: #{_stage_forward.8} parent=0 // pred_fallthru
    _
  // Predicated region
  $region26: #{_stage_forward.8} parent=0 // pred_check
    _
  $region27: #{_stage_forward.8} parent=0 // pred_check_branch
    %422 = sbr.rel (0) target = $region29
  $region28: #{_stage_forward.8} parent=0 // pred_region
    _
  $region29: #{_stage_forward.8} parent=0 // pred_fallthru
    _

// kernel: _stage_forward.9
$region0: #{_stage_forward.9}
  #allocation0 [shape = 'u32[]', space=smem, size = 0x4, offset = 0x4, fixed_abs, tag = 'smem constant byte address 0x4 - core index']
  #allocation1 [shape = 'u32[144,128]{1,0:T(1,128)}', space=vmem, size = 0x12000, scoped, tag = 'internal scratch']
  #allocation2 [shape = 'f32[16,128]{1,0:T(8,128)}', space=vmem, size = 0x2000, scoped, tag = 'scratch operand']
  %s0 = inlined_call_operand.vmem [shape: bf16[16,1024], index: 0, kind: input, shape index: {}]
  %s1 = inlined_call_operand.vmem [shape: bf16[1024,128], index: 1, kind: input, shape index: {}]
  %s2 = inlined_call_operand.vmem [shape: f32[1,128], index: 2, kind: input, shape index: {}]
  %s3 = inlined_call_operand.vmem [shape: f32[16,128], index: 3, kind: output, shape index: {}]
  %s4 = sld [smem:[#allocation0]]
  $region76: #{_stage_forward.9} parent=0
    _
  %s6 = ssub.s32 1, %s4
  %s7 = scalar_select 0, %s6, %s4
  $region1: #{_stage_forward.9} parent=0
    #allocation3 [shape = 'u8[32768]{0}', space=vmem, size = 0x8000, scoped, tag = 'input window, operand 0']
    loop: start=0, step=1, limit=4
    $region2: #{_stage_forward.9} parent=1 // loop_pre_header
      _
    $region3: #{_stage_forward.9} parent=1 // loop_header
      %s9 = sphi 0, %s13
      %p10 = scmp.ge.s32.totalorder %s9, 4
      %s16 = sphi 0, %s35
      %s17 = sphi 0, %s31
      %s18 = sphi 0, %s27
      %s19 = sphi 0, %s16
      %s20 = sphi 0, %s17
      %s21 = sphi 0, %s18
      %s22 = sphi 0, %s19
      %s23 = sphi 0, %s20
      %s24 = sphi 0, %s21
      %s40 = sphi 0, %s42
      %s43 = sphi 0, %s40
      %s44 = sphi 0, %s43
      %s60 = sphi 0, %s44
      %s68 = sphi 0, %s70
      %s71 = sphi 0, %s68
      %s72 = sphi 0, %s71
      %s88 = sphi 0, %s72
      %s94 = sphi 0, %s96
      %s97 = sphi 0, %s94
      %s98 = sphi 0, %s97
      %s114 = sphi 0, %s98
      %s122 = sphi 0, %s124
      %s125 = sphi 0, %s122
      %s126 = sphi 0, %s125
      %s142 = sphi 0, %s126
    $region4: #{_stage_forward.9} parent=1 // loop_header_branch
      %12 = sbr.rel (%p10) target = $region8
    $region5: #{_stage_forward.9} parent=1 // loop_body
      %s14 = ssub.s32 %s9, 1
      %s15 = ssub.s32 %s9, 2
      %s25 = sadd.s32 1, %s18
      %p26 = scmp.ge.s32.totalorder %s25, 2
      %s27 = scalar_select %p26, 0, %s25
      %s28 = sadd.s32 1, %s17
      %s29 = scalar_select %p26, %s28, %s17
      %p30 = scmp.ge.s32.totalorder %s29, 1
      %s31 = scalar_select %p30, 0, %s29
      %s32 = sadd.s32 1, %s16
      %s33 = scalar_select %p30, %s32, %s16
      %p34 = scmp.ge.s32.totalorder %s33, 1
      %s35 = scalar_select %p34, 0, %s33
      %s36 = ssub.s32 %s16, %s35
      %s37 = ssub.s32 %s18, %s27
      %s38 = sor.u32 %s36, %s37
      %p39 = scmp.eq.s32.totalorder %s38, 0
      %s41 = sadd.s32 %s40, 1
      %s42 = scalar_select %p39, %s40, %s41
      %p45 = pneg %p39
      %p46 = scmp.eq.s32.totalorder %s9, 1
      %p47 = por %p45, %p46
      %p48 = scmp.ne.s32.totalorder %s40, %s43
      %p49 = scmp.eq.s32.totalorder %s9, 0
      %p50 = por %p48, %p49
      %p51 = scmp.ne.s32.totalorder %s40, %s43
      %p52 = scmp.eq.s32.totalorder %s14, 1
      %p53 = por %p51, %p52
      %p54 = scmp.ne.s32.totalorder %s43, %s44
      %p55 = scmp.eq.s32.totalorder %s14, 0
      %p56 = por %p54, %p55
      %p57 = scmp.ne.s32.totalorder %s43, %s44
      %p58 = scmp.eq.s32.totalorder %s15, 1
      %p59 = por %p57, %p58
      %p61 = scmp.ne.s32.totalorder %s44, %s60
      %p62 = scmp.eq.s32.totalorder %s15, 0
      %p63 = por %p61, %p62
      %s64 = ssub.s32 %s18, %s27
      %s65 = ssub.s32 %s17, %s31
      %s66 = sor.u32 %s64, %s65
      %p67 = scmp.eq.s32.totalorder %s66, 0
      %s69 = sadd.s32 %s68, 1
      %s70 = scalar_select %p67, %s68, %s69
      %p73 = pneg %p67
      %p74 = scmp.eq.s32.totalorder %s9, 1
      %p75 = por %p73, %p74
      %p76 = scmp.ne.s32.totalorder %s68, %s71
      %p77 = scmp.eq.s32.totalorder %s9, 0
      %p78 = por %p76, %p77
      %p79 = scmp.ne.s32.totalorder %s68, %s71
      %p80 = scmp.eq.s32.totalorder %s14, 1
      %p81 = por %p79, %p80
      %p82 = scmp.ne.s32.totalorder %s71, %s72
      %p83 = scmp.eq.s32.totalorder %s14, 0
      %p84 = por %p82, %p83
      %p85 = scmp.ne.s32.totalorder %s71, %s72
      %p86 = scmp.eq.s32.totalorder %s15, 1
      %p87 = por %p85, %p86
      %p89 = scmp.ne.s32.totalorder %s72, %s88
      %p90 = scmp.eq.s32.totalorder %s15, 0
      %p91 = por %p89, %p90
      %s92 = ssub.s32 %s17, %s31
      %p93 = scmp.eq.s32.totalorder %s92, 0
      %s95 = sadd.s32 %s94, 1
      %s96 = scalar_select %p93, %s94, %s95
      %p99 = pneg %p93
      %p100 = scmp.eq.s32.totalorder %s9, 1
      %p101 = por %p99, %p100
      %p102 = scmp.ne.s32.totalorder %s94, %s97
      %p103 = scmp.eq.s32.totalorder %s9, 0
      %p104 = por %p102, %p103
      %p105 = scmp.ne.s32.totalorder %s94, %s97
      %p106 = scmp.eq.s32.totalorder %s14, 1
      %p107 = por %p105, %p106
      %p108 = scmp.ne.s32.totalorder %s97, %s98
      %p109 = scmp.eq.s32.totalorder %s14, 0
      %p110 = por %p108, %p109
      %p111 = scmp.ne.s32.totalorder %s97, %s98
      %p112 = scmp.eq.s32.totalorder %s15, 1
      %p113 = por %p111, %p112
      %p115 = scmp.ne.s32.totalorder %s98, %s114
      %p116 = scmp.eq.s32.totalorder %s15, 0
      %p117 = por %p115, %p116
      %s118 = ssub.s32 %s16, %s35
      %s119 = ssub.s32 %s17, %s31
      %s120 = sor.u32 %s118, %s119
      %p121 = scmp.eq.s32.totalorder %s120, 0
      %s123 = sadd.s32 %s122, 1
      %s124 = scalar_select %p121, %s122, %s123
      %p127 = pneg %p121
      %p128 = scmp.eq.s32.totalorder %s9, 1
      %p129 = por %p127, %p128
      %p130 = scmp.ne.s32.totalorder %s122, %s125
      %p131 = scmp.eq.s32.totalorder %s9, 0
      %p132 = por %p130, %p131
      %p133 = scmp.ne.s32.totalorder %s122, %s125
      %p134 = scmp.eq.s32.totalorder %s14, 1
      %p135 = por %p133, %p134
      %p136 = scmp.ne.s32.totalorder %s125, %s126
      %p137 = scmp.eq.s32.totalorder %s14, 0
      %p138 = por %p136, %p137
      %p139 = scmp.ne.s32.totalorder %s125, %s126
      %p140 = scmp.eq.s32.totalorder %s15, 1
      %p141 = por %p139, %p140
      %p143 = scmp.ne.s32.totalorder %s126, %s142
      %p144 = scmp.eq.s32.totalorder %s15, 0
      %p145 = por %p143, %p144
      %p146 = scmp.le.s32.totalorder 1, %s9
      %p147 = scmp.lt.s32.totalorder %s9, 3
      %p148 = pnand %p146, %p147
      %p149 = pneg %p148
      // Predicated region
      $region9: #{_stage_forward.9} parent=5 // pred_check
        _
      $region10: #{_stage_forward.9} parent=5 // pred_check_branch
        %151 = sbr.rel (%p148) target = $region12
      $region11: #{_stage_forward.9} parent=5 // pred_region
        %s152 = ssub.s32 %s9, 1
        // Predicated region
        $region13: #{_stage_forward.9} parent=11 // pred_check
          %p153 = pneg %p110
        $region14: #{_stage_forward.9} parent=11 // pred_check_branch
          %155 = sbr.rel (%p153) target = $region16
        $region15: #{_stage_forward.9} parent=11 // pred_region
          %p156 = scmp.lt.s32.totalorder %s20, 0
          %s157 = scalar_select %p156, %s20, 0
          %s158 = scalar_lea.vmem %s2, %s157
        $region16: #{_stage_forward.9} parent=11 // pred_fallthru
          _
      $region12: #{_stage_forward.9} parent=5 // pred_fallthru
        _
      %p159 = scmp.lt.s32.totalorder %s9, 2
      // Predicated region
      $region17: #{_stage_forward.9} parent=5 // pred_check
        %p160 = pneg %p159
      $region18: #{_stage_forward.9} parent=5 // pred_check_branch
        %162 = sbr.rel (%p160) target = $region20
      $region19: #{_stage_forward.9} parent=5 // pred_region
        // Predicated region
        $region21: #{_stage_forward.9} parent=19 // pred_check
          %p163 = pneg %p50
        $region22: #{_stage_forward.9} parent=19 // pred_check_branch
          %165 = sbr.rel (%p163) target = $region24
        $region23: #{_stage_forward.9} parent=19 // pred_region
          %s166 = sand.u32 %s40, 1
          %s167 = sand.u32 %s40, 1
          %s168 = smul.addr %s167, 32
          %s169 = scalar_lea.vmem [#allocation3], %s168
          %s170 = smul.u32 2, %s16
          %s171 = smul.u32 4, %s18
          %s172 = smul.addr %s170, 8
          %s173 = sadd.s32 %s171, %s172
          %s174 = smul.addr %s173, 4
          %s175 = scalar_lea.vmem %s0, %s174
          // Predicated region
          $region25: #{_stage_forward.9} parent=23 // pred_check
            _
          $region26: #{_stage_forward.9} parent=23 // pred_check_branch
            %177 = sbr.rel (0) target = $region28
          $region27: #{_stage_forward.9} parent=23 // pred_region
            // Predicated region
            $region29: #{_stage_forward.9} parent=27 // pred_check
              _
            $region30: #{_stage_forward.9} parent=27 // pred_check_branch
              %179 = sbr.rel (0) target = $region32
            $region31: #{_stage_forward.9} parent=27 // pred_region
              loop: start=0, step=1, limit=1
              $region33: #{_stage_forward.9} parent=31 // loop_pre_header
                _
              $region34: #{_stage_forward.9} parent=31 // loop_header
                %s181 = sphi 0, %s185
                %p182 = scmp.ge.s32.totalorder %s181, 1
                %s186 = sphi %s175, %s175
                %s187 = sphi %s169, %s169
              $region35: #{_stage_forward.9} parent=31 // loop_header_branch
                %184 = sbr.rel (%p182) target = $region39
              $region36: #{_stage_forward.9} parent=31 // loop_body
                %v188 = vld [vmem:[%s186] sm:$0xff]
                %189 = vst [vmem:[%s187] sm:$0xff] %v188
                %v190 = vld [vmem:[%s186 + $0x8] sm:$0xff]
                %191 = vst [vmem:[%s187 + $0x8] sm:$0xff] %v190
                %v192 = vld [vmem:[%s186 + $0x20] sm:$0xff]
                %193 = vst [vmem:[%s187 + $0x10] sm:$0xff] %v192
                %v194 = vld [vmem:[%s186 + $0x28] sm:$0xff]
                %195 = vst [vmem:[%s187 + $0x18] sm:$0xff] %v194
              $region37: #{_stage_forward.9} parent=31 // loop_footer
                %s185 = sadd.s32 1, %s181
              $region38: #{_stage_forward.9} parent=31 // loop_footer_branch
                %180 = sbr.rel target = $region34
              $region39: #{_stage_forward.9} parent=31 // loop_exit
                _
            $region32: #{_stage_forward.9} parent=27 // pred_fallthru
              _
            // Predicated region
            $region40: #{_stage_forward.9} parent=27 // pred_check
              _
            $region41: #{_stage_forward.9} parent=27 // pred_check_branch
              %197 = sbr.rel target = $region43
            $region42: #{_stage_forward.9} parent=27 // pred_region
              _
            $region43: #{_stage_forward.9} parent=27 // pred_fallthru
              _
          $region28: #{_stage_forward.9} parent=23 // pred_fallthru
            _
          %198 = vnop
        $region24: #{_stage_forward.9} parent=19 // pred_fallthru
          _
        // Predicated region
        $region44: #{_stage_forward.9} parent=19 // pred_check
          %p199 = pneg %p78
        $region45: #{_stage_forward.9} parent=19 // pred_check_branch
          %201 = sbr.rel (%p199) target = $region47
        $region46: #{_stage_forward.9} parent=19 // pred_region
          %s202 = smul.u32 64, %s18
          %p203 = scmp.lt.s32.totalorder %s202, 127
          %s204 = scalar_select %p203, %s202, 127
          %p205 = scmp.lt.s32.totalorder %s17, 0
          %s206 = scalar_select %p205, %s17, 0
          %s207 = sadd.s32 %s206, %s204
          %s208 = smul.addr %s207, 4
          %s209 = scalar_lea.vmem %s1, %s208
          %s210 = smul.u32 64, %s18
        $region47: #{_stage_forward.9} parent=19 // pred_fallthru
          _
      $region20: #{_stage_forward.9} parent=5 // pred_fallthru
        _
      %p211 = scmp.le.s32.totalorder 1, %s9
      %p212 = scmp.lt.s32.totalorder %s9, 3
      %p213 = pnand %p211, %p212
      %p214 = pneg %p213
      // Predicated region
      $region48: #{_stage_forward.9} parent=5 // pred_check
        _
      $region49: #{_stage_forward.9} parent=5 // pred_check_branch
        %216 = sbr.rel (%p213) target = $region51
      $region50: #{_stage_forward.9} parent=5 // pred_region
        %s217 = ssub.s32 %s9, 1
        %s218 = sand.u32 %s43, 1
        %s219 = sand.u32 %s43, 1
        %s220 = smul.addr %s219, 32
        %s221 = scalar_lea.vmem [#allocation3], %s220
        // Predicated region
        $region52: #{_stage_forward.9} parent=50 // pred_check
          %p222 = pneg %p56
        $region53: #{_stage_forward.9} parent=50 // pred_check_branch
          %224 = sbr.rel (%p222) target = $region55
        $region54: #{_stage_forward.9} parent=50 // pred_region
          _
        $region55: #{_stage_forward.9} parent=50 // pred_fallthru
          _
        %s225 = sand.u32 %s43, 1
        %s226 = sand.u32 %s43, 1
        %s227 = smul.addr %s226, 32
        %s228 = scalar_lea.vmem [#allocation3], %s227
        %p229 = pneg %p56
        %p230 = pneg %p53
        %s231 = smul.u32 64, %s21
        %p232 = scmp.lt.s32.totalorder %s231, 127
        %s233 = scalar_select %p232, %s231, 127
        %p234 = scmp.lt.s32.totalorder %s20, 0
        %s235 = scalar_select %p234, %s20, 0
        %s236 = sadd.s32 %s235, %s233
        %s237 = smul.addr %s236, 4
        %s238 = scalar_lea.vmem %s1, %s237
        %p239 = pneg %p84
        %p240 = pneg %p81
        %p241 = scmp.lt.s32.totalorder %s20, 0
        %s242 = scalar_select %p241, %s20, 0
        %s243 = scalar_lea.vmem %s2, %s242
        %p244 = pneg %p110
        %p245 = pneg %p107
        %p246 = pneg %p138
        %p247 = pneg %p135
        %s248 = smul.u32 2, %s19
        %p249 = scmp.lt.s32.totalorder %s248, 1
        %s250 = scalar_select %p249, %s248, 1
        %p251 = scmp.lt.s32.totalorder %s20, 0
        %s252 = scalar_select %p251, %s20, 0
        %s253 = sadd.s32 %s252, %s250
        %s254 = smul.addr %s253, 8
        %s255 = scalar_lea.vmem %s3, %s254
        %s256 = smul.u32 2, %s19
        %s257 = smul.u32 4, %s21
        %s258 = smul.u32 64, %s21
        %p259 = scmp.lt.s32.totalorder %s258, 127
        %s260 = scalar_select %p259, %s258, 127
        %p261 = scmp.lt.s32.totalorder %s20, 0
        %s262 = scalar_select %p261, %s20, 0
        %s263 = sadd.s32 %s262, %s260
        %s264 = smul.addr %s263, 4
        %s265 = scalar_lea.vmem %s1, %s264
        %s266 = smul.u32 64, %s21
        %p267 = scmp.lt.s32.totalorder %s20, 0
        %s268 = scalar_select %p267, %s20, 0
        %s269 = scalar_lea.vmem %s2, %s268
        %s270 = smul.u32 2, %s19
        %p271 = scmp.lt.s32.totalorder %s270, 1
        %s272 = scalar_select %p271, %s270, 1
        %p273 = scmp.lt.s32.totalorder %s20, 0
        %s274 = scalar_select %p273, %s20, 0
        %s275 = sadd.s32 %s274, %s272
        %s276 = smul.addr %s275, 8
        %s277 = scalar_lea.vmem %s3, %s276
        %s278 = smul.u32 2, %s19
        %p280 = scmp.eq.s32.totalorder %s21, 0
        // Predicated region
        $region56: #{_stage_forward.9} parent=50 // pred_check
          %p281 = pneg %p280
        $region57: #{_stage_forward.9} parent=50 // pred_check_branch
          %283 = sbr.rel (%p281) target = $region59
        $region58: #{_stage_forward.9} parent=50 // pred_region
          %284 = vst [vmem:[#allocation2] sm:$0xff] 0.0
          %285 = vst [vmem:[#allocation2 + $0x8] sm:$0xff] 0.0
        $region59: #{_stage_forward.9} parent=50 // pred_fallthru
          _
        %v286 = vld [vmem:[#allocation2] sm:$0xff]
        %v287 = vld [vmem:[#allocation2 + $0x8] sm:$0xff]
        %v288 = vld [vmem:[%s221] sm:$0xff]
        %v289 = vld [vmem:[%s221 + $0x8] sm:$0xff]
        %v290 = vld [vmem:[%s221 + $0x10] sm:$0xff]
        %v291 = vld [vmem:[%s221 + $0x18] sm:$0xff]
        %v292 = vld [vmem:[%s265] sm:$0xf]
        %v293 = vld [vmem:[%s265 + $0x4] sm:$0xf]
        %v294 = vld [vmem:[%s265 + $0x8] sm:$0xf]
        %v295 = vld [vmem:[%s265 + $0xc] sm:$0xf]
        %v296 = vld [vmem:[%s265 + $0x10] sm:$0xf]
        %v297 = vld [vmem:[%s265 + $0x14] sm:$0xf]
        %v298 = vld [vmem:[%s265 + $0x18] sm:$0xf]
        %v299 = vld [vmem:[%s265 + $0x1c] sm:$0xf]
        %v300 = vld [vmem:[%s265 + $0x20] sm:$0xf]
        %v301 = vld [vmem:[%s265 + $0x24] sm:$0xf]
        %v302 = vld [vmem:[%s265 + $0x28] sm:$0xf]
        %v303 = vld [vmem:[%s265 + $0x2c] sm:$0xf]
        %v304 = vld [vmem:[%s265 + $0x30] sm:$0xf]
        %v305 = vld [vmem:[%s265 + $0x34] sm:$0xf]
        %v306 = vld [vmem:[%s265 + $0x38] sm:$0xf]
        %v307 = vld [vmem:[%s265 + $0x3c] sm:$0xf]
        %v308 = vld [vmem:[%s265 + $0x40] sm:$0xf]
        %v309 = vld [vmem:[%s265 + $0x44] sm:$0xf]
        %v310 = vld [vmem:[%s265 + $0x48] sm:$0xf]
        %v311 = vld [vmem:[%s265 + $0x4c] sm:$0xf]
        %v312 = vld [vmem:[%s265 + $0x50] sm:$0xf]
        %v313 = vld [vmem:[%s265 + $0x54] sm:$0xf]
        %v314 = vld [vmem:[%s265 + $0x58] sm:$0xf]
        %v315 = vld [vmem:[%s265 + $0x5c] sm:$0xf]
        %v316 = vld [vmem:[%s265 + $0x60] sm:$0xf]
        %v317 = vld [vmem:[%s265 + $0x64] sm:$0xf]
        %v318 = vld [vmem:[%s265 + $0x68] sm:$0xf]
        %v319 = vld [vmem:[%s265 + $0x6c] sm:$0xf]
        %v320 = vld [vmem:[%s265 + $0x70] sm:$0xf]
        %v321 = vld [vmem:[%s265 + $0x74] sm:$0xf]
        %v322 = vld [vmem:[%s265 + $0x78] sm:$0xf]
        %v323 = vld [vmem:[%s265 + $0x7c] sm:$0xf]
        %v324 = vld [vmem:[%s265 + $0x80] sm:$0xf]
        %v325 = vld [vmem:[%s265 + $0x84] sm:$0xf]
        %v326 = vld [vmem:[%s265 + $0x88] sm:$0xf]
        %v327 = vld [vmem:[%s265 + $0x8c] sm:$0xf]
        %v328 = vld [vmem:[%s265 + $0x90] sm:$0xf]
        %v329 = vld [vmem:[%s265 + $0x94] sm:$0xf]
        %v330 = vld [vmem:[%s265 + $0x98] sm:$0xf]
        %v331 = vld [vmem:[%s265 + $0x9c] sm:$0xf]
        %v332 = vld [vmem:[%s265 + $0xa0] sm:$0xf]
        %v333 = vld [vmem:[%s265 + $0xa4] sm:$0xf]
        %v334 = vld [vmem:[%s265 + $0xa8] sm:$0xf]
        %v335 = vld [vmem:[%s265 + $0xac] sm:$0xf]
        %v336 = vld [vmem:[%s265 + $0xb0] sm:$0xf]
        %v337 = vld [vmem:[%s265 + $0xb4] sm:$0xf]
        %v338 = vld [vmem:[%s265 + $0xb8] sm:$0xf]
        %v339 = vld [vmem:[%s265 + $0xbc] sm:$0xf]
        %v340 = vld [vmem:[%s265 + $0xc0] sm:$0xf]
        %v341 = vld [vmem:[%s265 + $0xc4] sm:$0xf]
        %v342 = vld [vmem:[%s265 + $0xc8] sm:$0xf]
        %v343 = vld [vmem:[%s265 + $0xcc] sm:$0xf]
        %v344 = vld [vmem:[%s265 + $0xd0] sm:$0xf]
        %v345 = vld [vmem:[%s265 + $0xd4] sm:$0xf]
        %v346 = vld [vmem:[%s265 + $0xd8] sm:$0xf]
        %v347 = vld [vmem:[%s265 + $0xdc] sm:$0xf]
        %v348 = vld [vmem:[%s265 + $0xe0] sm:$0xf]
        %v349 = vld [vmem:[%s265 + $0xe4] sm:$0xf]
        %v350 = vld [vmem:[%s265 + $0xe8] sm:$0xf]
        %v351 = vld [vmem:[%s265 + $0xec] sm:$0xf]
        %v352 = vld [vmem:[%s265 + $0xf0] sm:$0xf]
        %v353 = vld [vmem:[%s265 + $0xf4] sm:$0xf]
        %v354 = vld [vmem:[%s265 + $0xf8] sm:$0xf]
        %v355 = vld [vmem:[%s265 + $0xfc] sm:$0xf]
        %v360 = vunpack.c.l.b16 %v288
        %v361 = vunpack.c.h.b16 %v288
        %v362 = vunpack.c.l.b16 %v289
        %v363 = vunpack.c.h.b16 %v289
        %v364 = vunpack.c.l.b16 %v290
        %v365 = vunpack.c.h.b16 %v290
        %v366 = vunpack.c.l.b16 %v291
        %v367 = vunpack.c.h.b16 %v291
        %v368 = vpack.c.b16 %v364, %v360
        %v369 = vpack.c.b16 %v365, %v361
        %v370 = vpack.c.b16 %v366, %v362
        %v371 = vpack.c.b16 %v367, %v363
        %v440 = vunpack.c.l.b16 %v292
        %v441 = vunpack.c.l.b16 %v293
        %v442 = vunpack.c.l.b16 %v294
        %v443 = vunpack.c.l.b16 %v295
        %v444 = vunpack.c.l.b16 %v296
        %v445 = vunpack.c.l.b16 %v297
        %v446 = vunpack.c.l.b16 %v298
        %v447 = vunpack.c.l.b16 %v299
        %v448 = vunpack.c.l.b16 %v300
        %v449 = vunpack.c.l.b16 %v301
        %v450 = vunpack.c.l.b16 %v302
        %v451 = vunpack.c.l.b16 %v303
        %v452 = vunpack.c.l.b16 %v304
        %v453 = vunpack.c.l.b16 %v305
        %v454 = vunpack.c.l.b16 %v306
        %v455 = vunpack.c.l.b16 %v307
        %v456 = vunpack.c.l.b16 %v308
        %v457 = vunpack.c.l.b16 %v309
        %v458 = vunpack.c.l.b16 %v310
        %v459 = vunpack.c.l.b16 %v311
        %v460 = vunpack.c.l.b16 %v312
        %v461 = vunpack.c.l.b16 %v313
        %v462 = vunpack.c.l.b16 %v314
        %v463 = vunpack.c.l.b16 %v315
        %v464 = vunpack.c.l.b16 %v316
        %v465 = vunpack.c.l.b16 %v317
        %v466 = vunpack.c.l.b16 %v318
        %v467 = vunpack.c.l.b16 %v319
        %v468 = vunpack.c.l.b16 %v320
        %v469 = vunpack.c.l.b16 %v321
        %v470 = vunpack.c.l.b16 %v322
        %v471 = vunpack.c.l.b16 %v323
        %v472 = vunpack.c.l.b16 %v324
        %v473 = vunpack.c.l.b16 %v325
        %v474 = vunpack.c.l.b16 %v326
        %v475 = vunpack.c.l.b16 %v327
        %v476 = vunpack.c.l.b16 %v328
        %v477 = vunpack.c.l.b16 %v329
        %v478 = vunpack.c.l.b16 %v330
        %v479 = vunpack.c.l.b16 %v331
        %v480 = vunpack.c.l.b16 %v332
        %v481 = vunpack.c.l.b16 %v333
        %v482 = vunpack.c.l.b16 %v334
        %v483 = vunpack.c.l.b16 %v335
        %v484 = vunpack.c.l.b16 %v336
        %v485 = vunpack.c.l.b16 %v337
        %v486 = vunpack.c.l.b16 %v338
        %v487 = vunpack.c.l.b16 %v339
        %v488 = vunpack.c.l.b16 %v340
        %v489 = vunpack.c.l.b16 %v341
        %v490 = vunpack.c.l.b16 %v342
        %v491 = vunpack.c.l.b16 %v343
        %v492 = vunpack.c.l.b16 %v344
        %v493 = vunpack.c.l.b16 %v345
        %v494 = vunpack.c.l.b16 %v346
        %v495 = vunpack.c.l.b16 %v347
        %v496 = vunpack.c.l.b16 %v348
        %v497 = vunpack.c.l.b16 %v349
        %v498 = vunpack.c.l.b16 %v350
        %v499 = vunpack.c.l.b16 %v351
        %v500 = vunpack.c.l.b16 %v352
        %v501 = vunpack.c.l.b16 %v353
        %v502 = vunpack.c.l.b16 %v354
        %v503 = vunpack.c.l.b16 %v355
        %v504 = vpack.c.b16 %v441, %v440
        %v505 = vpack.c.b16 %v443, %v442
        %v506 = vpack.c.b16 %v445, %v444
        %v507 = vpack.c.b16 %v447, %v446
        %v508 = vpack.c.b16 %v449, %v448
        %v509 = vpack.c.b16 %v451, %v450
        %v510 = vpack.c.b16 %v453, %v452
        %v511 = vpack.c.b16 %v455, %v454
        %v512 = vpack.c.b16 %v457, %v456
        %v513 = vpack.c.b16 %v459, %v458
        %v514 = vpack.c.b16 %v461, %v460
        %v515 = vpack.c.b16 %v463, %v462
        %v516 = vpack.c.b16 %v465, %v464
        %v517 = vpack.c.b16 %v467, %v466
        %v518 = vpack.c.b16 %v469, %v468
        %v519 = vpack.c.b16 %v471, %v470
        %v520 = vpack.c.b16 %v473, %v472
        %v521 = vpack.c.b16 %v475, %v474
        %v522 = vpack.c.b16 %v477, %v476
        %v523 = vpack.c.b16 %v479, %v478
        %v524 = vpack.c.b16 %v481, %v480
        %v525 = vpack.c.b16 %v483, %v482
        %v526 = vpack.c.b16 %v485, %v484
        %v527 = vpack.c.b16 %v487, %v486
        %v528 = vpack.c.b16 %v489, %v488
        %v529 = vpack.c.b16 %v491, %v490
        %v530 = vpack.c.b16 %v493, %v492
        %v531 = vpack.c.b16 %v495, %v494
        %v532 = vpack.c.b16 %v497, %v496
        %v533 = vpack.c.b16 %v499, %v498
        %v534 = vpack.c.b16 %v501, %v500
        %v535 = vpack.c.b16 %v503, %v502
        %568 = vmatprep.subr.bf16.mxu0 0
        %569 = vmatpush1.bf16.msra.mxu0 %v511
        %570 = vmatprep.subr.bf16.mxu0 0
        %571 = vmatpush1.bf16.msra.mxu0 %v510
        %572 = vmatprep.subr.bf16.mxu0 0
        %573 = vmatpush1.bf16.msra.mxu0 %v509
        %574 = vmatprep.subr.bf16.mxu0 0
        %575 = vmatpush1.bf16.msra.mxu0 %v508
        %576 = vmatprep.subr.bf16.mxu0 0
        %577 = vmatpush1.bf16.msra.mxu0 %v507
        %578 = vmatprep.subr.bf16.mxu0 0
        %579 = vmatpush1.bf16.msra.mxu0 %v506
        %580 = vmatprep.subr.bf16.mxu0 0
        %581 = vmatpush1.bf16.msra.mxu0 %v505
        %582 = vmatprep.subr.bf16.mxu0 0
        %583 = vmatpush1.bf16.msra.mxu0 %v504
        %584 = vmatprep.subr.bf16.mxu0 0
        %585 = vmatpush2.bf16.msra.mxu0 %v519
        %586 = vmatprep.subr.bf16.mxu0 0
        %587 = vmatpush2.bf16.msra.mxu0 %v518
        %588 = vmatprep.subr.bf16.mxu0 0
        %589 = vmatpush2.bf16.msra.mxu0 %v517
        %590 = vmatprep.subr.bf16.mxu0 0
        %591 = vmatpush2.bf16.msra.mxu0 %v516
        %592 = vmatprep.subr.bf16.mxu0 0
        %593 = vmatpush2.bf16.msra.mxu0 %v515
        %594 = vmatprep.subr.bf16.mxu0 0
        %595 = vmatpush2.bf16.msra.mxu0 %v514
        %596 = vmatprep.subr.bf16.mxu0 0
        %597 = vmatpush2.bf16.msra.mxu0 %v513
        %598 = vmatprep.subr.bf16.mxu0 0
        %599 = vmatpush2.bf16.msra.mxu0 %v512
        %600 = vmatprep.mubr.bf16.mxu0 %v369
        %601 = vmatmul.mubr.bf16.gmra.mxu0 %v368
        %v602 = vpop.f32.mrf.mxu0
        %v603 = vadd.f32 0.0, %v602
        %v604 = vpop.f32.mrf.mxu0
        %v605 = vpop.f32.mrf.mxu0
        %v606 = vadd.f32 0.0, %v605
        %v607 = vpop.f32.mrf.mxu0
        %608 = vdwg.mxu0
        %609 = vmatprep.subr.bf16.mxu0 0
        %610 = vmatpush1.bf16.msra.mxu0 %v527
        %611 = vmatprep.subr.bf16.mxu0 0
        %612 = vmatpush1.bf16.msra.mxu0 %v526
        %613 = vmatprep.subr.bf16.mxu0 0
        %614 = vmatpush1.bf16.msra.mxu0 %v525
        %615 = vmatprep.subr.bf16.mxu0 0
        %616 = vmatpush1.bf16.msra.mxu0 %v524
        %617 = vmatprep.subr.bf16.mxu0 0
        %618 = vmatpush1.bf16.msra.mxu0 %v523
        %619 = vmatprep.subr.bf16.mxu0 0
        %620 = vmatpush1.bf16.msra.mxu0 %v522
        %621 = vmatprep.subr.bf16.mxu0 0
        %622 = vmatpush1.bf16.msra.mxu0 %v521
        %623 = vmatprep.subr.bf16.mxu0 0
        %624 = vmatpush1.bf16.msra.mxu0 %v520
        %625 = vmatprep.subr.bf16.mxu0 0
        %626 = vmatpush2.bf16.msra.mxu0 %v535
        %627 = vmatprep.subr.bf16.mxu0 0
        %628 = vmatpush2.bf16.msra.mxu0 %v534
        %629 = vmatprep.subr.bf16.mxu0 0
        %630 = vmatpush2.bf16.msra.mxu0 %v533
        %631 = vmatprep.subr.bf16.mxu0 0
        %632 = vmatpush2.bf16.msra.mxu0 %v532
        %633 = vmatprep.subr.bf16.mxu0 0
        %634 = vmatpush2.bf16.msra.mxu0 %v531
        %635 = vmatprep.subr.bf16.mxu0 0
        %636 = vmatpush2.bf16.msra.mxu0 %v530
        %637 = vmatprep.subr.bf16.mxu0 0
        %638 = vmatpush2.bf16.msra.mxu0 %v529
        %639 = vmatprep.subr.bf16.mxu0 0
        %640 = vmatpush2.bf16.msra.mxu0 %v528
        %641 = vmatprep.mubr.bf16.mxu0 %v371
        %642 = vmatmul.mubr.bf16.gmra.mxu0 %v370
        %v643 = vpop.f32.mrf.mxu0
        %v644 = vadd.f32 %v603, %v643
        %v645 = vpop.f32.mrf.mxu0
        %v646 = vpop.f32.mrf.mxu0
        %v647 = vadd.f32 %v606, %v646
        %v648 = vpop.f32.mrf.mxu0
        %649 = vdwg.mxu0
        %v650 = vadd.f32 %v286, %v644
        %v651 = vadd.f32 %v287, %v647
        %652 = vst [vmem:[#allocation2] sm:$0xff] %v650
        %653 = vst [vmem:[#allocation2 + $0x8] sm:$0xff] %v651
        %p654 = scmp.eq.s32.totalorder %s21, 1
        // Predicated region
        $region60: #{_stage_forward.9} parent=50 // pred_check
          %p655 = pneg %p654
        $region61: #{_stage_forward.9} parent=50 // pred_check_branch
          %657 = sbr.rel (%p655) target = $region63
        $region62: #{_stage_forward.9} parent=50 // pred_region
          %v658 = vld [vmem:[#allocation2] sm:$0xff]
          %v659 = vld [vmem:[#allocation2 + $0x8] sm:$0xff]
          %v660 = vld [vmem:[%s269] sm:$0x1]
          %v662 = vlaneseq
          %v663 = vshrl.u32 %v662, 7
          %v664 = vsub.s32 0, %v663
          %v665 = vrot.slane %v660, %v664
          %v667 = vadd.f32 %v658, %v665
          %v668 = vadd.f32 %v659, %v665
          %669 = vst [vmem:[%s277] sm:$0xff] %v667
          %670 = vst [vmem:[%s277 + $0x8] sm:$0xff] %v668
        $region63: #{_stage_forward.9} parent=50 // pred_fallthru
          _
        %s671 = smul.u32 2, %s19
        %p672 = scmp.lt.s32.totalorder %s671, 1
        %s673 = scalar_select %p672, %s671, 1
        %p674 = scmp.lt.s32.totalorder %s20, 0
        %s675 = scalar_select %p674, %s20, 0
        %s676 = sadd.s32 %s675, %s673
        %s677 = smul.addr %s676, 8
        %s678 = scalar_lea.vmem %s3, %s677
        // Predicated region
        $region64: #{_stage_forward.9} parent=50 // pred_check
          %p679 = pneg %p135
        $region65: #{_stage_forward.9} parent=50 // pred_check_branch
          %681 = sbr.rel (%p679) target = $region67
        $region66: #{_stage_forward.9} parent=50 // pred_region
          %s682 = smul.u32 2, %s19
        $region67: #{_stage_forward.9} parent=50 // pred_fallthru
          _
        // Predicated region
        $region68: #{_stage_forward.9} parent=50 // pred_check
          %p683 = pneg %p135
        $region69: #{_stage_forward.9} parent=50 // pred_check_branch
          %685 = sbr.rel (%p683) target = $region71
        $region70: #{_stage_forward.9} parent=50 // pred_region
          %s686 = smul.u32 2, %s19
          %p687 = scmp.lt.s32.totalorder %s686, 1
          %s688 = scalar_select %p687, %s686, 1
          %p689 = scmp.lt.s32.totalorder %s20, 0
          %s690 = scalar_select %p689, %s20, 0
          %s691 = sadd.s32 %s690, %s688
          %s692 = smul.addr %s691, 8
          %s693 = scalar_lea.vmem %s3, %s692
        $region71: #{_stage_forward.9} parent=50 // pred_fallthru
          _
      $region51: #{_stage_forward.9} parent=5 // pred_fallthru
        _
      %p694 = scmp.le.s32.totalorder 2, %s9
      // Predicated region
      $region72: #{_stage_forward.9} parent=5 // pred_check
        %p695 = pneg %p694
      $region73: #{_stage_forward.9} parent=5 // pred_check_branch
        %697 = sbr.rel (%p695) target = $region75
      $region74: #{_stage_forward.9} parent=5 // pred_region
        %s698 = ssub.s32 %s9, 2
      $region75: #{_stage_forward.9} parent=5 // pred_fallthru
        _
    $region6: #{_stage_forward.9} parent=1 // loop_footer
      %s13 = sadd.s32 1, %s9
    $region7: #{_stage_forward.9} parent=1 // loop_footer_branch
      %8 = sbr.rel target = $region3
    $region8: #{_stage_forward.9} parent=1 // loop_exit
      _

</llo_original>
